<compile_context>
chip_gen: v7x
topology: tpu7x:2x2x1
jax: 0.10.0
libtpu: 0.0.40
codegen_flags: <defaults>
</compile_context>

<pallas_src>
import math
import functools

import jax
import jax.numpy as jnp
from jax import lax
from jax.experimental import pallas as pl
from jax.experimental.pallas import tpu as pltpu


# dot_general dimension numbers for  y = x @ w.T  (contract last dim of both).
_DN_T = (((1,), (1,)), ((), ()))


# ----------------------------------------------------------------------------
# Fused CrossAttention kernel: both MHAs + concat in one invocation (no grid)
# ----------------------------------------------------------------------------
def _cross_attention_kernel(x1_ref, x2_ref, w_ref, b_ref, o_ref, *,
                            num_heads, mxu_dtype):
    """Whole CrossAttention forward in VMEM.

    x1: (N, L1, C)   x2: (N, L2, C)
    w:  (2, 4C, C)   rows per MHA: [Wq; Wk; Wv; Wo]   (PyTorch (out, in) layout)
    b:  (2, 4, C)    rows per MHA: [bq; bk; bv; bo]
    o:  (N, L1+L2, C)   rows [:L1] = attention1, rows [L1:] = attention2
    """
    N, L1, C = x1_ref.shape
    L2 = x2_ref.shape[1]
    H = num_heads
    Dh = C // H
    scale = 1.0 / math.sqrt(Dh)

    # Fold batch into the in_proj matmuls (leading-dim merge, layout-free).
    x1 = x1_ref[...].reshape(N * L1, C)
    x2 = x2_ref[...].reshape(N * L2, C)

    def mha(m, x_q, x_kv, Lq, Lk):
        w = w_ref[m]                                   # (4C, C)
        b = b_ref[m].astype(jnp.float32)               # (4, C)
        wq, wk, wv = w[0:C], w[C:2 * C], w[2 * C:3 * C]
        wo = w[3 * C:4 * C]
        bq, bk, bv, bo = b[0:1], b[1:2], b[2:3], b[3:4]  # (1, C) each

        xq = x_q.astype(mxu_dtype)
        xkv = x_kv.astype(mxu_dtype)

        # --- in_proj: three (N*L, C) x (C, C) matmuls, f32 accumulation -----
        q = lax.dot_general(xq, wq.astype(mxu_dtype), _DN_T,
                            preferred_element_type=jnp.float32) + bq
        k = lax.dot_general(xkv, wk.astype(mxu_dtype), _DN_T,
                            preferred_element_type=jnp.float32) + bk
        v = lax.dot_general(xkv, wv.astype(mxu_dtype), _DN_T,
                            preferred_element_type=jnp.float32) + bv
        q = q * scale                                  # PyTorch scales q pre-QK^T

        merged = []                                    # per-batch (Lq, C) outputs
        for n in range(N):                             # static unroll, N is tiny
            q_n = q[n * Lq:(n + 1) * Lq]               # aligned sublane slices
            k_n = k[n * Lk:(n + 1) * Lk]
            v_n = v[n * Lk:(n + 1) * Lk]

            # Heads-batched operands (H, L, Dh).
            qh = jnp.stack([q_n[:, h * Dh:(h + 1) * Dh] for h in range(H)])
            kh = jnp.stack([k_n[:, h * Dh:(h + 1) * Dh] for h in range(H)])
            vh = jnp.stack([v_n[:, h * Dh:(h + 1) * Dh] for h in range(H)])

            # Heads-batched scores + f32 softmax (exact normalization).
            s = jnp.einsum('hqd,hkd->hqk', qh.astype(mxu_dtype),
                           kh.astype(mxu_dtype),
                           preferred_element_type=jnp.float32)     # (H, Lq, Lk)
            s_max = jnp.max(s, axis=-1, keepdims=True)
            p = jnp.exp(s - s_max)
            p = p / jnp.sum(p, axis=-1, keepdims=True)

            # Heads-batched PV.
            o = jnp.einsum('hqk,hkd->hqd', p.astype(mxu_dtype),
                           vh.astype(mxu_dtype),
                           preferred_element_type=jnp.float32)     # (H, Lq, Dh)
            # Merge heads back onto the lane axis -> (Lq, C).
            merged.append(jnp.concatenate([o[h] for h in range(H)], axis=-1))

        o_all = jnp.concatenate(merged, axis=0)                    # (N*Lq, C)

        # --- out_proj: ONE (N*Lq, C) x (C, C) matmul on the merged heads ----
        out = lax.dot_general(o_all.astype(mxu_dtype), wo.astype(mxu_dtype),
                              _DN_T, preferred_element_type=jnp.float32) + bo
        return out.reshape(N, Lq, C)

    out1 = mha(0, x1, x2, L1, L2)   # attention1(sfea1, sfea2, sfea2)
    out2 = mha(1, x2, x1, L2, L1)   # attention2(sfea2, sfea1, sfea1)

    # Write both results straight into the concat slab (fused torch.cat).
    o_ref[:, :L1, :] = out1.astype(o_ref.dtype)
    o_ref[:, L1:, :] = out2.astype(o_ref.dtype)


# ----------------------------------------------------------------------------
# Wrapper
# ----------------------------------------------------------------------------
def _pack_mha_params(params):
    """Pack one MultiheadAttention's params into (4C, C) weights + (4, C) biases."""
    C = params["out_proj_weight"].shape[0]
    w = jnp.concatenate([params["in_proj_weight"],          # (3C, C): Wq, Wk, Wv
                         params["out_proj_weight"]], axis=0)  # + (C, C): Wo
    b = jnp.concatenate([params["in_proj_bias"].reshape(3, C),
                         params["out_proj_bias"].reshape(1, C)], axis=0)
    return w, b


def _cost_estimate(N, L1, L2, C, H, itemsize):
    def mha_flops(Lq, Lk):
        proj = 2 * N * (Lq + 2 * Lk) * C * C     # q, k, v in_proj
        attn = 4 * N * Lq * Lk * C               # scores + PV (all heads)
        outp = 2 * N * Lq * C * C                # out_proj
        return proj + attn + outp

    flops = mha_flops(L1, L2) + mha_flops(L2, L1)
    transcendentals = 2 * N * H * L1 * L2        # exp() in both softmaxes
    bytes_accessed = (itemsize * (N * L1 * C + N * L2 * C + N * (L1 + L2) * C)
                      + 4 * (2 * 4 * C * C + 2 * 4 * C))
    return pl.CostEstimate(flops=flops, transcendentals=transcendentals,
                           bytes_accessed=bytes_accessed)


def cross_attention(sfea_tns1, sfea_tns2, params1, params2, num_heads):
    """Pallas implementation of CrossAttention.forward -> (N, L1+L2, C)."""
    N, L1, C = sfea_tns1.shape
    N2, L2, C2 = sfea_tns2.shape
    assert N == N2 and C == C2 and C % num_heads == 0

    # In a real model this packing happens once at parameter-load time.
    w1, b1 = _pack_mha_params(params1)
    w2, b2 = _pack_mha_params(params2)
    w_all = jnp.stack([w1, w2])     # (2, 4C, C)
    b_all = jnp.stack([b1, b2])     # (2, 4, C)

    kernel = functools.partial(_cross_attention_kernel,
                               num_heads=num_heads, mxu_dtype=jnp.bfloat16)

    vmem = pl.BlockSpec(memory_space=pltpu.MemorySpace.VMEM)
    return pl.pallas_call(
        kernel,
        out_shape=jax.ShapeDtypeStruct((N, L1 + L2, C), sfea_tns1.dtype),
        in_specs=[vmem, vmem, vmem, vmem],      # whole arrays resident in VMEM
        out_specs=vmem,
        cost_estimate=_cost_estimate(N, L1, L2, C, num_heads,
                                     sfea_tns1.dtype.itemsize),
    )(sfea_tns1, sfea_tns2, w_all, b_all)


# ----------------------------------------------------------------------------
# Pure-JAX reference (correctness check) and parameter init
# ----------------------------------------------------------------------------
def _mha_reference(query, key_value, params, num_heads):
    N, Lq, C = query.shape
    Lk = key_value.shape[1]
    Dh = C // num_heads
    w_in, b_in = params["in_proj_weight"], params["in_proj_bias"]
    q = query @ w_in[:C].T + b_in[:C]
    k = key_value @ w_in[C:2 * C].T + b_in[C:2 * C]
    v = key_value @ w_in[2 * C:].T + b_in[2 * C:]
    qh = q.reshape(N, Lq, num_heads, Dh).transpose(0, 2, 1, 3)
    kh = k.reshape(N, Lk, num_heads, Dh).transpose(0, 2, 1, 3)
    vh = v.reshape(N, Lk, num_heads, Dh).transpose(0, 2, 1, 3)
    s = jnp.einsum("nhqd,nhkd->nhqk", qh, kh) / math.sqrt(Dh)
    p = jax.nn.softmax(s, axis=-1)
    o = jnp.einsum("nhqk,nhkd->nhqd", p, vh)
    o = o.transpose(0, 2, 1, 3).reshape(N, Lq, C)
    return o @ params["out_proj_weight"].T + params["out_proj_bias"]


def _cross_attention_reference(x1, x2, p1, p2, num_heads):
    a1 = _mha_reference(x1, x2, p1, num_heads)
    a2 = _mha_reference(x2, x1, p2, num_heads)
    return jnp.concatenate([a1, a2], axis=1)


def _init_mha_params(key, dim):
    k1, k2, k3, k4 = jax.random.split(key, 4)
    return {
        "in_proj_weight": 0.05 * jax.random.normal(k1, (3 * dim, dim), jnp.float32),
        "in_proj_bias": 0.02 * jax.random.normal(k2, (3 * dim,), jnp.float32),
        "out_proj_weight": 0.05 * jax.random.normal(k3, (dim, dim), jnp.float32),
        "out_proj_bias": 0.02 * jax.random.normal(k4, (dim,), jnp.float32),
    }


if __name__ == "__main__":
    # N x L x c_s sequential features; dim=32, num_heads=4 (consistent with module)
    N, L1, L2, C, H = 2, 8, 16, 32, 4

    root = jax.random.PRNGKey(0)
    k_x1, k_x2, k_p1, k_p2 = jax.random.split(root, 4)

    sfea_tns1 = jax.random.normal(k_x1, (N, L1, C), jnp.float32)
    sfea_tns2 = jax.random.normal(k_x2, (N, L2, C), jnp.float32)

    params1 = _init_mha_params(k_p1, C)
    params2 = _init_mha_params(k_p2, C)

    fn = jax.jit(functools.partial(cross_attention, num_heads=H))
    out = fn(sfea_tns1, sfea_tns2, params1, params2)
    jax.block_until_ready(out)

    assert out.shape == (N, L1 + L2, C), out.shape
    assert bool(jnp.all(jnp.isfinite(out)))

    ref = _cross_attention_reference(sfea_tns1, sfea_tns2, params1, params2, H)
    max_err = float(jnp.max(jnp.abs(out - ref)))
    assert max_err < 5e-3, f"max abs err vs reference: {max_err}"

    print("KERNEL_OK")
</pallas_src>

<mosaic_0001>
module attributes {stable_mosaic.version = 11 : i64} {
  func.func @_cross_attention_kernel(%arg0: memref<2x8x32xf32, #tpu.memory_space<vmem>>, %arg1: memref<2x16x32xf32, #tpu.memory_space<vmem>>, %arg2: memref<2x128x32xf32, #tpu.memory_space<vmem>>, %arg3: memref<2x4x32xf32, #tpu.memory_space<vmem>>, %arg4: memref<2x24x32xf32, #tpu.memory_space<vmem>>) attributes {dimension_semantics = [], scalar_prefetch = 0 : i64, scratch_operands = 0 : i64, tpu.core_type = #tpu.core_type<tc>} {
    %c0 = arith.constant 0 : index
    %c0_0 = arith.constant 0 : index
    %c0_1 = arith.constant 0 : index
    %0 = vector.load %arg0[%c0, %c0_0, %c0_1] : memref<2x8x32xf32, #tpu.memory_space<vmem>>, vector<2x8x32xf32>
    %1 = vector.shape_cast %0 : vector<2x8x32xf32> to vector<16x32xf32>
    %c0_2 = arith.constant 0 : index
    %c0_3 = arith.constant 0 : index
    %c0_4 = arith.constant 0 : index
    %2 = vector.load %arg1[%c0_2, %c0_3, %c0_4] : memref<2x16x32xf32, #tpu.memory_space<vmem>>, vector<2x16x32xf32>
    %3 = vector.shape_cast %2 : vector<2x16x32xf32> to vector<32x32xf32>
    %c0_5 = arith.constant 0 : index
    %c0_6 = arith.constant 0 : index
    %c0_7 = arith.constant 0 : index
    %4 = vector.load %arg2[%c0_5, %c0_6, %c0_7] : memref<2x128x32xf32, #tpu.memory_space<vmem>>, vector<1x128x32xf32>
    %5 = vector.shape_cast %4 : vector<1x128x32xf32> to vector<128x32xf32>
    %c0_8 = arith.constant 0 : index
    %c0_9 = arith.constant 0 : index
    %c0_10 = arith.constant 0 : index
    %6 = vector.load %arg3[%c0_8, %c0_9, %c0_10] : memref<2x4x32xf32, #tpu.memory_space<vmem>>, vector<1x4x32xf32>
    %7 = vector.shape_cast %6 : vector<1x4x32xf32> to vector<4x32xf32>
    %8 = vector.extract_strided_slice %5 {offsets = [0, 0], sizes = [32, 32], strides = [1, 1]} : vector<128x32xf32> to vector<32x32xf32>
    %9 = vector.extract_strided_slice %5 {offsets = [32, 0], sizes = [32, 32], strides = [1, 1]} : vector<128x32xf32> to vector<32x32xf32>
    %10 = vector.extract_strided_slice %5 {offsets = [64, 0], sizes = [32, 32], strides = [1, 1]} : vector<128x32xf32> to vector<32x32xf32>
    %11 = vector.extract_strided_slice %5 {offsets = [96, 0], sizes = [32, 32], strides = [1, 1]} : vector<128x32xf32> to vector<32x32xf32>
    %12 = vector.extract_strided_slice %7 {offsets = [0, 0], sizes = [1, 32], strides = [1, 1]} : vector<4x32xf32> to vector<1x32xf32>
    %13 = vector.extract_strided_slice %7 {offsets = [1, 0], sizes = [1, 32], strides = [1, 1]} : vector<4x32xf32> to vector<1x32xf32>
    %14 = vector.extract_strided_slice %7 {offsets = [2, 0], sizes = [1, 32], strides = [1, 1]} : vector<4x32xf32> to vector<1x32xf32>
    %15 = vector.extract_strided_slice %7 {offsets = [3, 0], sizes = [1, 32], strides = [1, 1]} : vector<4x32xf32> to vector<1x32xf32>
    %16 = arith.truncf %1 : vector<16x32xf32> to vector<16x32xbf16>
    %17 = arith.truncf %3 : vector<32x32xf32> to vector<32x32xbf16>
    %18 = arith.truncf %8 : vector<32x32xf32> to vector<32x32xbf16>
    %cst = arith.constant dense<0.000000e+00> : vector<16x32xf32>
    %19 = tpu.matmul %16, %18, %cst {dimension_numbers = #tpu.dot_dimension_numbers<[1], [1], [0], [0], [0, 0, 1, 0], [], []>} : vector<16x32xbf16>, vector<32x32xbf16>, vector<16x32xf32> -> vector<16x32xf32>
    %20 = vector.broadcast %12 : vector<1x32xf32> to vector<16x32xf32>
    %21 = arith.addf %19, %20 : vector<16x32xf32>
    %22 = arith.truncf %9 : vector<32x32xf32> to vector<32x32xbf16>
    %cst_11 = arith.constant dense<0.000000e+00> : vector<32x32xf32>
    %23 = tpu.matmul %17, %22, %cst_11 {dimension_numbers = #tpu.dot_dimension_numbers<[1], [1], [0], [0], [0, 0, 1, 0], [], []>} : vector<32x32xbf16>, vector<32x32xbf16>, vector<32x32xf32> -> vector<32x32xf32>
    %24 = vector.broadcast %13 : vector<1x32xf32> to vector<32x32xf32>
    %25 = arith.addf %23, %24 : vector<32x32xf32>
    %26 = arith.truncf %10 : vector<32x32xf32> to vector<32x32xbf16>
    %cst_12 = arith.constant dense<0.000000e+00> : vector<32x32xf32>
    %27 = tpu.matmul %17, %26, %cst_12 {dimension_numbers = #tpu.dot_dimension_numbers<[1], [1], [0], [0], [0, 0, 1, 0], [], []>} : vector<32x32xbf16>, vector<32x32xbf16>, vector<32x32xf32> -> vector<32x32xf32>
    %28 = vector.broadcast %14 : vector<1x32xf32> to vector<32x32xf32>
    %29 = arith.addf %27, %28 : vector<32x32xf32>
    %cst_13 = arith.constant 0.353553385 : f32
    %30 = vector.broadcast %cst_13 : f32 to vector<16x32xf32>
    %31 = arith.mulf %21, %30 : vector<16x32xf32>
    %32 = vector.extract_strided_slice %31 {offsets = [0, 0], sizes = [8, 32], strides = [1, 1]} : vector<16x32xf32> to vector<8x32xf32>
    %33 = vector.extract_strided_slice %25 {offsets = [0, 0], sizes = [16, 32], strides = [1, 1]} : vector<32x32xf32> to vector<16x32xf32>
    %34 = vector.extract_strided_slice %29 {offsets = [0, 0], sizes = [16, 32], strides = [1, 1]} : vector<32x32xf32> to vector<16x32xf32>
    %35 = vector.extract_strided_slice %32 {offsets = [0, 0], sizes = [8, 8], strides = [1, 1]} : vector<8x32xf32> to vector<8x8xf32>
    %36 = vector.extract_strided_slice %32 {offsets = [0, 8], sizes = [8, 8], strides = [1, 1]} : vector<8x32xf32> to vector<8x8xf32>
    %37 = vector.extract_strided_slice %32 {offsets = [0, 16], sizes = [8, 8], strides = [1, 1]} : vector<8x32xf32> to vector<8x8xf32>
    %38 = vector.extract_strided_slice %32 {offsets = [0, 24], sizes = [8, 8], strides = [1, 1]} : vector<8x32xf32> to vector<8x8xf32>
    %39 = vector.shape_cast %35 : vector<8x8xf32> to vector<1x8x8xf32>
    %40 = vector.shape_cast %36 : vector<8x8xf32> to vector<1x8x8xf32>
    %41 = vector.shape_cast %37 : vector<8x8xf32> to vector<1x8x8xf32>
    %42 = vector.shape_cast %38 : vector<8x8xf32> to vector<1x8x8xf32>
    %43 = tpu.concatenate %39, %40, %41, %42 in 0 : vector<1x8x8xf32>, vector<1x8x8xf32>, vector<1x8x8xf32>, vector<1x8x8xf32> -> vector<4x8x8xf32>
    %44 = vector.extract_strided_slice %33 {offsets = [0, 0], sizes = [16, 8], strides = [1, 1]} : vector<16x32xf32> to vector<16x8xf32>
    %45 = vector.extract_strided_slice %33 {offsets = [0, 8], sizes = [16, 8], strides = [1, 1]} : vector<16x32xf32> to vector<16x8xf32>
    %46 = vector.extract_strided_slice %33 {offsets = [0, 16], sizes = [16, 8], strides = [1, 1]} : vector<16x32xf32> to vector<16x8xf32>
    %47 = vector.extract_strided_slice %33 {offsets = [0, 24], sizes = [16, 8], strides = [1, 1]} : vector<16x32xf32> to vector<16x8xf32>
    %48 = vector.shape_cast %44 : vector<16x8xf32> to vector<1x16x8xf32>
    %49 = vector.shape_cast %45 : vector<16x8xf32> to vector<1x16x8xf32>
    %50 = vector.shape_cast %46 : vector<16x8xf32> to vector<1x16x8xf32>
    %51 = vector.shape_cast %47 : vector<16x8xf32> to vector<1x16x8xf32>
    %52 = tpu.concatenate %48, %49, %50, %51 in 0 : vector<1x16x8xf32>, vector<1x16x8xf32>, vector<1x16x8xf32>, vector<1x16x8xf32> -> vector<4x16x8xf32>
    %53 = vector.extract_strided_slice %34 {offsets = [0, 0], sizes = [16, 8], strides = [1, 1]} : vector<16x32xf32> to vector<16x8xf32>
    %54 = vector.extract_strided_slice %34 {offsets = [0, 8], sizes = [16, 8], strides = [1, 1]} : vector<16x32xf32> to vector<16x8xf32>
    %55 = vector.extract_strided_slice %34 {offsets = [0, 16], sizes = [16, 8], strides = [1, 1]} : vector<16x32xf32> to vector<16x8xf32>
    %56 = vector.extract_strided_slice %34 {offsets = [0, 24], sizes = [16, 8], strides = [1, 1]} : vector<16x32xf32> to vector<16x8xf32>
    %57 = vector.shape_cast %53 : vector<16x8xf32> to vector<1x16x8xf32>
    %58 = vector.shape_cast %54 : vector<16x8xf32> to vector<1x16x8xf32>
    %59 = vector.shape_cast %55 : vector<16x8xf32> to vector<1x16x8xf32>
    %60 = vector.shape_cast %56 : vector<16x8xf32> to vector<1x16x8xf32>
    %61 = tpu.concatenate %57, %58, %59, %60 in 0 : vector<1x16x8xf32>, vector<1x16x8xf32>, vector<1x16x8xf32>, vector<1x16x8xf32> -> vector<4x16x8xf32>
    %62 = arith.truncf %43 : vector<4x8x8xf32> to vector<4x8x8xbf16>
    %63 = arith.truncf %52 : vector<4x16x8xf32> to vector<4x16x8xbf16>
    "tpu.trace_start"() <{level = 10 : i32, message = "hqd,hkd->hqk"}> : () -> ()
    %cst_14 = arith.constant dense<0.000000e+00> : vector<4x8x16xf32>
    %64 = tpu.matmul %62, %63, %cst_14 {dimension_numbers = #tpu.dot_dimension_numbers<[2], [2], [1], [1], [0, 0, 0, 1, 1, 1], [0], [0]>} : vector<4x8x8xbf16>, vector<4x16x8xbf16>, vector<4x8x16xf32> -> vector<4x8x16xf32>
    "tpu.trace_stop"() : () -> ()
    %cst_15 = arith.constant dense<0xFF800000> : vector<4x8xf32>
    %65 = vector.multi_reduction <maximumf>, %64, %cst_15 [2] : vector<4x8x16xf32> to vector<4x8xf32>
    %66 = vector.shape_cast %65 : vector<4x8xf32> to vector<4x8x1xf32>
    %67 = vector.broadcast %66 : vector<4x8x1xf32> to vector<4x8x16xf32>
    %68 = arith.subf %64, %67 : vector<4x8x16xf32>
    %69 = math.exp %68 : vector<4x8x16xf32>
    %cst_16 = arith.constant dense<0.000000e+00> : vector<4x8xf32>
    %70 = vector.multi_reduction <add>, %69, %cst_16 [2] : vector<4x8x16xf32> to vector<4x8xf32>
    %71 = vector.shape_cast %70 : vector<4x8xf32> to vector<4x8x1xf32>
    %72 = vector.broadcast %71 : vector<4x8x1xf32> to vector<4x8x16xf32>
    %73 = arith.divf %69, %72 : vector<4x8x16xf32>
    %74 = arith.truncf %73 : vector<4x8x16xf32> to vector<4x8x16xbf16>
    %75 = arith.truncf %61 : vector<4x16x8xf32> to vector<4x16x8xbf16>
    "tpu.trace_start"() <{level = 10 : i32, message = "hqk,hkd->hqd"}> : () -> ()
    %cst_17 = arith.constant dense<0.000000e+00> : vector<4x8x8xf32>
    %76 = tpu.matmul %74, %75, %cst_17 {dimension_numbers = #tpu.dot_dimension_numbers<[2], [1], [1], [2], [0, 0, 0, 1, 1, 2], [0], [0]>} : vector<4x8x16xbf16>, vector<4x16x8xbf16>, vector<4x8x8xf32> -> vector<4x8x8xf32>
    "tpu.trace_stop"() : () -> ()
    %77 = vector.extract_strided_slice %76 {offsets = [0, 0, 0], sizes = [1, 8, 8], strides = [1, 1, 1]} : vector<4x8x8xf32> to vector<1x8x8xf32>
    %78 = vector.shape_cast %77 : vector<1x8x8xf32> to vector<8x8xf32>
    %79 = vector.extract_strided_slice %76 {offsets = [1, 0, 0], sizes = [1, 8, 8], strides = [1, 1, 1]} : vector<4x8x8xf32> to vector<1x8x8xf32>
    %80 = vector.shape_cast %79 : vector<1x8x8xf32> to vector<8x8xf32>
    %81 = vector.extract_strided_slice %76 {offsets = [2, 0, 0], sizes = [1, 8, 8], strides = [1, 1, 1]} : vector<4x8x8xf32> to vector<1x8x8xf32>
    %82 = vector.shape_cast %81 : vector<1x8x8xf32> to vector<8x8xf32>
    %83 = vector.extract_strided_slice %76 {offsets = [3, 0, 0], sizes = [1, 8, 8], strides = [1, 1, 1]} : vector<4x8x8xf32> to vector<1x8x8xf32>
    %84 = vector.shape_cast %83 : vector<1x8x8xf32> to vector<8x8xf32>
    %85 = tpu.concatenate %78, %80, %82, %84 in 1 : vector<8x8xf32>, vector<8x8xf32>, vector<8x8xf32>, vector<8x8xf32> -> vector<8x32xf32>
    %86 = vector.extract_strided_slice %31 {offsets = [8, 0], sizes = [8, 32], strides = [1, 1]} : vector<16x32xf32> to vector<8x32xf32>
    %87 = vector.extract_strided_slice %25 {offsets = [16, 0], sizes = [16, 32], strides = [1, 1]} : vector<32x32xf32> to vector<16x32xf32>
    %88 = vector.extract_strided_slice %29 {offsets = [16, 0], sizes = [16, 32], strides = [1, 1]} : vector<32x32xf32> to vector<16x32xf32>
    %89 = vector.extract_strided_slice %86 {offsets = [0, 0], sizes = [8, 8], strides = [1, 1]} : vector<8x32xf32> to vector<8x8xf32>
    %90 = vector.extract_strided_slice %86 {offsets = [0, 8], sizes = [8, 8], strides = [1, 1]} : vector<8x32xf32> to vector<8x8xf32>
    %91 = vector.extract_strided_slice %86 {offsets = [0, 16], sizes = [8, 8], strides = [1, 1]} : vector<8x32xf32> to vector<8x8xf32>
    %92 = vector.extract_strided_slice %86 {offsets = [0, 24], sizes = [8, 8], strides = [1, 1]} : vector<8x32xf32> to vector<8x8xf32>
    %93 = vector.shape_cast %89 : vector<8x8xf32> to vector<1x8x8xf32>
    %94 = vector.shape_cast %90 : vector<8x8xf32> to vector<1x8x8xf32>
    %95 = vector.shape_cast %91 : vector<8x8xf32> to vector<1x8x8xf32>
    %96 = vector.shape_cast %92 : vector<8x8xf32> to vector<1x8x8xf32>
    %97 = tpu.concatenate %93, %94, %95, %96 in 0 : vector<1x8x8xf32>, vector<1x8x8xf32>, vector<1x8x8xf32>, vector<1x8x8xf32> -> vector<4x8x8xf32>
    %98 = vector.extract_strided_slice %87 {offsets = [0, 0], sizes = [16, 8], strides = [1, 1]} : vector<16x32xf32> to vector<16x8xf32>
    %99 = vector.extract_strided_slice %87 {offsets = [0, 8], sizes = [16, 8], strides = [1, 1]} : vector<16x32xf32> to vector<16x8xf32>
    %100 = vector.extract_strided_slice %87 {offsets = [0, 16], sizes = [16, 8], strides = [1, 1]} : vector<16x32xf32> to vector<16x8xf32>
    %101 = vector.extract_strided_slice %87 {offsets = [0, 24], sizes = [16, 8], strides = [1, 1]} : vector<16x32xf32> to vector<16x8xf32>
    %102 = vector.shape_cast %98 : vector<16x8xf32> to vector<1x16x8xf32>
    %103 = vector.shape_cast %99 : vector<16x8xf32> to vector<1x16x8xf32>
    %104 = vector.shape_cast %100 : vector<16x8xf32> to vector<1x16x8xf32>
    %105 = vector.shape_cast %101 : vector<16x8xf32> to vector<1x16x8xf32>
    %106 = tpu.concatenate %102, %103, %104, %105 in 0 : vector<1x16x8xf32>, vector<1x16x8xf32>, vector<1x16x8xf32>, vector<1x16x8xf32> -> vector<4x16x8xf32>
    %107 = vector.extract_strided_slice %88 {offsets = [0, 0], sizes = [16, 8], strides = [1, 1]} : vector<16x32xf32> to vector<16x8xf32>
    %108 = vector.extract_strided_slice %88 {offsets = [0, 8], sizes = [16, 8], strides = [1, 1]} : vector<16x32xf32> to vector<16x8xf32>
    %109 = vector.extract_strided_slice %88 {offsets = [0, 16], sizes = [16, 8], strides = [1, 1]} : vector<16x32xf32> to vector<16x8xf32>
    %110 = vector.extract_strided_slice %88 {offsets = [0, 24], sizes = [16, 8], strides = [1, 1]} : vector<16x32xf32> to vector<16x8xf32>
    %111 = vector.shape_cast %107 : vector<16x8xf32> to vector<1x16x8xf32>
    %112 = vector.shape_cast %108 : vector<16x8xf32> to vector<1x16x8xf32>
    %113 = vector.shape_cast %109 : vector<16x8xf32> to vector<1x16x8xf32>
    %114 = vector.shape_cast %110 : vector<16x8xf32> to vector<1x16x8xf32>
    %115 = tpu.concatenate %111, %112, %113, %114 in 0 : vector<1x16x8xf32>, vector<1x16x8xf32>, vector<1x16x8xf32>, vector<1x16x8xf32> -> vector<4x16x8xf32>
    %116 = arith.truncf %97 : vector<4x8x8xf32> to vector<4x8x8xbf16>
    %117 = arith.truncf %106 : vector<4x16x8xf32> to vector<4x16x8xbf16>
    "tpu.trace_start"() <{level = 10 : i32, message = "hqd,hkd->hqk"}> : () -> ()
    %cst_18 = arith.constant dense<0.000000e+00> : vector<4x8x16xf32>
    %118 = tpu.matmul %116, %117, %cst_18 {dimension_numbers = #tpu.dot_dimension_numbers<[2], [2], [1], [1], [0, 0, 0, 1, 1, 1], [0], [0]>} : vector<4x8x8xbf16>, vector<4x16x8xbf16>, vector<4x8x16xf32> -> vector<4x8x16xf32>
    "tpu.trace_stop"() : () -> ()
    %cst_19 = arith.constant dense<0xFF800000> : vector<4x8xf32>
    %119 = vector.multi_reduction <maximumf>, %118, %cst_19 [2] : vector<4x8x16xf32> to vector<4x8xf32>
    %120 = vector.shape_cast %119 : vector<4x8xf32> to vector<4x8x1xf32>
    %121 = vector.broadcast %120 : vector<4x8x1xf32> to vector<4x8x16xf32>
    %122 = arith.subf %118, %121 : vector<4x8x16xf32>
    %123 = math.exp %122 : vector<4x8x16xf32>
    %cst_20 = arith.constant dense<0.000000e+00> : vector<4x8xf32>
    %124 = vector.multi_reduction <add>, %123, %cst_20 [2] : vector<4x8x16xf32> to vector<4x8xf32>
    %125 = vector.shape_cast %124 : vector<4x8xf32> to vector<4x8x1xf32>
    %126 = vector.broadcast %125 : vector<4x8x1xf32> to vector<4x8x16xf32>
    %127 = arith.divf %123, %126 : vector<4x8x16xf32>
    %128 = arith.truncf %127 : vector<4x8x16xf32> to vector<4x8x16xbf16>
    %129 = arith.truncf %115 : vector<4x16x8xf32> to vector<4x16x8xbf16>
    "tpu.trace_start"() <{level = 10 : i32, message = "hqk,hkd->hqd"}> : () -> ()
    %cst_21 = arith.constant dense<0.000000e+00> : vector<4x8x8xf32>
    %130 = tpu.matmul %128, %129, %cst_21 {dimension_numbers = #tpu.dot_dimension_numbers<[2], [1], [1], [2], [0, 0, 0, 1, 1, 2], [0], [0]>} : vector<4x8x16xbf16>, vector<4x16x8xbf16>, vector<4x8x8xf32> -> vector<4x8x8xf32>
    "tpu.trace_stop"() : () -> ()
    %131 = vector.extract_strided_slice %130 {offsets = [0, 0, 0], sizes = [1, 8, 8], strides = [1, 1, 1]} : vector<4x8x8xf32> to vector<1x8x8xf32>
    %132 = vector.shape_cast %131 : vector<1x8x8xf32> to vector<8x8xf32>
    %133 = vector.extract_strided_slice %130 {offsets = [1, 0, 0], sizes = [1, 8, 8], strides = [1, 1, 1]} : vector<4x8x8xf32> to vector<1x8x8xf32>
    %134 = vector.shape_cast %133 : vector<1x8x8xf32> to vector<8x8xf32>
    %135 = vector.extract_strided_slice %130 {offsets = [2, 0, 0], sizes = [1, 8, 8], strides = [1, 1, 1]} : vector<4x8x8xf32> to vector<1x8x8xf32>
    %136 = vector.shape_cast %135 : vector<1x8x8xf32> to vector<8x8xf32>
    %137 = vector.extract_strided_slice %130 {offsets = [3, 0, 0], sizes = [1, 8, 8], strides = [1, 1, 1]} : vector<4x8x8xf32> to vector<1x8x8xf32>
    %138 = vector.shape_cast %137 : vector<1x8x8xf32> to vector<8x8xf32>
    %139 = tpu.concatenate %132, %134, %136, %138 in 1 : vector<8x8xf32>, vector<8x8xf32>, vector<8x8xf32>, vector<8x8xf32> -> vector<8x32xf32>
    %140 = tpu.concatenate %85, %139 in 0 : vector<8x32xf32>, vector<8x32xf32> -> vector<16x32xf32>
    %141 = arith.truncf %140 : vector<16x32xf32> to vector<16x32xbf16>
    %142 = arith.truncf %11 : vector<32x32xf32> to vector<32x32xbf16>
    %cst_22 = arith.constant dense<0.000000e+00> : vector<16x32xf32>
    %143 = tpu.matmul %141, %142, %cst_22 {dimension_numbers = #tpu.dot_dimension_numbers<[1], [1], [0], [0], [0, 0, 1, 0], [], []>} : vector<16x32xbf16>, vector<32x32xbf16>, vector<16x32xf32> -> vector<16x32xf32>
    %144 = vector.broadcast %15 : vector<1x32xf32> to vector<16x32xf32>
    %145 = arith.addf %143, %144 : vector<16x32xf32>
    %146 = vector.shape_cast %145 : vector<16x32xf32> to vector<2x8x32xf32>
    %c1 = arith.constant 1 : index
    %c0_23 = arith.constant 0 : index
    %c0_24 = arith.constant 0 : index
    %147 = vector.load %arg2[%c1, %c0_23, %c0_24] : memref<2x128x32xf32, #tpu.memory_space<vmem>>, vector<1x128x32xf32>
    %148 = vector.shape_cast %147 : vector<1x128x32xf32> to vector<128x32xf32>
    %c1_25 = arith.constant 1 : index
    %c0_26 = arith.constant 0 : index
    %c0_27 = arith.constant 0 : index
    %149 = vector.load %arg3[%c1_25, %c0_26, %c0_27] : memref<2x4x32xf32, #tpu.memory_space<vmem>>, vector<1x4x32xf32>
    %150 = vector.shape_cast %149 : vector<1x4x32xf32> to vector<4x32xf32>
    %151 = vector.extract_strided_slice %148 {offsets = [0, 0], sizes = [32, 32], strides = [1, 1]} : vector<128x32xf32> to vector<32x32xf32>
    %152 = vector.extract_strided_slice %148 {offsets = [32, 0], sizes = [32, 32], strides = [1, 1]} : vector<128x32xf32> to vector<32x32xf32>
    %153 = vector.extract_strided_slice %148 {offsets = [64, 0], sizes = [32, 32], strides = [1, 1]} : vector<128x32xf32> to vector<32x32xf32>
    %154 = vector.extract_strided_slice %148 {offsets = [96, 0], sizes = [32, 32], strides = [1, 1]} : vector<128x32xf32> to vector<32x32xf32>
    %155 = vector.extract_strided_slice %150 {offsets = [0, 0], sizes = [1, 32], strides = [1, 1]} : vector<4x32xf32> to vector<1x32xf32>
    %156 = vector.extract_strided_slice %150 {offsets = [1, 0], sizes = [1, 32], strides = [1, 1]} : vector<4x32xf32> to vector<1x32xf32>
    %157 = vector.extract_strided_slice %150 {offsets = [2, 0], sizes = [1, 32], strides = [1, 1]} : vector<4x32xf32> to vector<1x32xf32>
    %158 = vector.extract_strided_slice %150 {offsets = [3, 0], sizes = [1, 32], strides = [1, 1]} : vector<4x32xf32> to vector<1x32xf32>
    %159 = arith.truncf %3 : vector<32x32xf32> to vector<32x32xbf16>
    %160 = arith.truncf %1 : vector<16x32xf32> to vector<16x32xbf16>
    %161 = arith.truncf %151 : vector<32x32xf32> to vector<32x32xbf16>
    %cst_28 = arith.constant dense<0.000000e+00> : vector<32x32xf32>
    %162 = tpu.matmul %159, %161, %cst_28 {dimension_numbers = #tpu.dot_dimension_numbers<[1], [1], [0], [0], [0, 0, 1, 0], [], []>} : vector<32x32xbf16>, vector<32x32xbf16>, vector<32x32xf32> -> vector<32x32xf32>
    %163 = vector.broadcast %155 : vector<1x32xf32> to vector<32x32xf32>
    %164 = arith.addf %162, %163 : vector<32x32xf32>
    %165 = arith.truncf %152 : vector<32x32xf32> to vector<32x32xbf16>
    %cst_29 = arith.constant dense<0.000000e+00> : vector<16x32xf32>
    %166 = tpu.matmul %160, %165, %cst_29 {dimension_numbers = #tpu.dot_dimension_numbers<[1], [1], [0], [0], [0, 0, 1, 0], [], []>} : vector<16x32xbf16>, vector<32x32xbf16>, vector<16x32xf32> -> vector<16x32xf32>
    %167 = vector.broadcast %156 : vector<1x32xf32> to vector<16x32xf32>
    %168 = arith.addf %166, %167 : vector<16x32xf32>
    %169 = arith.truncf %153 : vector<32x32xf32> to vector<32x32xbf16>
    %cst_30 = arith.constant dense<0.000000e+00> : vector<16x32xf32>
    %170 = tpu.matmul %160, %169, %cst_30 {dimension_numbers = #tpu.dot_dimension_numbers<[1], [1], [0], [0], [0, 0, 1, 0], [], []>} : vector<16x32xbf16>, vector<32x32xbf16>, vector<16x32xf32> -> vector<16x32xf32>
    %171 = vector.broadcast %157 : vector<1x32xf32> to vector<16x32xf32>
    %172 = arith.addf %170, %171 : vector<16x32xf32>
    %cst_31 = arith.constant 0.353553385 : f32
    %173 = vector.broadcast %cst_31 : f32 to vector<32x32xf32>
    %174 = arith.mulf %164, %173 : vector<32x32xf32>
    %175 = vector.extract_strided_slice %174 {offsets = [0, 0], sizes = [16, 32], strides = [1, 1]} : vector<32x32xf32> to vector<16x32xf32>
    %176 = vector.extract_strided_slice %168 {offsets = [0, 0], sizes = [8, 32], strides = [1, 1]} : vector<16x32xf32> to vector<8x32xf32>
    %177 = vector.extract_strided_slice %172 {offsets = [0, 0], sizes = [8, 32], strides = [1, 1]} : vector<16x32xf32> to vector<8x32xf32>
    %178 = vector.extract_strided_slice %175 {offsets = [0, 0], sizes = [16, 8], strides = [1, 1]} : vector<16x32xf32> to vector<16x8xf32>
    %179 = vector.extract_strided_slice %175 {offsets = [0, 8], sizes = [16, 8], strides = [1, 1]} : vector<16x32xf32> to vector<16x8xf32>
    %180 = vector.extract_strided_slice %175 {offsets = [0, 16], sizes = [16, 8], strides = [1, 1]} : vector<16x32xf32> to vector<16x8xf32>
    %181 = vector.extract_strided_slice %175 {offsets = [0, 24], sizes = [16, 8], strides = [1, 1]} : vector<16x32xf32> to vector<16x8xf32>
    %182 = vector.shape_cast %178 : vector<16x8xf32> to vector<1x16x8xf32>
    %183 = vector.shape_cast %179 : vector<16x8xf32> to vector<1x16x8xf32>
    %184 = vector.shape_cast %180 : vector<16x8xf32> to vector<1x16x8xf32>
    %185 = vector.shape_cast %181 : vector<16x8xf32> to vector<1x16x8xf32>
    %186 = tpu.concatenate %182, %183, %184, %185 in 0 : vector<1x16x8xf32>, vector<1x16x8xf32>, vector<1x16x8xf32>, vector<1x16x8xf32> -> vector<4x16x8xf32>
    %187 = vector.extract_strided_slice %176 {offsets = [0, 0], sizes = [8, 8], strides = [1, 1]} : vector<8x32xf32> to vector<8x8xf32>
    %188 = vector.extract_strided_slice %176 {offsets = [0, 8], sizes = [8, 8], strides = [1, 1]} : vector<8x32xf32> to vector<8x8xf32>
    %189 = vector.extract_strided_slice %176 {offsets = [0, 16], sizes = [8, 8], strides = [1, 1]} : vector<8x32xf32> to vector<8x8xf32>
    %190 = vector.extract_strided_slice %176 {offsets = [0, 24], sizes = [8, 8], strides = [1, 1]} : vector<8x32xf32> to vector<8x8xf32>
    %191 = vector.shape_cast %187 : vector<8x8xf32> to vector<1x8x8xf32>
    %192 = vector.shape_cast %188 : vector<8x8xf32> to vector<1x8x8xf32>
    %193 = vector.shape_cast %189 : vector<8x8xf32> to vector<1x8x8xf32>
    %194 = vector.shape_cast %190 : vector<8x8xf32> to vector<1x8x8xf32>
    %195 = tpu.concatenate %191, %192, %193, %194 in 0 : vector<1x8x8xf32>, vector<1x8x8xf32>, vector<1x8x8xf32>, vector<1x8x8xf32> -> vector<4x8x8xf32>
    %196 = vector.extract_strided_slice %177 {offsets = [0, 0], sizes = [8, 8], strides = [1, 1]} : vector<8x32xf32> to vector<8x8xf32>
    %197 = vector.extract_strided_slice %177 {offsets = [0, 8], sizes = [8, 8], strides = [1, 1]} : vector<8x32xf32> to vector<8x8xf32>
    %198 = vector.extract_strided_slice %177 {offsets = [0, 16], sizes = [8, 8], strides = [1, 1]} : vector<8x32xf32> to vector<8x8xf32>
    %199 = vector.extract_strided_slice %177 {offsets = [0, 24], sizes = [8, 8], strides = [1, 1]} : vector<8x32xf32> to vector<8x8xf32>
    %200 = vector.shape_cast %196 : vector<8x8xf32> to vector<1x8x8xf32>
    %201 = vector.shape_cast %197 : vector<8x8xf32> to vector<1x8x8xf32>
    %202 = vector.shape_cast %198 : vector<8x8xf32> to vector<1x8x8xf32>
    %203 = vector.shape_cast %199 : vector<8x8xf32> to vector<1x8x8xf32>
    %204 = tpu.concatenate %200, %201, %202, %203 in 0 : vector<1x8x8xf32>, vector<1x8x8xf32>, vector<1x8x8xf32>, vector<1x8x8xf32> -> vector<4x8x8xf32>
    %205 = arith.truncf %186 : vector<4x16x8xf32> to vector<4x16x8xbf16>
    %206 = arith.truncf %195 : vector<4x8x8xf32> to vector<4x8x8xbf16>
    "tpu.trace_start"() <{level = 10 : i32, message = "hqd,hkd->hqk"}> : () -> ()
    %cst_32 = arith.constant dense<0.000000e+00> : vector<4x16x8xf32>
    %207 = tpu.matmul %205, %206, %cst_32 {dimension_numbers = #tpu.dot_dimension_numbers<[2], [2], [1], [1], [0, 0, 0, 1, 1, 1], [0], [0]>} : vector<4x16x8xbf16>, vector<4x8x8xbf16>, vector<4x16x8xf32> -> vector<4x16x8xf32>
    "tpu.trace_stop"() : () -> ()
    %cst_33 = arith.constant dense<0xFF800000> : vector<4x16xf32>
    %208 = vector.multi_reduction <maximumf>, %207, %cst_33 [2] : vector<4x16x8xf32> to vector<4x16xf32>
    %209 = vector.shape_cast %208 : vector<4x16xf32> to vector<4x16x1xf32>
    %210 = vector.broadcast %209 : vector<4x16x1xf32> to vector<4x16x8xf32>
    %211 = arith.subf %207, %210 : vector<4x16x8xf32>
    %212 = math.exp %211 : vector<4x16x8xf32>
    %cst_34 = arith.constant dense<0.000000e+00> : vector<4x16xf32>
    %213 = vector.multi_reduction <add>, %212, %cst_34 [2] : vector<4x16x8xf32> to vector<4x16xf32>
    %214 = vector.shape_cast %213 : vector<4x16xf32> to vector<4x16x1xf32>
    %215 = vector.broadcast %214 : vector<4x16x1xf32> to vector<4x16x8xf32>
    %216 = arith.divf %212, %215 : vector<4x16x8xf32>
    %217 = arith.truncf %216 : vector<4x16x8xf32> to vector<4x16x8xbf16>
    %218 = arith.truncf %204 : vector<4x8x8xf32> to vector<4x8x8xbf16>
    "tpu.trace_start"() <{level = 10 : i32, message = "hqk,hkd->hqd"}> : () -> ()
    %cst_35 = arith.constant dense<0.000000e+00> : vector<4x16x8xf32>
    %219 = tpu.matmul %217, %218, %cst_35 {dimension_numbers = #tpu.dot_dimension_numbers<[2], [1], [1], [2], [0, 0, 0, 1, 1, 2], [0], [0]>} : vector<4x16x8xbf16>, vector<4x8x8xbf16>, vector<4x16x8xf32> -> vector<4x16x8xf32>
    "tpu.trace_stop"() : () -> ()
    %220 = vector.extract_strided_slice %219 {offsets = [0, 0, 0], sizes = [1, 16, 8], strides = [1, 1, 1]} : vector<4x16x8xf32> to vector<1x16x8xf32>
    %221 = vector.shape_cast %220 : vector<1x16x8xf32> to vector<16x8xf32>
    %222 = vector.extract_strided_slice %219 {offsets = [1, 0, 0], sizes = [1, 16, 8], strides = [1, 1, 1]} : vector<4x16x8xf32> to vector<1x16x8xf32>
    %223 = vector.shape_cast %222 : vector<1x16x8xf32> to vector<16x8xf32>
    %224 = vector.extract_strided_slice %219 {offsets = [2, 0, 0], sizes = [1, 16, 8], strides = [1, 1, 1]} : vector<4x16x8xf32> to vector<1x16x8xf32>
    %225 = vector.shape_cast %224 : vector<1x16x8xf32> to vector<16x8xf32>
    %226 = vector.extract_strided_slice %219 {offsets = [3, 0, 0], sizes = [1, 16, 8], strides = [1, 1, 1]} : vector<4x16x8xf32> to vector<1x16x8xf32>
    %227 = vector.shape_cast %226 : vector<1x16x8xf32> to vector<16x8xf32>
    %228 = tpu.concatenate %221, %223, %225, %227 in 1 : vector<16x8xf32>, vector<16x8xf32>, vector<16x8xf32>, vector<16x8xf32> -> vector<16x32xf32>
    %229 = vector.extract_strided_slice %174 {offsets = [16, 0], sizes = [16, 32], strides = [1, 1]} : vector<32x32xf32> to vector<16x32xf32>
    %230 = vector.extract_strided_slice %168 {offsets = [8, 0], sizes = [8, 32], strides = [1, 1]} : vector<16x32xf32> to vector<8x32xf32>
    %231 = vector.extract_strided_slice %172 {offsets = [8, 0], sizes = [8, 32], strides = [1, 1]} : vector<16x32xf32> to vector<8x32xf32>
    %232 = vector.extract_strided_slice %229 {offsets = [0, 0], sizes = [16, 8], strides = [1, 1]} : vector<16x32xf32> to vector<16x8xf32>
    %233 = vector.extract_strided_slice %229 {offsets = [0, 8], sizes = [16, 8], strides = [1, 1]} : vector<16x32xf32> to vector<16x8xf32>
    %234 = vector.extract_strided_slice %229 {offsets = [0, 16], sizes = [16, 8], strides = [1, 1]} : vector<16x32xf32> to vector<16x8xf32>
    %235 = vector.extract_strided_slice %229 {offsets = [0, 24], sizes = [16, 8], strides = [1, 1]} : vector<16x32xf32> to vector<16x8xf32>
    %236 = vector.shape_cast %232 : vector<16x8xf32> to vector<1x16x8xf32>
    %237 = vector.shape_cast %233 : vector<16x8xf32> to vector<1x16x8xf32>
    %238 = vector.shape_cast %234 : vector<16x8xf32> to vector<1x16x8xf32>
    %239 = vector.shape_cast %235 : vector<16x8xf32> to vector<1x16x8xf32>
    %240 = tpu.concatenate %236, %237, %238, %239 in 0 : vector<1x16x8xf32>, vector<1x16x8xf32>, vector<1x16x8xf32>, vector<1x16x8xf32> -> vector<4x16x8xf32>
    %241 = vector.extract_strided_slice %230 {offsets = [0, 0], sizes = [8, 8], strides = [1, 1]} : vector<8x32xf32> to vector<8x8xf32>
    %242 = vector.extract_strided_slice %230 {offsets = [0, 8], sizes = [8, 8], strides = [1, 1]} : vector<8x32xf32> to vector<8x8xf32>
    %243 = vector.extract_strided_slice %230 {offsets = [0, 16], sizes = [8, 8], strides = [1, 1]} : vector<8x32xf32> to vector<8x8xf32>
    %244 = vector.extract_strided_slice %230 {offsets = [0, 24], sizes = [8, 8], strides = [1, 1]} : vector<8x32xf32> to vector<8x8xf32>
    %245 = vector.shape_cast %241 : vector<8x8xf32> to vector<1x8x8xf32>
    %246 = vector.shape_cast %242 : vector<8x8xf32> to vector<1x8x8xf32>
    %247 = vector.shape_cast %243 : vector<8x8xf32> to vector<1x8x8xf32>
    %248 = vector.shape_cast %244 : vector<8x8xf32> to vector<1x8x8xf32>
    %249 = tpu.concatenate %245, %246, %247, %248 in 0 : vector<1x8x8xf32>, vector<1x8x8xf32>, vector<1x8x8xf32>, vector<1x8x8xf32> -> vector<4x8x8xf32>
    %250 = vector.extract_strided_slice %231 {offsets = [0, 0], sizes = [8, 8], strides = [1, 1]} : vector<8x32xf32> to vector<8x8xf32>
    %251 = vector.extract_strided_slice %231 {offsets = [0, 8], sizes = [8, 8], strides = [1, 1]} : vector<8x32xf32> to vector<8x8xf32>
    %252 = vector.extract_strided_slice %231 {offsets = [0, 16], sizes = [8, 8], strides = [1, 1]} : vector<8x32xf32> to vector<8x8xf32>
    %253 = vector.extract_strided_slice %231 {offsets = [0, 24], sizes = [8, 8], strides = [1, 1]} : vector<8x32xf32> to vector<8x8xf32>
    %254 = vector.shape_cast %250 : vector<8x8xf32> to vector<1x8x8xf32>
    %255 = vector.shape_cast %251 : vector<8x8xf32> to vector<1x8x8xf32>
    %256 = vector.shape_cast %252 : vector<8x8xf32> to vector<1x8x8xf32>
    %257 = vector.shape_cast %253 : vector<8x8xf32> to vector<1x8x8xf32>
    %258 = tpu.concatenate %254, %255, %256, %257 in 0 : vector<1x8x8xf32>, vector<1x8x8xf32>, vector<1x8x8xf32>, vector<1x8x8xf32> -> vector<4x8x8xf32>
    %259 = arith.truncf %240 : vector<4x16x8xf32> to vector<4x16x8xbf16>
    %260 = arith.truncf %249 : vector<4x8x8xf32> to vector<4x8x8xbf16>
    "tpu.trace_start"() <{level = 10 : i32, message = "hqd,hkd->hqk"}> : () -> ()
    %cst_36 = arith.constant dense<0.000000e+00> : vector<4x16x8xf32>
    %261 = tpu.matmul %259, %260, %cst_36 {dimension_numbers = #tpu.dot_dimension_numbers<[2], [2], [1], [1], [0, 0, 0, 1, 1, 1], [0], [0]>} : vector<4x16x8xbf16>, vector<4x8x8xbf16>, vector<4x16x8xf32> -> vector<4x16x8xf32>
    "tpu.trace_stop"() : () -> ()
    %cst_37 = arith.constant dense<0xFF800000> : vector<4x16xf32>
    %262 = vector.multi_reduction <maximumf>, %261, %cst_37 [2] : vector<4x16x8xf32> to vector<4x16xf32>
    %263 = vector.shape_cast %262 : vector<4x16xf32> to vector<4x16x1xf32>
    %264 = vector.broadcast %263 : vector<4x16x1xf32> to vector<4x16x8xf32>
    %265 = arith.subf %261, %264 : vector<4x16x8xf32>
    %266 = math.exp %265 : vector<4x16x8xf32>
    %cst_38 = arith.constant dense<0.000000e+00> : vector<4x16xf32>
    %267 = vector.multi_reduction <add>, %266, %cst_38 [2] : vector<4x16x8xf32> to vector<4x16xf32>
    %268 = vector.shape_cast %267 : vector<4x16xf32> to vector<4x16x1xf32>
    %269 = vector.broadcast %268 : vector<4x16x1xf32> to vector<4x16x8xf32>
    %270 = arith.divf %266, %269 : vector<4x16x8xf32>
    %271 = arith.truncf %270 : vector<4x16x8xf32> to vector<4x16x8xbf16>
    %272 = arith.truncf %258 : vector<4x8x8xf32> to vector<4x8x8xbf16>
    "tpu.trace_start"() <{level = 10 : i32, message = "hqk,hkd->hqd"}> : () -> ()
    %cst_39 = arith.constant dense<0.000000e+00> : vector<4x16x8xf32>
    %273 = tpu.matmul %271, %272, %cst_39 {dimension_numbers = #tpu.dot_dimension_numbers<[2], [1], [1], [2], [0, 0, 0, 1, 1, 2], [0], [0]>} : vector<4x16x8xbf16>, vector<4x8x8xbf16>, vector<4x16x8xf32> -> vector<4x16x8xf32>
    "tpu.trace_stop"() : () -> ()
    %274 = vector.extract_strided_slice %273 {offsets = [0, 0, 0], sizes = [1, 16, 8], strides = [1, 1, 1]} : vector<4x16x8xf32> to vector<1x16x8xf32>
    %275 = vector.shape_cast %274 : vector<1x16x8xf32> to vector<16x8xf32>
    %276 = vector.extract_strided_slice %273 {offsets = [1, 0, 0], sizes = [1, 16, 8], strides = [1, 1, 1]} : vector<4x16x8xf32> to vector<1x16x8xf32>
    %277 = vector.shape_cast %276 : vector<1x16x8xf32> to vector<16x8xf32>
    %278 = vector.extract_strided_slice %273 {offsets = [2, 0, 0], sizes = [1, 16, 8], strides = [1, 1, 1]} : vector<4x16x8xf32> to vector<1x16x8xf32>
    %279 = vector.shape_cast %278 : vector<1x16x8xf32> to vector<16x8xf32>
    %280 = vector.extract_strided_slice %273 {offsets = [3, 0, 0], sizes = [1, 16, 8], strides = [1, 1, 1]} : vector<4x16x8xf32> to vector<1x16x8xf32>
    %281 = vector.shape_cast %280 : vector<1x16x8xf32> to vector<16x8xf32>
    %282 = tpu.concatenate %275, %277, %279, %281 in 1 : vector<16x8xf32>, vector<16x8xf32>, vector<16x8xf32>, vector<16x8xf32> -> vector<16x32xf32>
    %283 = tpu.concatenate %228, %282 in 0 : vector<16x32xf32>, vector<16x32xf32> -> vector<32x32xf32>
    %284 = arith.truncf %283 : vector<32x32xf32> to vector<32x32xbf16>
    %285 = arith.truncf %154 : vector<32x32xf32> to vector<32x32xbf16>
    %cst_40 = arith.constant dense<0.000000e+00> : vector<32x32xf32>
    %286 = tpu.matmul %284, %285, %cst_40 {dimension_numbers = #tpu.dot_dimension_numbers<[1], [1], [0], [0], [0, 0, 1, 0], [], []>} : vector<32x32xbf16>, vector<32x32xbf16>, vector<32x32xf32> -> vector<32x32xf32>
    %287 = vector.broadcast %158 : vector<1x32xf32> to vector<32x32xf32>
    %288 = arith.addf %286, %287 : vector<32x32xf32>
    %289 = vector.shape_cast %288 : vector<32x32xf32> to vector<2x16x32xf32>
    %c0_41 = arith.constant 0 : index
    %c0_42 = arith.constant 0 : index
    %c0_43 = arith.constant 0 : index
    %290 = vector.load %arg4[%c0_41, %c0_42, %c0_43] : memref<2x24x32xf32, #tpu.memory_space<vmem>>, vector<2x8x32xf32>
    tpu.vector_store %arg4[%c0_41, %c0_42, %c0_43], %146 {strides = array<i32>} : memref<2x24x32xf32, #tpu.memory_space<vmem>>, vector<2x8x32xf32>,
    %c0_44 = arith.constant 0 : index
    %c8 = arith.constant 8 : index
    %c0_45 = arith.constant 0 : index
    %291 = vector.load %arg4[%c0_44, %c8, %c0_45] : memref<2x24x32xf32, #tpu.memory_space<vmem>>, vector<2x16x32xf32>
    tpu.vector_store %arg4[%c0_44, %c8, %c0_45], %289 {strides = array<i32>} : memref<2x24x32xf32, #tpu.memory_space<vmem>>, vector<2x16x32xf32>,
    return
  }
}

</mosaic_0001>

<llo_original>
// kernel: cross_attention.1
$region0: #{cross_attention.1}
  #allocation0 [shape = 'u32[]', space=smem, size = 0x4, offset = 0x4, fixed_abs, tag = 'smem constant byte address 0x4 - core index']
  #allocation1 [shape = 'u32[144,128]{1,0:T(1,128)}', space=vmem, size = 0x12000, scoped, tag = 'internal scratch']
  %s0 = inlined_call_operand.vmem [shape: f32[2,8,32], index: 0, kind: input, shape index: {}]
  %s1 = inlined_call_operand.vmem [shape: f32[2,16,32], index: 1, kind: input, shape index: {}]
  %s2 = inlined_call_operand.vmem [shape: f32[2,128,32], index: 2, kind: input, shape index: {}]
  %s3 = inlined_call_operand.vmem [shape: f32[2,4,32], index: 3, kind: input, shape index: {}]
  %s4 = inlined_call_operand.hbm [shape: f32[2,24,32], index: 4, kind: output, shape index: {}]
  %s5 = sld [smem:[#allocation0]]
  $region26: #{cross_attention.1} parent=0
    _
  %s7 = ssub.s32 1, %s5
  %s8 = scalar_select 0, %s7, %s5
  $region1: #{cross_attention.1} parent=0
    #allocation2 [shape = 'u8[24576]{0}', space=vmem, size = 0x6000, scoped, tag = 'output window, operand 0, single buffered']
    #allocation3 [shape = 's32[1]{0}', space=sflag, size = 0x4, scoped, tag = 'scoped memory for cross_attention.1']
    %9 = vsyncpa [#allocation3], 0
    // Predicated region
    $region2: #{cross_attention.1} parent=1 // pred_check
      _
    $region3: #{cross_attention.1} parent=1 // pred_check_branch
      %11 = sbr.rel (0) target = $region5
    $region4: #{cross_attention.1} parent=1 // pred_region
      _
    $region5: #{cross_attention.1} parent=1 // pred_fallthru
      _
    // Predicated region
    $region6: #{cross_attention.1} parent=1 // pred_check
      _
    $region7: #{cross_attention.1} parent=1 // pred_check_branch
      %13 = sbr.rel (0) target = $region9
    $region8: #{cross_attention.1} parent=1 // pred_region
      _
    $region9: #{cross_attention.1} parent=1 // pred_fallthru
      _
    // Predicated region
    $region10: #{cross_attention.1} parent=1 // pred_check
      _
    $region11: #{cross_attention.1} parent=1 // pred_check_branch
      %15 = sbr.rel (0) target = $region13
    $region12: #{cross_attention.1} parent=1 // pred_region
      _
    $region13: #{cross_attention.1} parent=1 // pred_fallthru
      _
    // Predicated region
    $region14: #{cross_attention.1} parent=1 // pred_check
      _
    $region15: #{cross_attention.1} parent=1 // pred_check_branch
      %17 = sbr.rel (0) target = $region17
    $region16: #{cross_attention.1} parent=1 // pred_region
      _
    $region17: #{cross_attention.1} parent=1 // pred_fallthru
      _
    %v19 = vld [vmem:[%s0] sm:$0xff]
    %v20 = vld [vmem:[%s0 + $0x8] sm:$0xff]
    %v21 = vld [vmem:[%s1] sm:$0xff]
    %v22 = vld [vmem:[%s1 + $0x8] sm:$0xff]
    %v23 = vld [vmem:[%s1 + $0x10] sm:$0xff]
    %v24 = vld [vmem:[%s1 + $0x18] sm:$0xff]
    %v25 = vld [vmem:[%s2] sm:$0xff]
    %v26 = vld [vmem:[%s2 + $0x8] sm:$0xff]
    %v27 = vld [vmem:[%s2 + $0x10] sm:$0xff]
    %v28 = vld [vmem:[%s2 + $0x18] sm:$0xff]
    %v29 = vld [vmem:[%s2 + $0x20] sm:$0xff]
    %v30 = vld [vmem:[%s2 + $0x28] sm:$0xff]
    %v31 = vld [vmem:[%s2 + $0x30] sm:$0xff]
    %v32 = vld [vmem:[%s2 + $0x38] sm:$0xff]
    %v33 = vld [vmem:[%s2 + $0x40] sm:$0xff]
    %v34 = vld [vmem:[%s2 + $0x48] sm:$0xff]
    %v35 = vld [vmem:[%s2 + $0x50] sm:$0xff]
    %v36 = vld [vmem:[%s2 + $0x58] sm:$0xff]
    %v37 = vld [vmem:[%s2 + $0x60] sm:$0xff]
    %v38 = vld [vmem:[%s2 + $0x68] sm:$0xff]
    %v39 = vld [vmem:[%s2 + $0x70] sm:$0xff]
    %v40 = vld [vmem:[%s2 + $0x78] sm:$0xff]
    %v41 = vld [vmem:[%s3] sm:$0xf]
    %v42 = vpack.c.bf16 %v20, %v19
    %v43 = vpack.c.bf16 %v22, %v21
    %v44 = vpack.c.bf16 %v24, %v23
    %v45 = vpack.c.bf16 %v26, %v25
    %v46 = vpack.c.bf16 %v28, %v27
    %v47 = vlaneseq
    %v48 = vshrl.u32 %v47, 7
    %v49 = vsub.s32 0, %v48
    %v50 = vrot.slane %v41, %v49
    %vm51 = vcmask 261120
    %v53 = vsel %vm51, %v42, 0
    %v56 = vsel %vm51, %v45, 0
    %v59 = vsel %vm51, %v46, 0
    %61 = vmatprep.subr.bf16.mxu0 0
    %62 = vmatpush1.bf16.xpose.msra.mxu0 %v56
    %63 = vmatprep.subr.bf16.mxu0 0
    %64 = vmatpush1.bf16.xpose.msra.mxu0 %v59
    %65 = vmatprep.subr.bf16.mxu0 0
    %66 = vmatpush1.bf16.xpose.msra.mxu0 0
    %67 = vmatprep.subr.bf16.mxu0 0
    %68 = vmatpush1.bf16.xpose.msra.mxu0 0
    %69 = vmatprep.subr.bf16.mxu0 0
    %70 = vmatpush1.bf16.xpose.msra.mxu0 0
    %71 = vmatprep.subr.bf16.mxu0 0
    %72 = vmatpush1.bf16.xpose.msra.mxu0 0
    %73 = vmatprep.subr.bf16.mxu0 0
    %74 = vmatpush1.bf16.xpose.msra.mxu0 0
    %75 = vmatprep.subr.bf16.mxu0 0
    %76 = vmatpush1.bf16.xpose.msra.mxu0 0
    %77 = vmatprep.subr.bf16.mxu0 0
    %78 = vmatpush1.bf16.xpose.msra.mxu0 0
    %79 = vmatprep.subr.bf16.mxu0 0
    %80 = vmatpush1.bf16.xpose.msra.mxu0 0
    %81 = vmatprep.subr.bf16.mxu0 0
    %82 = vmatpush1.bf16.xpose.msra.mxu0 0
    %83 = vmatprep.subr.bf16.mxu0 0
    %84 = vmatpush1.bf16.xpose.msra.mxu0 0
    %85 = vmatprep.subr.bf16.mxu0 0
    %86 = vmatpush1.bf16.xpose.msra.mxu0 0
    %87 = vmatprep.subr.bf16.mxu0 0
    %88 = vmatpush1.bf16.xpose.msra.mxu0 0
    %89 = vmatprep.subr.bf16.mxu0 0
    %90 = vmatpush1.bf16.xpose.msra.mxu0 0
    %91 = vmatprep.subr.bf16.mxu0 0
    %92 = vmatpush1.bf16.xpose.msra.mxu0 0
    %93 = vmatprep.mubr.bf16.mxu0 0
    %94 = vmatmul.mubr.bf16.gmra.mrb[0].mxu0 %v53
    %v95 = vpop.f32.mrb[0].mxu0
    %v96 = vadd.f32 %v50, %v95
    %v97 = vpop.f32.mrb[0].mxu0
    %v98 = vpop.f32.mrb[0].mxu0
    %v99 = vadd.f32 %v50, %v98
    %v100 = vpop.f32.mrb[0].mxu0
    %101 = vdwg.mxu0
    %v102 = vpack.c.bf16 %v30, %v29
    %v103 = vpack.c.bf16 %v32, %v31
    %v104 = vlaneseq
    %v105 = vshrl.u32 %v104, 7
    %v106 = vsub.s32 1, %v105
    %v107 = vrot.slane %v41, %v106
    %v109 = vsel %vm51, %v43, 0
    %v112 = vsel %vm51, %v44, 0
    %v115 = vsel %vm51, %v102, 0
    %v118 = vsel %vm51, %v103, 0
    %120 = vmatprep.subr.bf16.mxu0 0
    %121 = vmatpush1.bf16.xpose.msra.mxu0 %v115
    %122 = vmatprep.subr.bf16.mxu0 0
    %123 = vmatpush1.bf16.xpose.msra.mxu0 %v118
    %124 = vmatprep.subr.bf16.mxu0 0
    %125 = vmatpush1.bf16.xpose.msra.mxu0 0
    %126 = vmatprep.subr.bf16.mxu0 0
    %127 = vmatpush1.bf16.xpose.msra.mxu0 0
    %128 = vmatprep.subr.bf16.mxu0 0
    %129 = vmatpush1.bf16.xpose.msra.mxu0 0
    %130 = vmatprep.subr.bf16.mxu0 0
    %131 = vmatpush1.bf16.xpose.msra.mxu0 0
    %132 = vmatprep.subr.bf16.mxu0 0
    %133 = vmatpush1.bf16.xpose.msra.mxu0 0
    %134 = vmatprep.subr.bf16.mxu0 0
    %135 = vmatpush1.bf16.xpose.msra.mxu0 0
    %136 = vmatprep.subr.bf16.mxu0 0
    %137 = vmatpush1.bf16.xpose.msra.mxu0 0
    %138 = vmatprep.subr.bf16.mxu0 0
    %139 = vmatpush1.bf16.xpose.msra.mxu0 0
    %140 = vmatprep.subr.bf16.mxu0 0
    %141 = vmatpush1.bf16.xpose.msra.mxu0 0
    %142 = vmatprep.subr.bf16.mxu0 0
    %143 = vmatpush1.bf16.xpose.msra.mxu0 0
    %144 = vmatprep.subr.bf16.mxu0 0
    %145 = vmatpush1.bf16.xpose.msra.mxu0 0
    %146 = vmatprep.subr.bf16.mxu0 0
    %147 = vmatpush1.bf16.xpose.msra.mxu0 0
    %148 = vmatprep.subr.bf16.mxu0 0
    %149 = vmatpush1.bf16.xpose.msra.mxu0 0
    %150 = vmatprep.subr.bf16.mxu0 0
    %151 = vmatpush1.bf16.xpose.msra.mxu0 0
    %152 = vmatprep.mubr.bf16.mxu0 0
    %153 = vmatmul.mubr.bf16.gmra.mrb[0].mxu0 %v109
    %v154 = vpop.f32.mrb[0].mxu0
    %v155 = vadd.f32 %v107, %v154
    %v156 = vpop.f32.mrb[0].mxu0
    %v157 = vpop.f32.mrb[0].mxu0
    %v158 = vadd.f32 %v107, %v157
    %v159 = vpop.f32.mrb[0].mxu0
    %160 = vmatprep.mubr.bf16.mxu0 0
    %161 = vmatmul.mubr.bf16.gmra.mrb[0].mxu0 %v112
    %v162 = vpop.f32.mrb[0].mxu0
    %v163 = vadd.f32 %v107, %v162
    %v164 = vpop.f32.mrb[0].mxu0
    %v165 = vpop.f32.mrb[0].mxu0
    %v166 = vadd.f32 %v107, %v165
    %v167 = vpop.f32.mrb[0].mxu0
    %168 = vdwg.mxu0
    %v169 = vpack.c.bf16 %v34, %v33
    %v170 = vpack.c.bf16 %v36, %v35
    %v171 = vlaneseq
    %v172 = vshrl.u32 %v171, 7
    %v173 = vsub.s32 2, %v172
    %v174 = vrot.slane %v41, %v173
    %v176 = vsel %vm51, %v169, 0
    %v179 = vsel %vm51, %v170, 0
    %181 = vmatprep.subr.bf16.mxu0 0
    %182 = vmatpush1.bf16.xpose.msra.mxu0 %v176
    %183 = vmatprep.subr.bf16.mxu0 0
    %184 = vmatpush1.bf16.xpose.msra.mxu0 %v179
    %185 = vmatprep.subr.bf16.mxu0 0
    %186 = vmatpush1.bf16.xpose.msra.mxu0 0
    %187 = vmatprep.subr.bf16.mxu0 0
    %188 = vmatpush1.bf16.xpose.msra.mxu0 0
    %189 = vmatprep.subr.bf16.mxu0 0
    %190 = vmatpush1.bf16.xpose.msra.mxu0 0
    %191 = vmatprep.subr.bf16.mxu0 0
    %192 = vmatpush1.bf16.xpose.msra.mxu0 0
    %193 = vmatprep.subr.bf16.mxu0 0
    %194 = vmatpush1.bf16.xpose.msra.mxu0 0
    %195 = vmatprep.subr.bf16.mxu0 0
    %196 = vmatpush1.bf16.xpose.msra.mxu0 0
    %197 = vmatprep.subr.bf16.mxu0 0
    %198 = vmatpush1.bf16.xpose.msra.mxu0 0
    %199 = vmatprep.subr.bf16.mxu0 0
    %200 = vmatpush1.bf16.xpose.msra.mxu0 0
    %201 = vmatprep.subr.bf16.mxu0 0
    %202 = vmatpush1.bf16.xpose.msra.mxu0 0
    %203 = vmatprep.subr.bf16.mxu0 0
    %204 = vmatpush1.bf16.xpose.msra.mxu0 0
    %205 = vmatprep.subr.bf16.mxu0 0
    %206 = vmatpush1.bf16.xpose.msra.mxu0 0
    %207 = vmatprep.subr.bf16.mxu0 0
    %208 = vmatpush1.bf16.xpose.msra.mxu0 0
    %209 = vmatprep.subr.bf16.mxu0 0
    %210 = vmatpush1.bf16.xpose.msra.mxu0 0
    %211 = vmatprep.subr.bf16.mxu0 0
    %212 = vmatpush1.bf16.xpose.msra.mxu0 0
    %213 = vmatprep.mubr.bf16.mxu0 0
    %214 = vmatmul.mubr.bf16.gmra.mrb[0].mxu0 %v109
    %v215 = vpop.f32.mrb[0].mxu0
    %v216 = vadd.f32 %v174, %v215
    %v217 = vpop.f32.mrb[0].mxu0
    %v218 = vpop.f32.mrb[0].mxu0
    %v219 = vadd.f32 %v174, %v218
    %v220 = vpop.f32.mrb[0].mxu0
    %221 = vmatprep.mubr.bf16.mxu0 0
    %222 = vmatmul.mubr.bf16.gmra.mrb[0].mxu0 %v112
    %v223 = vpop.f32.mrb[0].mxu0
    %v224 = vadd.f32 %v174, %v223
    %v225 = vpop.f32.mrb[0].mxu0
    %v226 = vpop.f32.mrb[0].mxu0
    %v227 = vadd.f32 %v174, %v226
    %v228 = vpop.f32.mrb[0].mxu0
    %229 = vdwg.mxu0
    %v230 = vmul.f32 %v96, 0.35355338
    %v231 = vmul.f32 %v99, 0.35355338
    %233 = vrot.lane.b32.xlu0 %v230, 120
    %v234 = vpop.permute.xlu0 %233
    %236 = vrot.lane.b32.xlu0 %v230, 112
    %v237 = vpop.permute.xlu0 %236
    %239 = vrot.lane.b32.xlu0 %v230, 104
    %v240 = vpop.permute.xlu0 %239
    %244 = vrot.lane.b32.xlu0 %v155, 120
    %v245 = vpop.permute.xlu0 %244
    %246 = vrot.lane.b32.xlu0 %v158, 120
    %v247 = vpop.permute.xlu0 %246
    %250 = vrot.lane.b32.xlu0 %v155, 112
    %v251 = vpop.permute.xlu0 %250
    %252 = vrot.lane.b32.xlu0 %v158, 112
    %v253 = vpop.permute.xlu0 %252
    %256 = vrot.lane.b32.xlu0 %v155, 104
    %v257 = vpop.permute.xlu0 %256
    %258 = vrot.lane.b32.xlu0 %v158, 104
    %v259 = vpop.permute.xlu0 %258
    %264 = vrot.lane.b32.xlu0 %v216, 120
    %v265 = vpop.permute.xlu0 %264
    %266 = vrot.lane.b32.xlu0 %v219, 120
    %v267 = vpop.permute.xlu0 %266
    %270 = vrot.lane.b32.xlu0 %v216, 112
    %v271 = vpop.permute.xlu0 %270
    %272 = vrot.lane.b32.xlu0 %v219, 112
    %v273 = vpop.permute.xlu0 %272
    %276 = vrot.lane.b32.xlu0 %v216, 104
    %v277 = vpop.permute.xlu0 %276
    %278 = vrot.lane.b32.xlu0 %v219, 104
    %v279 = vpop.permute.xlu0 %278
    %v282 = vpack.c.bf16 %v230, %v230
    %v283 = vpack.c.bf16 %v234, %v234
    %v284 = vpack.c.bf16 %v237, %v237
    %v285 = vpack.c.bf16 %v240, %v240
    %v286 = vpack.c.bf16 %v158, %v155
    %v287 = vpack.c.bf16 %v247, %v245
    %v288 = vpack.c.bf16 %v253, %v251
    %v289 = vpack.c.bf16 %v259, %v257
    %vm290 = vcmask 64512
    %v292 = vsel %vm290, %v282, 0
    %v295 = vsel %vm290, %v286, 0
    %297 = vmatprep.subr.bf16.mxu0 0
    %298 = vmatpush1.bf16.xpose.msra.mxu0 %v295
    %299 = vmatprep.subr.bf16.mxu0 0
    %300 = vmatpush1.bf16.xpose.msra.mxu0 0
    %301 = vmatprep.subr.bf16.mxu0 0
    %302 = vmatpush1.bf16.xpose.msra.mxu0 0
    %303 = vmatprep.subr.bf16.mxu0 0
    %304 = vmatpush1.bf16.xpose.msra.mxu0 0
    %305 = vmatprep.subr.bf16.mxu0 0
    %306 = vmatpush1.bf16.xpose.msra.mxu0 0
    %307 = vmatprep.subr.bf16.mxu0 0
    %308 = vmatpush1.bf16.xpose.msra.mxu0 0
    %309 = vmatprep.subr.bf16.mxu0 0
    %310 = vmatpush1.bf16.xpose.msra.mxu0 0
    %311 = vmatprep.subr.bf16.mxu0 0
    %312 = vmatpush1.bf16.xpose.msra.mxu0 0
    %313 = vmatprep.subr.bf16.mxu0 0
    %314 = vmatpush1.bf16.xpose.msra.mxu0 0
    %315 = vmatprep.subr.bf16.mxu0 0
    %316 = vmatpush1.bf16.xpose.msra.mxu0 0
    %317 = vmatprep.subr.bf16.mxu0 0
    %318 = vmatpush1.bf16.xpose.msra.mxu0 0
    %319 = vmatprep.subr.bf16.mxu0 0
    %320 = vmatpush1.bf16.xpose.msra.mxu0 0
    %321 = vmatprep.subr.bf16.mxu0 0
    %322 = vmatpush1.bf16.xpose.msra.mxu0 0
    %323 = vmatprep.subr.bf16.mxu0 0
    %324 = vmatpush1.bf16.xpose.msra.mxu0 0
    %325 = vmatprep.subr.bf16.mxu0 0
    %326 = vmatpush1.bf16.xpose.msra.mxu0 0
    %327 = vmatprep.subr.bf16.mxu0 0
    %328 = vmatpush1.bf16.xpose.msra.mxu0 0
    %329 = vmatprep.mubr.bf16.mxu0 0
    %330 = vmatmul.mubr.bf16.gmra.mrb[0].mxu0 %v292
    %v331 = vpop.f32.mrb[0].mxu0
    %v332 = vadd.f32 0.0, %v331
    %v333 = vpop.f32.mrb[0].mxu0
    %v334 = vpop.f32.mrb[0].mxu0
    %v335 = vpop.f32.mrb[0].mxu0
    %336 = vdwg.mxu0
    %v338 = vsel %vm290, %v283, 0
    %v341 = vsel %vm290, %v287, 0
    %343 = vmatprep.subr.bf16.mxu0 0
    %344 = vmatpush1.bf16.xpose.msra.mxu0 %v341
    %345 = vmatprep.subr.bf16.mxu0 0
    %346 = vmatpush1.bf16.xpose.msra.mxu0 0
    %347 = vmatprep.subr.bf16.mxu0 0
    %348 = vmatpush1.bf16.xpose.msra.mxu0 0
    %349 = vmatprep.subr.bf16.mxu0 0
    %350 = vmatpush1.bf16.xpose.msra.mxu0 0
    %351 = vmatprep.subr.bf16.mxu0 0
    %352 = vmatpush1.bf16.xpose.msra.mxu0 0
    %353 = vmatprep.subr.bf16.mxu0 0
    %354 = vmatpush1.bf16.xpose.msra.mxu0 0
    %355 = vmatprep.subr.bf16.mxu0 0
    %356 = vmatpush1.bf16.xpose.msra.mxu0 0
    %357 = vmatprep.subr.bf16.mxu0 0
    %358 = vmatpush1.bf16.xpose.msra.mxu0 0
    %359 = vmatprep.subr.bf16.mxu0 0
    %360 = vmatpush1.bf16.xpose.msra.mxu0 0
    %361 = vmatprep.subr.bf16.mxu0 0
    %362 = vmatpush1.bf16.xpose.msra.mxu0 0
    %363 = vmatprep.subr.bf16.mxu0 0
    %364 = vmatpush1.bf16.xpose.msra.mxu0 0
    %365 = vmatprep.subr.bf16.mxu0 0
    %366 = vmatpush1.bf16.xpose.msra.mxu0 0
    %367 = vmatprep.subr.bf16.mxu0 0
    %368 = vmatpush1.bf16.xpose.msra.mxu0 0
    %369 = vmatprep.subr.bf16.mxu0 0
    %370 = vmatpush1.bf16.xpose.msra.mxu0 0
    %371 = vmatprep.subr.bf16.mxu0 0
    %372 = vmatpush1.bf16.xpose.msra.mxu0 0
    %373 = vmatprep.subr.bf16.mxu0 0
    %374 = vmatpush1.bf16.xpose.msra.mxu0 0
    %375 = vmatprep.mubr.bf16.mxu0 0
    %376 = vmatmul.mubr.bf16.gmra.mrb[0].mxu0 %v338
    %v377 = vpop.f32.mrb[0].mxu0
    %v378 = vadd.f32 0.0, %v377
    %v379 = vpop.f32.mrb[0].mxu0
    %v380 = vpop.f32.mrb[0].mxu0
    %v381 = vpop.f32.mrb[0].mxu0
    %382 = vdwg.mxu0
    %v384 = vsel %vm290, %v284, 0
    %v387 = vsel %vm290, %v288, 0
    %389 = vmatprep.subr.bf16.mxu0 0
    %390 = vmatpush1.bf16.xpose.msra.mxu0 %v387
    %391 = vmatprep.subr.bf16.mxu0 0
    %392 = vmatpush1.bf16.xpose.msra.mxu0 0
    %393 = vmatprep.subr.bf16.mxu0 0
    %394 = vmatpush1.bf16.xpose.msra.mxu0 0
    %395 = vmatprep.subr.bf16.mxu0 0
    %396 = vmatpush1.bf16.xpose.msra.mxu0 0
    %397 = vmatprep.subr.bf16.mxu0 0
    %398 = vmatpush1.bf16.xpose.msra.mxu0 0
    %399 = vmatprep.subr.bf16.mxu0 0
    %400 = vmatpush1.bf16.xpose.msra.mxu0 0
    %401 = vmatprep.subr.bf16.mxu0 0
    %402 = vmatpush1.bf16.xpose.msra.mxu0 0
    %403 = vmatprep.subr.bf16.mxu0 0
    %404 = vmatpush1.bf16.xpose.msra.mxu0 0
    %405 = vmatprep.subr.bf16.mxu0 0
    %406 = vmatpush1.bf16.xpose.msra.mxu0 0
    %407 = vmatprep.subr.bf16.mxu0 0
    %408 = vmatpush1.bf16.xpose.msra.mxu0 0
    %409 = vmatprep.subr.bf16.mxu0 0
    %410 = vmatpush1.bf16.xpose.msra.mxu0 0
    %411 = vmatprep.subr.bf16.mxu0 0
    %412 = vmatpush1.bf16.xpose.msra.mxu0 0
    %413 = vmatprep.subr.bf16.mxu0 0
    %414 = vmatpush1.bf16.xpose.msra.mxu0 0
    %415 = vmatprep.subr.bf16.mxu0 0
    %416 = vmatpush1.bf16.xpose.msra.mxu0 0
    %417 = vmatprep.subr.bf16.mxu0 0
    %418 = vmatpush1.bf16.xpose.msra.mxu0 0
    %419 = vmatprep.subr.bf16.mxu0 0
    %420 = vmatpush1.bf16.xpose.msra.mxu0 0
    %421 = vmatprep.mubr.bf16.mxu0 0
    %422 = vmatmul.mubr.bf16.gmra.mrb[0].mxu0 %v384
    %v423 = vpop.f32.mrb[0].mxu0
    %v424 = vadd.f32 0.0, %v423
    %v425 = vpop.f32.mrb[0].mxu0
    %v426 = vpop.f32.mrb[0].mxu0
    %v427 = vpop.f32.mrb[0].mxu0
    %428 = vdwg.mxu0
    %v430 = vsel %vm290, %v285, 0
    %v433 = vsel %vm290, %v289, 0
    %435 = vmatprep.subr.bf16.mxu0 0
    %436 = vmatpush1.bf16.xpose.msra.mxu0 %v433
    %437 = vmatprep.subr.bf16.mxu0 0
    %438 = vmatpush1.bf16.xpose.msra.mxu0 0
    %439 = vmatprep.subr.bf16.mxu0 0
    %440 = vmatpush1.bf16.xpose.msra.mxu0 0
    %441 = vmatprep.subr.bf16.mxu0 0
    %442 = vmatpush1.bf16.xpose.msra.mxu0 0
    %443 = vmatprep.subr.bf16.mxu0 0
    %444 = vmatpush1.bf16.xpose.msra.mxu0 0
    %445 = vmatprep.subr.bf16.mxu0 0
    %446 = vmatpush1.bf16.xpose.msra.mxu0 0
    %447 = vmatprep.subr.bf16.mxu0 0
    %448 = vmatpush1.bf16.xpose.msra.mxu0 0
    %449 = vmatprep.subr.bf16.mxu0 0
    %450 = vmatpush1.bf16.xpose.msra.mxu0 0
    %451 = vmatprep.subr.bf16.mxu0 0
    %452 = vmatpush1.bf16.xpose.msra.mxu0 0
    %453 = vmatprep.subr.bf16.mxu0 0
    %454 = vmatpush1.bf16.xpose.msra.mxu0 0
    %455 = vmatprep.subr.bf16.mxu0 0
    %456 = vmatpush1.bf16.xpose.msra.mxu0 0
    %457 = vmatprep.subr.bf16.mxu0 0
    %458 = vmatpush1.bf16.xpose.msra.mxu0 0
    %459 = vmatprep.subr.bf16.mxu0 0
    %460 = vmatpush1.bf16.xpose.msra.mxu0 0
    %461 = vmatprep.subr.bf16.mxu0 0
    %462 = vmatpush1.bf16.xpose.msra.mxu0 0
    %463 = vmatprep.subr.bf16.mxu0 0
    %464 = vmatpush1.bf16.xpose.msra.mxu0 0
    %465 = vmatprep.subr.bf16.mxu0 0
    %466 = vmatpush1.bf16.xpose.msra.mxu0 0
    %467 = vmatprep.mubr.bf16.mxu0 0
    %468 = vmatmul.mubr.bf16.gmra.mrb[0].mxu0 %v430
    %v469 = vpop.f32.mrb[0].mxu0
    %v470 = vadd.f32 0.0, %v469
    %v471 = vpop.f32.mrb[0].mxu0
    %v472 = vpop.f32.mrb[0].mxu0
    %v473 = vpop.f32.mrb[0].mxu0
    %474 = vdwg.mxu0
    %vm475 = vcmask 130048
    %v476 = vsel %vm475, %v332, -inf
    %477 = vmax.xlane.f32.xlu0 %v476
    %v478 = vpop.xlane.xlu0 %477
    %v479 = vsel %vm475, %v378, -inf
    %480 = vmax.xlane.f32.xlu0 %v479
    %v481 = vpop.xlane.xlu0 %480
    %v482 = vsel %vm475, %v424, -inf
    %483 = vmax.xlane.f32.xlu0 %v482
    %v484 = vpop.xlane.xlu0 %483
    %v485 = vsel %vm475, %v470, -inf
    %486 = vmax.xlane.f32.xlu0 %v485
    %v487 = vpop.xlane.xlu0 %486
    %v488 = vsub.f32 %v332, %v478
    %v489 = vsub.f32 %v378, %v481
    %v490 = vsub.f32 %v424, %v484
    %v491 = vsub.f32 %v470, %v487
    %v492 = vmul.f32 %v488, 1.442695
    %v493 = vpow.pop %v492
    %v494 = vmul.f32 %v489, 1.442695
    %v495 = vpow.pop %v494
    %v496 = vmul.f32 %v490, 1.442695
    %v497 = vpow.pop %v496
    %v498 = vmul.f32 %v491, 1.442695
    %v499 = vpow.pop %v498
    %v500 = vsel %vm475, %v493, 0.0
    %501 = vadd.xlane.f32.xlu0 %v500
    %v502 = vpop.xlane.xlu0 %501
    %v503 = vsel %vm475, %v495, 0.0
    %504 = vadd.xlane.f32.xlu0 %v503
    %v505 = vpop.xlane.xlu0 %504
    %v506 = vsel %vm475, %v497, 0.0
    %507 = vadd.xlane.f32.xlu0 %v506
    %v508 = vpop.xlane.xlu0 %507
    %v509 = vsel %vm475, %v499, 0.0
    %510 = vadd.xlane.f32.xlu0 %v509
    %v511 = vpop.xlane.xlu0 %510
    %v512 = vrcp.pop %v502
    %v513 = vmul.f32 %v493, %v512
    %v514 = vrcp.pop %v505
    %v515 = vmul.f32 %v495, %v514
    %v516 = vrcp.pop %v508
    %v517 = vmul.f32 %v497, %v516
    %v518 = vrcp.pop %v511
    %v519 = vmul.f32 %v499, %v518
    %v520 = vpack.c.bf16 %v513, %v513
    %v521 = vpack.c.bf16 %v515, %v515
    %v522 = vpack.c.bf16 %v517, %v517
    %v523 = vpack.c.bf16 %v519, %v519
    %v524 = vpack.c.bf16 %v219, %v216
    %v525 = vpack.c.bf16 %v267, %v265
    %v526 = vpack.c.bf16 %v273, %v271
    %v527 = vpack.c.bf16 %v279, %v277
    %v529 = vsel %vm475, %v520, 0
    %531 = vmatprep.subr.bf16.mxu0 0
    %532 = vmatpush1.bf16.msra.mxu0 %v524
    %533 = vmatprep.subr.bf16.mxu0 0
    %534 = vmatpush1.bf16.msra.mxu0 0
    %535 = vmatprep.subr.bf16.mxu0 0
    %536 = vmatpush1.bf16.msra.mxu0 0
    %537 = vmatprep.subr.bf16.mxu0 0
    %538 = vmatpush1.bf16.msra.mxu0 0
    %539 = vmatprep.subr.bf16.mxu0 0
    %540 = vmatpush1.bf16.msra.mxu0 0
    %541 = vmatprep.subr.bf16.mxu0 0
    %542 = vmatpush1.bf16.msra.mxu0 0
    %543 = vmatprep.subr.bf16.mxu0 0
    %544 = vmatpush1.bf16.msra.mxu0 0
    %545 = vmatprep.subr.bf16.mxu0 0
    %546 = vmatpush1.bf16.msra.mxu0 0
    %547 = vmatprep.subr.bf16.mxu0 0
    %548 = vmatpush1.bf16.msra.mxu0 0
    %549 = vmatprep.subr.bf16.mxu0 0
    %550 = vmatpush1.bf16.msra.mxu0 0
    %551 = vmatprep.subr.bf16.mxu0 0
    %552 = vmatpush1.bf16.msra.mxu0 0
    %553 = vmatprep.subr.bf16.mxu0 0
    %554 = vmatpush1.bf16.msra.mxu0 0
    %555 = vmatprep.subr.bf16.mxu0 0
    %556 = vmatpush1.bf16.msra.mxu0 0
    %557 = vmatprep.subr.bf16.mxu0 0
    %558 = vmatpush1.bf16.msra.mxu0 0
    %559 = vmatprep.subr.bf16.mxu0 0
    %560 = vmatpush1.bf16.msra.mxu0 0
    %561 = vmatprep.subr.bf16.mxu0 0
    %562 = vmatpush1.bf16.msra.mxu0 0
    %563 = vmatprep.mubr.bf16.mxu0 0
    %564 = vmatmul.mubr.bf16.gmra.mrb[0].mxu0 %v529
    %v565 = vpop.f32.mrb[0].mxu0
    %v566 = vadd.f32 0.0, %v565
    %v567 = vpop.f32.mrb[0].mxu0
    %v568 = vpop.f32.mrb[0].mxu0
    %v569 = vpop.f32.mrb[0].mxu0
    %570 = vdwg.mxu0
    %v572 = vsel %vm475, %v521, 0
    %574 = vmatprep.subr.bf16.mxu0 0
    %575 = vmatpush1.bf16.msra.mxu0 %v525
    %576 = vmatprep.subr.bf16.mxu0 0
    %577 = vmatpush1.bf16.msra.mxu0 0
    %578 = vmatprep.subr.bf16.mxu0 0
    %579 = vmatpush1.bf16.msra.mxu0 0
    %580 = vmatprep.subr.bf16.mxu0 0
    %581 = vmatpush1.bf16.msra.mxu0 0
    %582 = vmatprep.subr.bf16.mxu0 0
    %583 = vmatpush1.bf16.msra.mxu0 0
    %584 = vmatprep.subr.bf16.mxu0 0
    %585 = vmatpush1.bf16.msra.mxu0 0
    %586 = vmatprep.subr.bf16.mxu0 0
    %587 = vmatpush1.bf16.msra.mxu0 0
    %588 = vmatprep.subr.bf16.mxu0 0
    %589 = vmatpush1.bf16.msra.mxu0 0
    %590 = vmatprep.subr.bf16.mxu0 0
    %591 = vmatpush1.bf16.msra.mxu0 0
    %592 = vmatprep.subr.bf16.mxu0 0
    %593 = vmatpush1.bf16.msra.mxu0 0
    %594 = vmatprep.subr.bf16.mxu0 0
    %595 = vmatpush1.bf16.msra.mxu0 0
    %596 = vmatprep.subr.bf16.mxu0 0
    %597 = vmatpush1.bf16.msra.mxu0 0
    %598 = vmatprep.subr.bf16.mxu0 0
    %599 = vmatpush1.bf16.msra.mxu0 0
    %600 = vmatprep.subr.bf16.mxu0 0
    %601 = vmatpush1.bf16.msra.mxu0 0
    %602 = vmatprep.subr.bf16.mxu0 0
    %603 = vmatpush1.bf16.msra.mxu0 0
    %604 = vmatprep.subr.bf16.mxu0 0
    %605 = vmatpush1.bf16.msra.mxu0 0
    %606 = vmatprep.mubr.bf16.mxu0 0
    %607 = vmatmul.mubr.bf16.gmra.mrb[0].mxu0 %v572
    %v608 = vpop.f32.mrb[0].mxu0
    %v609 = vadd.f32 0.0, %v608
    %v610 = vpop.f32.mrb[0].mxu0
    %v611 = vpop.f32.mrb[0].mxu0
    %v612 = vpop.f32.mrb[0].mxu0
    %613 = vdwg.mxu0
    %v615 = vsel %vm475, %v522, 0
    %617 = vmatprep.subr.bf16.mxu0 0
    %618 = vmatpush1.bf16.msra.mxu0 %v526
    %619 = vmatprep.subr.bf16.mxu0 0
    %620 = vmatpush1.bf16.msra.mxu0 0
    %621 = vmatprep.subr.bf16.mxu0 0
    %622 = vmatpush1.bf16.msra.mxu0 0
    %623 = vmatprep.subr.bf16.mxu0 0
    %624 = vmatpush1.bf16.msra.mxu0 0
    %625 = vmatprep.subr.bf16.mxu0 0
    %626 = vmatpush1.bf16.msra.mxu0 0
    %627 = vmatprep.subr.bf16.mxu0 0
    %628 = vmatpush1.bf16.msra.mxu0 0
    %629 = vmatprep.subr.bf16.mxu0 0
    %630 = vmatpush1.bf16.msra.mxu0 0
    %631 = vmatprep.subr.bf16.mxu0 0
    %632 = vmatpush1.bf16.msra.mxu0 0
    %633 = vmatprep.subr.bf16.mxu0 0
    %634 = vmatpush1.bf16.msra.mxu0 0
    %635 = vmatprep.subr.bf16.mxu0 0
    %636 = vmatpush1.bf16.msra.mxu0 0
    %637 = vmatprep.subr.bf16.mxu0 0
    %638 = vmatpush1.bf16.msra.mxu0 0
    %639 = vmatprep.subr.bf16.mxu0 0
    %640 = vmatpush1.bf16.msra.mxu0 0
    %641 = vmatprep.subr.bf16.mxu0 0
    %642 = vmatpush1.bf16.msra.mxu0 0
    %643 = vmatprep.subr.bf16.mxu0 0
    %644 = vmatpush1.bf16.msra.mxu0 0
    %645 = vmatprep.subr.bf16.mxu0 0
    %646 = vmatpush1.bf16.msra.mxu0 0
    %647 = vmatprep.subr.bf16.mxu0 0
    %648 = vmatpush1.bf16.msra.mxu0 0
    %649 = vmatprep.mubr.bf16.mxu0 0
    %650 = vmatmul.mubr.bf16.gmra.mrb[0].mxu0 %v615
    %v651 = vpop.f32.mrb[0].mxu0
    %v652 = vadd.f32 0.0, %v651
    %v653 = vpop.f32.mrb[0].mxu0
    %v654 = vpop.f32.mrb[0].mxu0
    %v655 = vpop.f32.mrb[0].mxu0
    %656 = vdwg.mxu0
    %v658 = vsel %vm475, %v523, 0
    %660 = vmatprep.subr.bf16.mxu0 0
    %661 = vmatpush1.bf16.msra.mxu0 %v527
    %662 = vmatprep.subr.bf16.mxu0 0
    %663 = vmatpush1.bf16.msra.mxu0 0
    %664 = vmatprep.subr.bf16.mxu0 0
    %665 = vmatpush1.bf16.msra.mxu0 0
    %666 = vmatprep.subr.bf16.mxu0 0
    %667 = vmatpush1.bf16.msra.mxu0 0
    %668 = vmatprep.subr.bf16.mxu0 0
    %669 = vmatpush1.bf16.msra.mxu0 0
    %670 = vmatprep.subr.bf16.mxu0 0
    %671 = vmatpush1.bf16.msra.mxu0 0
    %672 = vmatprep.subr.bf16.mxu0 0
    %673 = vmatpush1.bf16.msra.mxu0 0
    %674 = vmatprep.subr.bf16.mxu0 0
    %675 = vmatpush1.bf16.msra.mxu0 0
    %676 = vmatprep.subr.bf16.mxu0 0
    %677 = vmatpush1.bf16.msra.mxu0 0
    %678 = vmatprep.subr.bf16.mxu0 0
    %679 = vmatpush1.bf16.msra.mxu0 0
    %680 = vmatprep.subr.bf16.mxu0 0
    %681 = vmatpush1.bf16.msra.mxu0 0
    %682 = vmatprep.subr.bf16.mxu0 0
    %683 = vmatpush1.bf16.msra.mxu0 0
    %684 = vmatprep.subr.bf16.mxu0 0
    %685 = vmatpush1.bf16.msra.mxu0 0
    %686 = vmatprep.subr.bf16.mxu0 0
    %687 = vmatpush1.bf16.msra.mxu0 0
    %688 = vmatprep.subr.bf16.mxu0 0
    %689 = vmatpush1.bf16.msra.mxu0 0
    %690 = vmatprep.subr.bf16.mxu0 0
    %691 = vmatpush1.bf16.msra.mxu0 0
    %692 = vmatprep.mubr.bf16.mxu0 0
    %693 = vmatmul.mubr.bf16.gmra.mrb[0].mxu0 %v658
    %v694 = vpop.f32.mrb[0].mxu0
    %v695 = vadd.f32 0.0, %v694
    %v696 = vpop.f32.mrb[0].mxu0
    %v697 = vpop.f32.mrb[0].mxu0
    %v698 = vpop.f32.mrb[0].mxu0
    %699 = vdwg.mxu0
    %701 = vrot.lane.b32.xlu0 %v609, 8
    %v702 = vpop.permute.xlu0 %701
    %705 = vrot.lane.b32.xlu0 %v652, 16
    %v706 = vpop.permute.xlu0 %705
    %709 = vrot.lane.b32.xlu0 %v695, 24
    %v710 = vpop.permute.xlu0 %709
    %v712 = vsel %vm290, %v566, %v702
    %v713 = vsel %vm475, %v712, %v706
    %vm714 = vcmask 195584
    %v715 = vsel %vm714, %v713, %v710
    %717 = vrot.lane.b32.xlu0 %v231, 120
    %v718 = vpop.permute.xlu0 %717
    %720 = vrot.lane.b32.xlu0 %v231, 112
    %v721 = vpop.permute.xlu0 %720
    %723 = vrot.lane.b32.xlu0 %v231, 104
    %v724 = vpop.permute.xlu0 %723
    %728 = vrot.lane.b32.xlu0 %v163, 120
    %v729 = vpop.permute.xlu0 %728
    %730 = vrot.lane.b32.xlu0 %v166, 120
    %v731 = vpop.permute.xlu0 %730
    %734 = vrot.lane.b32.xlu0 %v163, 112
    %v735 = vpop.permute.xlu0 %734
    %736 = vrot.lane.b32.xlu0 %v166, 112
    %v737 = vpop.permute.xlu0 %736
    %740 = vrot.lane.b32.xlu0 %v163, 104
    %v741 = vpop.permute.xlu0 %740
    %742 = vrot.lane.b32.xlu0 %v166, 104
    %v743 = vpop.permute.xlu0 %742
    %748 = vrot.lane.b32.xlu0 %v224, 120
    %v749 = vpop.permute.xlu0 %748
    %750 = vrot.lane.b32.xlu0 %v227, 120
    %v751 = vpop.permute.xlu0 %750
    %754 = vrot.lane.b32.xlu0 %v224, 112
    %v755 = vpop.permute.xlu0 %754
    %756 = vrot.lane.b32.xlu0 %v227, 112
    %v757 = vpop.permute.xlu0 %756
    %760 = vrot.lane.b32.xlu0 %v224, 104
    %v761 = vpop.permute.xlu0 %760
    %762 = vrot.lane.b32.xlu0 %v227, 104
    %v763 = vpop.permute.xlu0 %762
    %v766 = vpack.c.bf16 %v231, %v231
    %v767 = vpack.c.bf16 %v718, %v718
    %v768 = vpack.c.bf16 %v721, %v721
    %v769 = vpack.c.bf16 %v724, %v724
    %v770 = vpack.c.bf16 %v166, %v163
    %v771 = vpack.c.bf16 %v731, %v729
    %v772 = vpack.c.bf16 %v737, %v735
    %v773 = vpack.c.bf16 %v743, %v741
    %v775 = vsel %vm290, %v766, 0
    %v778 = vsel %vm290, %v770, 0
    %780 = vmatprep.subr.bf16.mxu0 0
    %781 = vmatpush1.bf16.xpose.msra.mxu0 %v778
    %782 = vmatprep.subr.bf16.mxu0 0
    %783 = vmatpush1.bf16.xpose.msra.mxu0 0
    %784 = vmatprep.subr.bf16.mxu0 0
    %785 = vmatpush1.bf16.xpose.msra.mxu0 0
    %786 = vmatprep.subr.bf16.mxu0 0
    %787 = vmatpush1.bf16.xpose.msra.mxu0 0
    %788 = vmatprep.subr.bf16.mxu0 0
    %789 = vmatpush1.bf16.xpose.msra.mxu0 0
    %790 = vmatprep.subr.bf16.mxu0 0
    %791 = vmatpush1.bf16.xpose.msra.mxu0 0
    %792 = vmatprep.subr.bf16.mxu0 0
    %793 = vmatpush1.bf16.xpose.msra.mxu0 0
    %794 = vmatprep.subr.bf16.mxu0 0
    %795 = vmatpush1.bf16.xpose.msra.mxu0 0
    %796 = vmatprep.subr.bf16.mxu0 0
    %797 = vmatpush1.bf16.xpose.msra.mxu0 0
    %798 = vmatprep.subr.bf16.mxu0 0
    %799 = vmatpush1.bf16.xpose.msra.mxu0 0
    %800 = vmatprep.subr.bf16.mxu0 0
    %801 = vmatpush1.bf16.xpose.msra.mxu0 0
    %802 = vmatprep.subr.bf16.mxu0 0
    %803 = vmatpush1.bf16.xpose.msra.mxu0 0
    %804 = vmatprep.subr.bf16.mxu0 0
    %805 = vmatpush1.bf16.xpose.msra.mxu0 0
    %806 = vmatprep.subr.bf16.mxu0 0
    %807 = vmatpush1.bf16.xpose.msra.mxu0 0
    %808 = vmatprep.subr.bf16.mxu0 0
    %809 = vmatpush1.bf16.xpose.msra.mxu0 0
    %810 = vmatprep.subr.bf16.mxu0 0
    %811 = vmatpush1.bf16.xpose.msra.mxu0 0
    %812 = vmatprep.mubr.bf16.mxu0 0
    %813 = vmatmul.mubr.bf16.gmra.mrb[0].mxu0 %v775
    %v814 = vpop.f32.mrb[0].mxu0
    %v815 = vadd.f32 0.0, %v814
    %v816 = vpop.f32.mrb[0].mxu0
    %v817 = vpop.f32.mrb[0].mxu0
    %v818 = vpop.f32.mrb[0].mxu0
    %819 = vdwg.mxu0
    %v821 = vsel %vm290, %v767, 0
    %v824 = vsel %vm290, %v771, 0
    %826 = vmatprep.subr.bf16.mxu0 0
    %827 = vmatpush1.bf16.xpose.msra.mxu0 %v824
    %828 = vmatprep.subr.bf16.mxu0 0
    %829 = vmatpush1.bf16.xpose.msra.mxu0 0
    %830 = vmatprep.subr.bf16.mxu0 0
    %831 = vmatpush1.bf16.xpose.msra.mxu0 0
    %832 = vmatprep.subr.bf16.mxu0 0
    %833 = vmatpush1.bf16.xpose.msra.mxu0 0
    %834 = vmatprep.subr.bf16.mxu0 0
    %835 = vmatpush1.bf16.xpose.msra.mxu0 0
    %836 = vmatprep.subr.bf16.mxu0 0
    %837 = vmatpush1.bf16.xpose.msra.mxu0 0
    %838 = vmatprep.subr.bf16.mxu0 0
    %839 = vmatpush1.bf16.xpose.msra.mxu0 0
    %840 = vmatprep.subr.bf16.mxu0 0
    %841 = vmatpush1.bf16.xpose.msra.mxu0 0
    %842 = vmatprep.subr.bf16.mxu0 0
    %843 = vmatpush1.bf16.xpose.msra.mxu0 0
    %844 = vmatprep.subr.bf16.mxu0 0
    %845 = vmatpush1.bf16.xpose.msra.mxu0 0
    %846 = vmatprep.subr.bf16.mxu0 0
    %847 = vmatpush1.bf16.xpose.msra.mxu0 0
    %848 = vmatprep.subr.bf16.mxu0 0
    %849 = vmatpush1.bf16.xpose.msra.mxu0 0
    %850 = vmatprep.subr.bf16.mxu0 0
    %851 = vmatpush1.bf16.xpose.msra.mxu0 0
    %852 = vmatprep.subr.bf16.mxu0 0
    %853 = vmatpush1.bf16.xpose.msra.mxu0 0
    %854 = vmatprep.subr.bf16.mxu0 0
    %855 = vmatpush1.bf16.xpose.msra.mxu0 0
    %856 = vmatprep.subr.bf16.mxu0 0
    %857 = vmatpush1.bf16.xpose.msra.mxu0 0
    %858 = vmatprep.mubr.bf16.mxu0 0
    %859 = vmatmul.mubr.bf16.gmra.mrb[0].mxu0 %v821
    %v860 = vpop.f32.mrb[0].mxu0
    %v861 = vadd.f32 0.0, %v860
    %v862 = vpop.f32.mrb[0].mxu0
    %v863 = vpop.f32.mrb[0].mxu0
    %v864 = vpop.f32.mrb[0].mxu0
    %865 = vdwg.mxu0
    %v867 = vsel %vm290, %v768, 0
    %v870 = vsel %vm290, %v772, 0
    %872 = vmatprep.subr.bf16.mxu0 0
    %873 = vmatpush1.bf16.xpose.msra.mxu0 %v870
    %874 = vmatprep.subr.bf16.mxu0 0
    %875 = vmatpush1.bf16.xpose.msra.mxu0 0
    %876 = vmatprep.subr.bf16.mxu0 0
    %877 = vmatpush1.bf16.xpose.msra.mxu0 0
    %878 = vmatprep.subr.bf16.mxu0 0
    %879 = vmatpush1.bf16.xpose.msra.mxu0 0
    %880 = vmatprep.subr.bf16.mxu0 0
    %881 = vmatpush1.bf16.xpose.msra.mxu0 0
    %882 = vmatprep.subr.bf16.mxu0 0
    %883 = vmatpush1.bf16.xpose.msra.mxu0 0
    %884 = vmatprep.subr.bf16.mxu0 0
    %885 = vmatpush1.bf16.xpose.msra.mxu0 0
    %886 = vmatprep.subr.bf16.mxu0 0
    %887 = vmatpush1.bf16.xpose.msra.mxu0 0
    %888 = vmatprep.subr.bf16.mxu0 0
    %889 = vmatpush1.bf16.xpose.msra.mxu0 0
    %890 = vmatprep.subr.bf16.mxu0 0
    %891 = vmatpush1.bf16.xpose.msra.mxu0 0
    %892 = vmatprep.subr.bf16.mxu0 0
    %893 = vmatpush1.bf16.xpose.msra.mxu0 0
    %894 = vmatprep.subr.bf16.mxu0 0
    %895 = vmatpush1.bf16.xpose.msra.mxu0 0
    %896 = vmatprep.subr.bf16.mxu0 0
    %897 = vmatpush1.bf16.xpose.msra.mxu0 0
    %898 = vmatprep.subr.bf16.mxu0 0
    %899 = vmatpush1.bf16.xpose.msra.mxu0 0
    %900 = vmatprep.subr.bf16.mxu0 0
    %901 = vmatpush1.bf16.xpose.msra.mxu0 0
    %902 = vmatprep.subr.bf16.mxu0 0
    %903 = vmatpush1.bf16.xpose.msra.mxu0 0
    %904 = vmatprep.mubr.bf16.mxu0 0
    %905 = vmatmul.mubr.bf16.gmra.mrb[0].mxu0 %v867
    %v906 = vpop.f32.mrb[0].mxu0
    %v907 = vadd.f32 0.0, %v906
    %v908 = vpop.f32.mrb[0].mxu0
    %v909 = vpop.f32.mrb[0].mxu0
    %v910 = vpop.f32.mrb[0].mxu0
    %911 = vdwg.mxu0
    %v913 = vsel %vm290, %v769, 0
    %v916 = vsel %vm290, %v773, 0
    %918 = vmatprep.subr.bf16.mxu0 0
    %919 = vmatpush1.bf16.xpose.msra.mxu0 %v916
    %920 = vmatprep.subr.bf16.mxu0 0
    %921 = vmatpush1.bf16.xpose.msra.mxu0 0
    %922 = vmatprep.subr.bf16.mxu0 0
    %923 = vmatpush1.bf16.xpose.msra.mxu0 0
    %924 = vmatprep.subr.bf16.mxu0 0
    %925 = vmatpush1.bf16.xpose.msra.mxu0 0
    %926 = vmatprep.subr.bf16.mxu0 0
    %927 = vmatpush1.bf16.xpose.msra.mxu0 0
    %928 = vmatprep.subr.bf16.mxu0 0
    %929 = vmatpush1.bf16.xpose.msra.mxu0 0
    %930 = vmatprep.subr.bf16.mxu0 0
    %931 = vmatpush1.bf16.xpose.msra.mxu0 0
    %932 = vmatprep.subr.bf16.mxu0 0
    %933 = vmatpush1.bf16.xpose.msra.mxu0 0
    %934 = vmatprep.subr.bf16.mxu0 0
    %935 = vmatpush1.bf16.xpose.msra.mxu0 0
    %936 = vmatprep.subr.bf16.mxu0 0
    %937 = vmatpush1.bf16.xpose.msra.mxu0 0
    %938 = vmatprep.subr.bf16.mxu0 0
    %939 = vmatpush1.bf16.xpose.msra.mxu0 0
    %940 = vmatprep.subr.bf16.mxu0 0
    %941 = vmatpush1.bf16.xpose.msra.mxu0 0
    %942 = vmatprep.subr.bf16.mxu0 0
    %943 = vmatpush1.bf16.xpose.msra.mxu0 0
    %944 = vmatprep.subr.bf16.mxu0 0
    %945 = vmatpush1.bf16.xpose.msra.mxu0 0
    %946 = vmatprep.subr.bf16.mxu0 0
    %947 = vmatpush1.bf16.xpose.msra.mxu0 0
    %948 = vmatprep.subr.bf16.mxu0 0
    %949 = vmatpush1.bf16.xpose.msra.mxu0 0
    %950 = vmatprep.mubr.bf16.mxu0 0
    %951 = vmatmul.mubr.bf16.gmra.mrb[0].mxu0 %v913
    %v952 = vpop.f32.mrb[0].mxu0
    %v953 = vadd.f32 0.0, %v952
    %v954 = vpop.f32.mrb[0].mxu0
    %v955 = vpop.f32.mrb[0].mxu0
    %v956 = vpop.f32.mrb[0].mxu0
    %957 = vdwg.mxu0
    %v958 = vsel %vm475, %v815, -inf
    %959 = vmax.xlane.f32.xlu0 %v958
    %v960 = vpop.xlane.xlu0 %959
    %v961 = vsel %vm475, %v861, -inf
    %962 = vmax.xlane.f32.xlu0 %v961
    %v963 = vpop.xlane.xlu0 %962
    %v964 = vsel %vm475, %v907, -inf
    %965 = vmax.xlane.f32.xlu0 %v964
    %v966 = vpop.xlane.xlu0 %965
    %v967 = vsel %vm475, %v953, -inf
    %968 = vmax.xlane.f32.xlu0 %v967
    %v969 = vpop.xlane.xlu0 %968
    %v970 = vsub.f32 %v815, %v960
    %v971 = vsub.f32 %v861, %v963
    %v972 = vsub.f32 %v907, %v966
    %v973 = vsub.f32 %v953, %v969
    %v974 = vmul.f32 %v970, 1.442695
    %v975 = vpow.pop %v974
    %v976 = vmul.f32 %v971, 1.442695
    %v977 = vpow.pop %v976
    %v978 = vmul.f32 %v972, 1.442695
    %v979 = vpow.pop %v978
    %v980 = vmul.f32 %v973, 1.442695
    %v981 = vpow.pop %v980
    %v982 = vsel %vm475, %v975, 0.0
    %983 = vadd.xlane.f32.xlu0 %v982
    %v984 = vpop.xlane.xlu0 %983
    %v985 = vsel %vm475, %v977, 0.0
    %986 = vadd.xlane.f32.xlu0 %v985
    %v987 = vpop.xlane.xlu0 %986
    %v988 = vsel %vm475, %v979, 0.0
    %989 = vadd.xlane.f32.xlu0 %v988
    %v990 = vpop.xlane.xlu0 %989
    %v991 = vsel %vm475, %v981, 0.0
    %992 = vadd.xlane.f32.xlu0 %v991
    %v993 = vpop.xlane.xlu0 %992
    %v994 = vrcp.pop %v984
    %v995 = vmul.f32 %v975, %v994
    %v996 = vrcp.pop %v987
    %v997 = vmul.f32 %v977, %v996
    %v998 = vrcp.pop %v990
    %v999 = vmul.f32 %v979, %v998
    %v1000 = vrcp.pop %v993
    %v1001 = vmul.f32 %v981, %v1000
    %v1002 = vpack.c.bf16 %v995, %v995
    %v1003 = vpack.c.bf16 %v997, %v997
    %v1004 = vpack.c.bf16 %v999, %v999
    %v1005 = vpack.c.bf16 %v1001, %v1001
    %v1006 = vpack.c.bf16 %v227, %v224
    %v1007 = vpack.c.bf16 %v751, %v749
    %v1008 = vpack.c.bf16 %v757, %v755
    %v1009 = vpack.c.bf16 %v763, %v761
    %v1011 = vsel %vm475, %v1002, 0
    %1013 = vmatprep.subr.bf16.mxu0 0
    %1014 = vmatpush1.bf16.msra.mxu0 %v1006
    %1015 = vmatprep.subr.bf16.mxu0 0
    %1016 = vmatpush1.bf16.msra.mxu0 0
    %1017 = vmatprep.subr.bf16.mxu0 0
    %1018 = vmatpush1.bf16.msra.mxu0 0
    %1019 = vmatprep.subr.bf16.mxu0 0
    %1020 = vmatpush1.bf16.msra.mxu0 0
    %1021 = vmatprep.subr.bf16.mxu0 0
    %1022 = vmatpush1.bf16.msra.mxu0 0
    %1023 = vmatprep.subr.bf16.mxu0 0
    %1024 = vmatpush1.bf16.msra.mxu0 0
    %1025 = vmatprep.subr.bf16.mxu0 0
    %1026 = vmatpush1.bf16.msra.mxu0 0
    %1027 = vmatprep.subr.bf16.mxu0 0
    %1028 = vmatpush1.bf16.msra.mxu0 0
    %1029 = vmatprep.subr.bf16.mxu0 0
    %1030 = vmatpush1.bf16.msra.mxu0 0
    %1031 = vmatprep.subr.bf16.mxu0 0
    %1032 = vmatpush1.bf16.msra.mxu0 0
    %1033 = vmatprep.subr.bf16.mxu0 0
    %1034 = vmatpush1.bf16.msra.mxu0 0
    %1035 = vmatprep.subr.bf16.mxu0 0
    %1036 = vmatpush1.bf16.msra.mxu0 0
    %1037 = vmatprep.subr.bf16.mxu0 0
    %1038 = vmatpush1.bf16.msra.mxu0 0
    %1039 = vmatprep.subr.bf16.mxu0 0
    %1040 = vmatpush1.bf16.msra.mxu0 0
    %1041 = vmatprep.subr.bf16.mxu0 0
    %1042 = vmatpush1.bf16.msra.mxu0 0
    %1043 = vmatprep.subr.bf16.mxu0 0
    %1044 = vmatpush1.bf16.msra.mxu0 0
    %1045 = vmatprep.mubr.bf16.mxu0 0
    %1046 = vmatmul.mubr.bf16.gmra.mrb[0].mxu0 %v1011
    %v1047 = vpop.f32.mrb[0].mxu0
    %v1048 = vadd.f32 0.0, %v1047
    %v1049 = vpop.f32.mrb[0].mxu0
    %v1050 = vpop.f32.mrb[0].mxu0
    %v1051 = vpop.f32.mrb[0].mxu0
    %1052 = vdwg.mxu0
    %v1054 = vsel %vm475, %v1003, 0
    %1056 = vmatprep.subr.bf16.mxu0 0
    %1057 = vmatpush1.bf16.msra.mxu0 %v1007
    %1058 = vmatprep.subr.bf16.mxu0 0
    %1059 = vmatpush1.bf16.msra.mxu0 0
    %1060 = vmatprep.subr.bf16.mxu0 0
    %1061 = vmatpush1.bf16.msra.mxu0 0
    %1062 = vmatprep.subr.bf16.mxu0 0
    %1063 = vmatpush1.bf16.msra.mxu0 0
    %1064 = vmatprep.subr.bf16.mxu0 0
    %1065 = vmatpush1.bf16.msra.mxu0 0
    %1066 = vmatprep.subr.bf16.mxu0 0
    %1067 = vmatpush1.bf16.msra.mxu0 0
    %1068 = vmatprep.subr.bf16.mxu0 0
    %1069 = vmatpush1.bf16.msra.mxu0 0
    %1070 = vmatprep.subr.bf16.mxu0 0
    %1071 = vmatpush1.bf16.msra.mxu0 0
    %1072 = vmatprep.subr.bf16.mxu0 0
    %1073 = vmatpush1.bf16.msra.mxu0 0
    %1074 = vmatprep.subr.bf16.mxu0 0
    %1075 = vmatpush1.bf16.msra.mxu0 0
    %1076 = vmatprep.subr.bf16.mxu0 0
    %1077 = vmatpush1.bf16.msra.mxu0 0
    %1078 = vmatprep.subr.bf16.mxu0 0
    %1079 = vmatpush1.bf16.msra.mxu0 0
    %1080 = vmatprep.subr.bf16.mxu0 0
    %1081 = vmatpush1.bf16.msra.mxu0 0
    %1082 = vmatprep.subr.bf16.mxu0 0
    %1083 = vmatpush1.bf16.msra.mxu0 0
    %1084 = vmatprep.subr.bf16.mxu0 0
    %1085 = vmatpush1.bf16.msra.mxu0 0
    %1086 = vmatprep.subr.bf16.mxu0 0
    %1087 = vmatpush1.bf16.msra.mxu0 0
    %1088 = vmatprep.mubr.bf16.mxu0 0
    %1089 = vmatmul.mubr.bf16.gmra.mrb[0].mxu0 %v1054
    %v1090 = vpop.f32.mrb[0].mxu0
    %v1091 = vadd.f32 0.0, %v1090
    %v1092 = vpop.f32.mrb[0].mxu0
    %v1093 = vpop.f32.mrb[0].mxu0
    %v1094 = vpop.f32.mrb[0].mxu0
    %1095 = vdwg.mxu0
    %v1097 = vsel %vm475, %v1004, 0
    %1099 = vmatprep.subr.bf16.mxu0 0
    %1100 = vmatpush1.bf16.msra.mxu0 %v1008
    %1101 = vmatprep.subr.bf16.mxu0 0
    %1102 = vmatpush1.bf16.msra.mxu0 0
    %1103 = vmatprep.subr.bf16.mxu0 0
    %1104 = vmatpush1.bf16.msra.mxu0 0
    %1105 = vmatprep.subr.bf16.mxu0 0
    %1106 = vmatpush1.bf16.msra.mxu0 0
    %1107 = vmatprep.subr.bf16.mxu0 0
    %1108 = vmatpush1.bf16.msra.mxu0 0
    %1109 = vmatprep.subr.bf16.mxu0 0
    %1110 = vmatpush1.bf16.msra.mxu0 0
    %1111 = vmatprep.subr.bf16.mxu0 0
    %1112 = vmatpush1.bf16.msra.mxu0 0
    %1113 = vmatprep.subr.bf16.mxu0 0
    %1114 = vmatpush1.bf16.msra.mxu0 0
    %1115 = vmatprep.subr.bf16.mxu0 0
    %1116 = vmatpush1.bf16.msra.mxu0 0
    %1117 = vmatprep.subr.bf16.mxu0 0
    %1118 = vmatpush1.bf16.msra.mxu0 0
    %1119 = vmatprep.subr.bf16.mxu0 0
    %1120 = vmatpush1.bf16.msra.mxu0 0
    %1121 = vmatprep.subr.bf16.mxu0 0
    %1122 = vmatpush1.bf16.msra.mxu0 0
    %1123 = vmatprep.subr.bf16.mxu0 0
    %1124 = vmatpush1.bf16.msra.mxu0 0
    %1125 = vmatprep.subr.bf16.mxu0 0
    %1126 = vmatpush1.bf16.msra.mxu0 0
    %1127 = vmatprep.subr.bf16.mxu0 0
    %1128 = vmatpush1.bf16.msra.mxu0 0
    %1129 = vmatprep.subr.bf16.mxu0 0
    %1130 = vmatpush1.bf16.msra.mxu0 0
    %1131 = vmatprep.mubr.bf16.mxu0 0
    %1132 = vmatmul.mubr.bf16.gmra.mrb[0].mxu0 %v1097
    %v1133 = vpop.f32.mrb[0].mxu0
    %v1134 = vadd.f32 0.0, %v1133
    %v1135 = vpop.f32.mrb[0].mxu0
    %v1136 = vpop.f32.mrb[0].mxu0
    %v1137 = vpop.f32.mrb[0].mxu0
    %1138 = vdwg.mxu0
    %v1140 = vsel %vm475, %v1005, 0
    %1142 = vmatprep.subr.bf16.mxu0 0
    %1143 = vmatpush1.bf16.msra.mxu0 %v1009
    %1144 = vmatprep.subr.bf16.mxu0 0
    %1145 = vmatpush1.bf16.msra.mxu0 0
    %1146 = vmatprep.subr.bf16.mxu0 0
    %1147 = vmatpush1.bf16.msra.mxu0 0
    %1148 = vmatprep.subr.bf16.mxu0 0
    %1149 = vmatpush1.bf16.msra.mxu0 0
    %1150 = vmatprep.subr.bf16.mxu0 0
    %1151 = vmatpush1.bf16.msra.mxu0 0
    %1152 = vmatprep.subr.bf16.mxu0 0
    %1153 = vmatpush1.bf16.msra.mxu0 0
    %1154 = vmatprep.subr.bf16.mxu0 0
    %1155 = vmatpush1.bf16.msra.mxu0 0
    %1156 = vmatprep.subr.bf16.mxu0 0
    %1157 = vmatpush1.bf16.msra.mxu0 0
    %1158 = vmatprep.subr.bf16.mxu0 0
    %1159 = vmatpush1.bf16.msra.mxu0 0
    %1160 = vmatprep.subr.bf16.mxu0 0
    %1161 = vmatpush1.bf16.msra.mxu0 0
    %1162 = vmatprep.subr.bf16.mxu0 0
    %1163 = vmatpush1.bf16.msra.mxu0 0
    %1164 = vmatprep.subr.bf16.mxu0 0
    %1165 = vmatpush1.bf16.msra.mxu0 0
    %1166 = vmatprep.subr.bf16.mxu0 0
    %1167 = vmatpush1.bf16.msra.mxu0 0
    %1168 = vmatprep.subr.bf16.mxu0 0
    %1169 = vmatpush1.bf16.msra.mxu0 0
    %1170 = vmatprep.subr.bf16.mxu0 0
    %1171 = vmatpush1.bf16.msra.mxu0 0
    %1172 = vmatprep.subr.bf16.mxu0 0
    %1173 = vmatpush1.bf16.msra.mxu0 0
    %1174 = vmatprep.mubr.bf16.mxu0 0
    %1175 = vmatmul.mubr.bf16.gmra.mrb[0].mxu0 %v1140
    %v1176 = vpop.f32.mrb[0].mxu0
    %v1177 = vadd.f32 0.0, %v1176
    %v1178 = vpop.f32.mrb[0].mxu0
    %v1179 = vpop.f32.mrb[0].mxu0
    %v1180 = vpop.f32.mrb[0].mxu0
    %1181 = vdwg.mxu0
    %1183 = vrot.lane.b32.xlu0 %v1091, 8
    %v1184 = vpop.permute.xlu0 %1183
    %1187 = vrot.lane.b32.xlu0 %v1134, 16
    %v1188 = vpop.permute.xlu0 %1187
    %1191 = vrot.lane.b32.xlu0 %v1177, 24
    %v1192 = vpop.permute.xlu0 %1191
    %v1194 = vsel %vm290, %v1048, %v1184
    %v1195 = vsel %vm475, %v1194, %v1188
    %v1196 = vsel %vm714, %v1195, %v1192
    %v1197 = vpack.c.bf16 %v1196, %v715
    %v1198 = vpack.c.bf16 %v38, %v37
    %v1199 = vpack.c.bf16 %v40, %v39
    %v1200 = vlaneseq
    %v1201 = vshrl.u32 %v1200, 7
    %v1202 = vsub.s32 3, %v1201
    %v1203 = vrot.slane %v41, %v1202
    %v1205 = vsel %vm51, %v1197, 0
    %v1208 = vsel %vm51, %v1198, 0
    %v1211 = vsel %vm51, %v1199, 0
    %1213 = vmatprep.subr.bf16.mxu0 0
    %1214 = vmatpush1.bf16.xpose.msra.mxu0 %v1208
    %1215 = vmatprep.subr.bf16.mxu0 0
    %1216 = vmatpush1.bf16.xpose.msra.mxu0 %v1211
    %1217 = vmatprep.subr.bf16.mxu0 0
    %1218 = vmatpush1.bf16.xpose.msra.mxu0 0
    %1219 = vmatprep.subr.bf16.mxu0 0
    %1220 = vmatpush1.bf16.xpose.msra.mxu0 0
    %1221 = vmatprep.subr.bf16.mxu0 0
    %1222 = vmatpush1.bf16.xpose.msra.mxu0 0
    %1223 = vmatprep.subr.bf16.mxu0 0
    %1224 = vmatpush1.bf16.xpose.msra.mxu0 0
    %1225 = vmatprep.subr.bf16.mxu0 0
    %1226 = vmatpush1.bf16.xpose.msra.mxu0 0
    %1227 = vmatprep.subr.bf16.mxu0 0
    %1228 = vmatpush1.bf16.xpose.msra.mxu0 0
    %1229 = vmatprep.subr.bf16.mxu0 0
    %1230 = vmatpush1.bf16.xpose.msra.mxu0 0
    %1231 = vmatprep.subr.bf16.mxu0 0
    %1232 = vmatpush1.bf16.xpose.msra.mxu0 0
    %1233 = vmatprep.subr.bf16.mxu0 0
    %1234 = vmatpush1.bf16.xpose.msra.mxu0 0
    %1235 = vmatprep.subr.bf16.mxu0 0
    %1236 = vmatpush1.bf16.xpose.msra.mxu0 0
    %1237 = vmatprep.subr.bf16.mxu0 0
    %1238 = vmatpush1.bf16.xpose.msra.mxu0 0
    %1239 = vmatprep.subr.bf16.mxu0 0
    %1240 = vmatpush1.bf16.xpose.msra.mxu0 0
    %1241 = vmatprep.subr.bf16.mxu0 0
    %1242 = vmatpush1.bf16.xpose.msra.mxu0 0
    %1243 = vmatprep.subr.bf16.mxu0 0
    %1244 = vmatpush1.bf16.xpose.msra.mxu0 0
    %1245 = vmatprep.mubr.bf16.mxu0 0
    %1246 = vmatmul.mubr.bf16.gmra.mrb[0].mxu0 %v1205
    %v1247 = vpop.f32.mrb[0].mxu0
    %v1248 = vadd.f32 %v1203, %v1247
    %v1249 = vpop.f32.mrb[0].mxu0
    %v1250 = vpop.f32.mrb[0].mxu0
    %v1251 = vadd.f32 %v1203, %v1250
    %v1252 = vpop.f32.mrb[0].mxu0
    %1253 = vdwg.mxu0
    %s1254 = scalar_lea.vmem %s2, 128
    %v1255 = vld [vmem:[%s1254] sm:$0xff]
    %v1256 = vld [vmem:[%s1254 + $0x8] sm:$0xff]
    %v1257 = vld [vmem:[%s1254 + $0x10] sm:$0xff]
    %v1258 = vld [vmem:[%s1254 + $0x18] sm:$0xff]
    %v1259 = vld [vmem:[%s1254 + $0x20] sm:$0xff]
    %v1260 = vld [vmem:[%s1254 + $0x28] sm:$0xff]
    %v1261 = vld [vmem:[%s1254 + $0x30] sm:$0xff]
    %v1262 = vld [vmem:[%s1254 + $0x38] sm:$0xff]
    %v1263 = vld [vmem:[%s1254 + $0x40] sm:$0xff]
    %v1264 = vld [vmem:[%s1254 + $0x48] sm:$0xff]
    %v1265 = vld [vmem:[%s1254 + $0x50] sm:$0xff]
    %v1266 = vld [vmem:[%s1254 + $0x58] sm:$0xff]
    %v1267 = vld [vmem:[%s1254 + $0x60] sm:$0xff]
    %v1268 = vld [vmem:[%s1254 + $0x68] sm:$0xff]
    %v1269 = vld [vmem:[%s1254 + $0x70] sm:$0xff]
    %v1270 = vld [vmem:[%s1254 + $0x78] sm:$0xff]
    %s1271 = scalar_lea.vmem %s3, 4
    %v1272 = vld [vmem:[%s1271] sm:$0xf]
    %v1273 = vpack.c.bf16 %v1256, %v1255
    %v1274 = vpack.c.bf16 %v1258, %v1257
    %v1275 = vlaneseq
    %v1276 = vshrl.u32 %v1275, 7
    %v1277 = vsub.s32 0, %v1276
    %v1278 = vrot.slane %v1272, %v1277
    %v1280 = vsel %vm51, %v1273, 0
    %v1283 = vsel %vm51, %v1274, 0
    %1285 = vmatprep.subr.bf16.mxu0 0
    %1286 = vmatpush1.bf16.xpose.msra.mxu0 %v1280
    %1287 = vmatprep.subr.bf16.mxu0 0
    %1288 = vmatpush1.bf16.xpose.msra.mxu0 %v1283
    %1289 = vmatprep.subr.bf16.mxu0 0
    %1290 = vmatpush1.bf16.xpose.msra.mxu0 0
    %1291 = vmatprep.subr.bf16.mxu0 0
    %1292 = vmatpush1.bf16.xpose.msra.mxu0 0
    %1293 = vmatprep.subr.bf16.mxu0 0
    %1294 = vmatpush1.bf16.xpose.msra.mxu0 0
    %1295 = vmatprep.subr.bf16.mxu0 0
    %1296 = vmatpush1.bf16.xpose.msra.mxu0 0
    %1297 = vmatprep.subr.bf16.mxu0 0
    %1298 = vmatpush1.bf16.xpose.msra.mxu0 0
    %1299 = vmatprep.subr.bf16.mxu0 0
    %1300 = vmatpush1.bf16.xpose.msra.mxu0 0
    %1301 = vmatprep.subr.bf16.mxu0 0
    %1302 = vmatpush1.bf16.xpose.msra.mxu0 0
    %1303 = vmatprep.subr.bf16.mxu0 0
    %1304 = vmatpush1.bf16.xpose.msra.mxu0 0
    %1305 = vmatprep.subr.bf16.mxu0 0
    %1306 = vmatpush1.bf16.xpose.msra.mxu0 0
    %1307 = vmatprep.subr.bf16.mxu0 0
    %1308 = vmatpush1.bf16.xpose.msra.mxu0 0
    %1309 = vmatprep.subr.bf16.mxu0 0
    %1310 = vmatpush1.bf16.xpose.msra.mxu0 0
    %1311 = vmatprep.subr.bf16.mxu0 0
    %1312 = vmatpush1.bf16.xpose.msra.mxu0 0
    %1313 = vmatprep.subr.bf16.mxu0 0
    %1314 = vmatpush1.bf16.xpose.msra.mxu0 0
    %1315 = vmatprep.subr.bf16.mxu0 0
    %1316 = vmatpush1.bf16.xpose.msra.mxu0 0
    %1317 = vmatprep.mubr.bf16.mxu0 0
    %1318 = vmatmul.mubr.bf16.gmra.mrb[0].mxu0 %v109
    %v1319 = vpop.f32.mrb[0].mxu0
    %v1320 = vadd.f32 %v1278, %v1319
    %v1321 = vpop.f32.mrb[0].mxu0
    %v1322 = vpop.f32.mrb[0].mxu0
    %v1323 = vadd.f32 %v1278, %v1322
    %v1324 = vpop.f32.mrb[0].mxu0
    %1325 = vmatprep.mubr.bf16.mxu0 0
    %1326 = vmatmul.mubr.bf16.gmra.mrb[0].mxu0 %v112
    %v1327 = vpop.f32.mrb[0].mxu0
    %v1328 = vadd.f32 %v1278, %v1327
    %v1329 = vpop.f32.mrb[0].mxu0
    %v1330 = vpop.f32.mrb[0].mxu0
    %v1331 = vadd.f32 %v1278, %v1330
    %v1332 = vpop.f32.mrb[0].mxu0
    %1333 = vdwg.mxu0
    %v1334 = vpack.c.bf16 %v1260, %v1259
    %v1335 = vpack.c.bf16 %v1262, %v1261
    %v1336 = vlaneseq
    %v1337 = vshrl.u32 %v1336, 7
    %v1338 = vsub.s32 1, %v1337
    %v1339 = vrot.slane %v1272, %v1338
    %v1341 = vsel %vm51, %v1334, 0
    %v1344 = vsel %vm51, %v1335, 0
    %1346 = vmatprep.subr.bf16.mxu0 0
    %1347 = vmatpush1.bf16.xpose.msra.mxu0 %v1341
    %1348 = vmatprep.subr.bf16.mxu0 0
    %1349 = vmatpush1.bf16.xpose.msra.mxu0 %v1344
    %1350 = vmatprep.subr.bf16.mxu0 0
    %1351 = vmatpush1.bf16.xpose.msra.mxu0 0
    %1352 = vmatprep.subr.bf16.mxu0 0
    %1353 = vmatpush1.bf16.xpose.msra.mxu0 0
    %1354 = vmatprep.subr.bf16.mxu0 0
    %1355 = vmatpush1.bf16.xpose.msra.mxu0 0
    %1356 = vmatprep.subr.bf16.mxu0 0
    %1357 = vmatpush1.bf16.xpose.msra.mxu0 0
    %1358 = vmatprep.subr.bf16.mxu0 0
    %1359 = vmatpush1.bf16.xpose.msra.mxu0 0
    %1360 = vmatprep.subr.bf16.mxu0 0
    %1361 = vmatpush1.bf16.xpose.msra.mxu0 0
    %1362 = vmatprep.subr.bf16.mxu0 0
    %1363 = vmatpush1.bf16.xpose.msra.mxu0 0
    %1364 = vmatprep.subr.bf16.mxu0 0
    %1365 = vmatpush1.bf16.xpose.msra.mxu0 0
    %1366 = vmatprep.subr.bf16.mxu0 0
    %1367 = vmatpush1.bf16.xpose.msra.mxu0 0
    %1368 = vmatprep.subr.bf16.mxu0 0
    %1369 = vmatpush1.bf16.xpose.msra.mxu0 0
    %1370 = vmatprep.subr.bf16.mxu0 0
    %1371 = vmatpush1.bf16.xpose.msra.mxu0 0
    %1372 = vmatprep.subr.bf16.mxu0 0
    %1373 = vmatpush1.bf16.xpose.msra.mxu0 0
    %1374 = vmatprep.subr.bf16.mxu0 0
    %1375 = vmatpush1.bf16.xpose.msra.mxu0 0
    %1376 = vmatprep.subr.bf16.mxu0 0
    %1377 = vmatpush1.bf16.xpose.msra.mxu0 0
    %1378 = vmatprep.mubr.bf16.mxu0 0
    %1379 = vmatmul.mubr.bf16.gmra.mrb[0].mxu0 %v53
    %v1380 = vpop.f32.mrb[0].mxu0
    %v1381 = vadd.f32 %v1339, %v1380
    %v1382 = vpop.f32.mrb[0].mxu0
    %v1383 = vpop.f32.mrb[0].mxu0
    %v1384 = vadd.f32 %v1339, %v1383
    %v1385 = vpop.f32.mrb[0].mxu0
    %1386 = vdwg.mxu0
    %v1387 = vpack.c.bf16 %v1264, %v1263
    %v1388 = vpack.c.bf16 %v1266, %v1265
    %v1389 = vlaneseq
    %v1390 = vshrl.u32 %v1389, 7
    %v1391 = vsub.s32 2, %v1390
    %v1392 = vrot.slane %v1272, %v1391
    %v1394 = vsel %vm51, %v1387, 0
    %v1397 = vsel %vm51, %v1388, 0
    %1399 = vmatprep.subr.bf16.mxu0 0
    %1400 = vmatpush1.bf16.xpose.msra.mxu0 %v1394
    %1401 = vmatprep.subr.bf16.mxu0 0
    %1402 = vmatpush1.bf16.xpose.msra.mxu0 %v1397
    %1403 = vmatprep.subr.bf16.mxu0 0
    %1404 = vmatpush1.bf16.xpose.msra.mxu0 0
    %1405 = vmatprep.subr.bf16.mxu0 0
    %1406 = vmatpush1.bf16.xpose.msra.mxu0 0
    %1407 = vmatprep.subr.bf16.mxu0 0
    %1408 = vmatpush1.bf16.xpose.msra.mxu0 0
    %1409 = vmatprep.subr.bf16.mxu0 0
    %1410 = vmatpush1.bf16.xpose.msra.mxu0 0
    %1411 = vmatprep.subr.bf16.mxu0 0
    %1412 = vmatpush1.bf16.xpose.msra.mxu0 0
    %1413 = vmatprep.subr.bf16.mxu0 0
    %1414 = vmatpush1.bf16.xpose.msra.mxu0 0
    %1415 = vmatprep.subr.bf16.mxu0 0
    %1416 = vmatpush1.bf16.xpose.msra.mxu0 0
    %1417 = vmatprep.subr.bf16.mxu0 0
    %1418 = vmatpush1.bf16.xpose.msra.mxu0 0
    %1419 = vmatprep.subr.bf16.mxu0 0
    %1420 = vmatpush1.bf16.xpose.msra.mxu0 0
    %1421 = vmatprep.subr.bf16.mxu0 0
    %1422 = vmatpush1.bf16.xpose.msra.mxu0 0
    %1423 = vmatprep.subr.bf16.mxu0 0
    %1424 = vmatpush1.bf16.xpose.msra.mxu0 0
    %1425 = vmatprep.subr.bf16.mxu0 0
    %1426 = vmatpush1.bf16.xpose.msra.mxu0 0
    %1427 = vmatprep.subr.bf16.mxu0 0
    %1428 = vmatpush1.bf16.xpose.msra.mxu0 0
    %1429 = vmatprep.subr.bf16.mxu0 0
    %1430 = vmatpush1.bf16.xpose.msra.mxu0 0
    %1431 = vmatprep.mubr.bf16.mxu0 0
    %1432 = vmatmul.mubr.bf16.gmra.mrb[0].mxu0 %v53
    %v1433 = vpop.f32.mrb[0].mxu0
    %v1434 = vadd.f32 %v1392, %v1433
    %v1435 = vpop.f32.mrb[0].mxu0
    %v1436 = vpop.f32.mrb[0].mxu0
    %v1437 = vadd.f32 %v1392, %v1436
    %v1438 = vpop.f32.mrb[0].mxu0
    %1439 = vdwg.mxu0
    %v1440 = vmul.f32 %v1320, 0.35355338
    %v1441 = vmul.f32 %v1323, 0.35355338
    %v1442 = vmul.f32 %v1328, 0.35355338
    %v1443 = vmul.f32 %v1331, 0.35355338
    %1446 = vrot.lane.b32.xlu0 %v1440, 120
    %v1447 = vpop.permute.xlu0 %1446
    %1448 = vrot.lane.b32.xlu0 %v1441, 120
    %v1449 = vpop.permute.xlu0 %1448
    %1452 = vrot.lane.b32.xlu0 %v1440, 112
    %v1453 = vpop.permute.xlu0 %1452
    %1454 = vrot.lane.b32.xlu0 %v1441, 112
    %v1455 = vpop.permute.xlu0 %1454
    %1458 = vrot.lane.b32.xlu0 %v1440, 104
    %v1459 = vpop.permute.xlu0 %1458
    %1460 = vrot.lane.b32.xlu0 %v1441, 104
    %v1461 = vpop.permute.xlu0 %1460
    %1465 = vrot.lane.b32.xlu0 %v1381, 120
    %v1466 = vpop.permute.xlu0 %1465
    %1468 = vrot.lane.b32.xlu0 %v1381, 112
    %v1469 = vpop.permute.xlu0 %1468
    %1471 = vrot.lane.b32.xlu0 %v1381, 104
    %v1472 = vpop.permute.xlu0 %1471
    %1475 = vrot.lane.b32.xlu0 %v1434, 120
    %v1476 = vpop.permute.xlu0 %1475
    %1478 = vrot.lane.b32.xlu0 %v1434, 112
    %v1479 = vpop.permute.xlu0 %1478
    %1481 = vrot.lane.b32.xlu0 %v1434, 104
    %v1482 = vpop.permute.xlu0 %1481
    %v1484 = vpack.c.bf16 %v1441, %v1440
    %v1485 = vpack.c.bf16 %v1449, %v1447
    %v1486 = vpack.c.bf16 %v1455, %v1453
    %v1487 = vpack.c.bf16 %v1461, %v1459
    %v1488 = vpack.c.bf16 %v1381, %v1381
    %v1489 = vpack.c.bf16 %v1466, %v1466
    %v1490 = vpack.c.bf16 %v1469, %v1469
    %v1491 = vpack.c.bf16 %v1472, %v1472
    %v1493 = vsel %vm290, %v1484, 0
    %v1496 = vsel %vm290, %v1488, 0
    %1498 = vmatprep.subr.bf16.mxu0 0
    %1499 = vmatpush1.bf16.xpose.msra.mxu0 %v1496
    %1500 = vmatprep.subr.bf16.mxu0 0
    %1501 = vmatpush1.bf16.xpose.msra.mxu0 0
    %1502 = vmatprep.subr.bf16.mxu0 0
    %1503 = vmatpush1.bf16.xpose.msra.mxu0 0
    %1504 = vmatprep.subr.bf16.mxu0 0
    %1505 = vmatpush1.bf16.xpose.msra.mxu0 0
    %1506 = vmatprep.subr.bf16.mxu0 0
    %1507 = vmatpush1.bf16.xpose.msra.mxu0 0
    %1508 = vmatprep.subr.bf16.mxu0 0
    %1509 = vmatpush1.bf16.xpose.msra.mxu0 0
    %1510 = vmatprep.subr.bf16.mxu0 0
    %1511 = vmatpush1.bf16.xpose.msra.mxu0 0
    %1512 = vmatprep.subr.bf16.mxu0 0
    %1513 = vmatpush1.bf16.xpose.msra.mxu0 0
    %1514 = vmatprep.subr.bf16.mxu0 0
    %1515 = vmatpush1.bf16.xpose.msra.mxu0 0
    %1516 = vmatprep.subr.bf16.mxu0 0
    %1517 = vmatpush1.bf16.xpose.msra.mxu0 0
    %1518 = vmatprep.subr.bf16.mxu0 0
    %1519 = vmatpush1.bf16.xpose.msra.mxu0 0
    %1520 = vmatprep.subr.bf16.mxu0 0
    %1521 = vmatpush1.bf16.xpose.msra.mxu0 0
    %1522 = vmatprep.subr.bf16.mxu0 0
    %1523 = vmatpush1.bf16.xpose.msra.mxu0 0
    %1524 = vmatprep.subr.bf16.mxu0 0
    %1525 = vmatpush1.bf16.xpose.msra.mxu0 0
    %1526 = vmatprep.subr.bf16.mxu0 0
    %1527 = vmatpush1.bf16.xpose.msra.mxu0 0
    %1528 = vmatprep.subr.bf16.mxu0 0
    %1529 = vmatpush1.bf16.xpose.msra.mxu0 0
    %1530 = vmatprep.mubr.bf16.mxu0 0
    %1531 = vmatmul.mubr.bf16.gmra.mrb[0].mxu0 %v1493
    %v1532 = vpop.f32.mrb[0].mxu0
    %v1533 = vadd.f32 0.0, %v1532
    %v1534 = vpop.f32.mrb[0].mxu0
    %v1535 = vpop.f32.mrb[0].mxu0
    %v1536 = vadd.f32 0.0, %v1535
    %v1537 = vpop.f32.mrb[0].mxu0
    %1538 = vdwg.mxu0
    %v1540 = vsel %vm290, %v1485, 0
    %v1543 = vsel %vm290, %v1489, 0
    %1545 = vmatprep.subr.bf16.mxu0 0
    %1546 = vmatpush1.bf16.xpose.msra.mxu0 %v1543
    %1547 = vmatprep.subr.bf16.mxu0 0
    %1548 = vmatpush1.bf16.xpose.msra.mxu0 0
    %1549 = vmatprep.subr.bf16.mxu0 0
    %1550 = vmatpush1.bf16.xpose.msra.mxu0 0
    %1551 = vmatprep.subr.bf16.mxu0 0
    %1552 = vmatpush1.bf16.xpose.msra.mxu0 0
    %1553 = vmatprep.subr.bf16.mxu0 0
    %1554 = vmatpush1.bf16.xpose.msra.mxu0 0
    %1555 = vmatprep.subr.bf16.mxu0 0
    %1556 = vmatpush1.bf16.xpose.msra.mxu0 0
    %1557 = vmatprep.subr.bf16.mxu0 0
    %1558 = vmatpush1.bf16.xpose.msra.mxu0 0
    %1559 = vmatprep.subr.bf16.mxu0 0
    %1560 = vmatpush1.bf16.xpose.msra.mxu0 0
    %1561 = vmatprep.subr.bf16.mxu0 0
    %1562 = vmatpush1.bf16.xpose.msra.mxu0 0
    %1563 = vmatprep.subr.bf16.mxu0 0
    %1564 = vmatpush1.bf16.xpose.msra.mxu0 0
    %1565 = vmatprep.subr.bf16.mxu0 0
    %1566 = vmatpush1.bf16.xpose.msra.mxu0 0
    %1567 = vmatprep.subr.bf16.mxu0 0
    %1568 = vmatpush1.bf16.xpose.msra.mxu0 0
    %1569 = vmatprep.subr.bf16.mxu0 0
    %1570 = vmatpush1.bf16.xpose.msra.mxu0 0
    %1571 = vmatprep.subr.bf16.mxu0 0
    %1572 = vmatpush1.bf16.xpose.msra.mxu0 0
    %1573 = vmatprep.subr.bf16.mxu0 0
    %1574 = vmatpush1.bf16.xpose.msra.mxu0 0
    %1575 = vmatprep.subr.bf16.mxu0 0
    %1576 = vmatpush1.bf16.xpose.msra.mxu0 0
    %1577 = vmatprep.mubr.bf16.mxu0 0
    %1578 = vmatmul.mubr.bf16.gmra.mrb[0].mxu0 %v1540
    %v1579 = vpop.f32.mrb[0].mxu0
    %v1580 = vadd.f32 0.0, %v1579
    %v1581 = vpop.f32.mrb[0].mxu0
    %v1582 = vpop.f32.mrb[0].mxu0
    %v1583 = vadd.f32 0.0, %v1582
    %v1584 = vpop.f32.mrb[0].mxu0
    %1585 = vdwg.mxu0
    %v1587 = vsel %vm290, %v1486, 0
    %v1590 = vsel %vm290, %v1490, 0
    %1592 = vmatprep.subr.bf16.mxu0 0
    %1593 = vmatpush1.bf16.xpose.msra.mxu0 %v1590
    %1594 = vmatprep.subr.bf16.mxu0 0
    %1595 = vmatpush1.bf16.xpose.msra.mxu0 0
    %1596 = vmatprep.subr.bf16.mxu0 0
    %1597 = vmatpush1.bf16.xpose.msra.mxu0 0
    %1598 = vmatprep.subr.bf16.mxu0 0
    %1599 = vmatpush1.bf16.xpose.msra.mxu0 0
    %1600 = vmatprep.subr.bf16.mxu0 0
    %1601 = vmatpush1.bf16.xpose.msra.mxu0 0
    %1602 = vmatprep.subr.bf16.mxu0 0
    %1603 = vmatpush1.bf16.xpose.msra.mxu0 0
    %1604 = vmatprep.subr.bf16.mxu0 0
    %1605 = vmatpush1.bf16.xpose.msra.mxu0 0
    %1606 = vmatprep.subr.bf16.mxu0 0
    %1607 = vmatpush1.bf16.xpose.msra.mxu0 0
    %1608 = vmatprep.subr.bf16.mxu0 0
    %1609 = vmatpush1.bf16.xpose.msra.mxu0 0
    %1610 = vmatprep.subr.bf16.mxu0 0
    %1611 = vmatpush1.bf16.xpose.msra.mxu0 0
    %1612 = vmatprep.subr.bf16.mxu0 0
    %1613 = vmatpush1.bf16.xpose.msra.mxu0 0
    %1614 = vmatprep.subr.bf16.mxu0 0
    %1615 = vmatpush1.bf16.xpose.msra.mxu0 0
    %1616 = vmatprep.subr.bf16.mxu0 0
    %1617 = vmatpush1.bf16.xpose.msra.mxu0 0
    %1618 = vmatprep.subr.bf16.mxu0 0
    %1619 = vmatpush1.bf16.xpose.msra.mxu0 0
    %1620 = vmatprep.subr.bf16.mxu0 0
    %1621 = vmatpush1.bf16.xpose.msra.mxu0 0
    %1622 = vmatprep.subr.bf16.mxu0 0
    %1623 = vmatpush1.bf16.xpose.msra.mxu0 0
    %1624 = vmatprep.mubr.bf16.mxu0 0
    %1625 = vmatmul.mubr.bf16.gmra.mrb[0].mxu0 %v1587
    %v1626 = vpop.f32.mrb[0].mxu0
    %v1627 = vadd.f32 0.0, %v1626
    %v1628 = vpop.f32.mrb[0].mxu0
    %v1629 = vpop.f32.mrb[0].mxu0
    %v1630 = vadd.f32 0.0, %v1629
    %v1631 = vpop.f32.mrb[0].mxu0
    %1632 = vdwg.mxu0
    %v1634 = vsel %vm290, %v1487, 0
    %v1637 = vsel %vm290, %v1491, 0
    %1639 = vmatprep.subr.bf16.mxu0 0
    %1640 = vmatpush1.bf16.xpose.msra.mxu0 %v1637
    %1641 = vmatprep.subr.bf16.mxu0 0
    %1642 = vmatpush1.bf16.xpose.msra.mxu0 0
    %1643 = vmatprep.subr.bf16.mxu0 0
    %1644 = vmatpush1.bf16.xpose.msra.mxu0 0
    %1645 = vmatprep.subr.bf16.mxu0 0
    %1646 = vmatpush1.bf16.xpose.msra.mxu0 0
    %1647 = vmatprep.subr.bf16.mxu0 0
    %1648 = vmatpush1.bf16.xpose.msra.mxu0 0
    %1649 = vmatprep.subr.bf16.mxu0 0
    %1650 = vmatpush1.bf16.xpose.msra.mxu0 0
    %1651 = vmatprep.subr.bf16.mxu0 0
    %1652 = vmatpush1.bf16.xpose.msra.mxu0 0
    %1653 = vmatprep.subr.bf16.mxu0 0
    %1654 = vmatpush1.bf16.xpose.msra.mxu0 0
    %1655 = vmatprep.subr.bf16.mxu0 0
    %1656 = vmatpush1.bf16.xpose.msra.mxu0 0
    %1657 = vmatprep.subr.bf16.mxu0 0
    %1658 = vmatpush1.bf16.xpose.msra.mxu0 0
    %1659 = vmatprep.subr.bf16.mxu0 0
    %1660 = vmatpush1.bf16.xpose.msra.mxu0 0
    %1661 = vmatprep.subr.bf16.mxu0 0
    %1662 = vmatpush1.bf16.xpose.msra.mxu0 0
    %1663 = vmatprep.subr.bf16.mxu0 0
    %1664 = vmatpush1.bf16.xpose.msra.mxu0 0
    %1665 = vmatprep.subr.bf16.mxu0 0
    %1666 = vmatpush1.bf16.xpose.msra.mxu0 0
    %1667 = vmatprep.subr.bf16.mxu0 0
    %1668 = vmatpush1.bf16.xpose.msra.mxu0 0
    %1669 = vmatprep.subr.bf16.mxu0 0
    %1670 = vmatpush1.bf16.xpose.msra.mxu0 0
    %1671 = vmatprep.mubr.bf16.mxu0 0
    %1672 = vmatmul.mubr.bf16.gmra.mrb[0].mxu0 %v1634
    %v1673 = vpop.f32.mrb[0].mxu0
    %v1674 = vadd.f32 0.0, %v1673
    %v1675 = vpop.f32.mrb[0].mxu0
    %v1676 = vpop.f32.mrb[0].mxu0
    %v1677 = vadd.f32 0.0, %v1676
    %v1678 = vpop.f32.mrb[0].mxu0
    %1679 = vdwg.mxu0
    %v1680 = vsel %vm290, %v1533, -inf
    %1681 = vmax.xlane.f32.xlu0 %v1680
    %v1682 = vpop.xlane.xlu0 %1681
    %v1683 = vsel %vm290, %v1536, -inf
    %1684 = vmax.xlane.f32.xlu0 %v1683
    %v1685 = vpop.xlane.xlu0 %1684
    %v1686 = vsel %vm290, %v1580, -inf
    %1687 = vmax.xlane.f32.xlu0 %v1686
    %v1688 = vpop.xlane.xlu0 %1687
    %v1689 = vsel %vm290, %v1583, -inf
    %1690 = vmax.xlane.f32.xlu0 %v1689
    %v1691 = vpop.xlane.xlu0 %1690
    %v1692 = vsel %vm290, %v1627, -inf
    %1693 = vmax.xlane.f32.xlu0 %v1692
    %v1694 = vpop.xlane.xlu0 %1693
    %v1695 = vsel %vm290, %v1630, -inf
    %1696 = vmax.xlane.f32.xlu0 %v1695
    %v1697 = vpop.xlane.xlu0 %1696
    %v1698 = vsel %vm290, %v1674, -inf
    %1699 = vmax.xlane.f32.xlu0 %v1698
    %v1700 = vpop.xlane.xlu0 %1699
    %v1701 = vsel %vm290, %v1677, -inf
    %1702 = vmax.xlane.f32.xlu0 %v1701
    %v1703 = vpop.xlane.xlu0 %1702
    %v1704 = vsub.f32 %v1533, %v1682
    %v1705 = vsub.f32 %v1536, %v1685
    %v1706 = vsub.f32 %v1580, %v1688
    %v1707 = vsub.f32 %v1583, %v1691
    %v1708 = vsub.f32 %v1627, %v1694
    %v1709 = vsub.f32 %v1630, %v1697
    %v1710 = vsub.f32 %v1674, %v1700
    %v1711 = vsub.f32 %v1677, %v1703
    %v1712 = vmul.f32 %v1704, 1.442695
    %v1713 = vpow.pop %v1712
    %v1714 = vmul.f32 %v1705, 1.442695
    %v1715 = vpow.pop %v1714
    %v1716 = vmul.f32 %v1706, 1.442695
    %v1717 = vpow.pop %v1716
    %v1718 = vmul.f32 %v1707, 1.442695
    %v1719 = vpow.pop %v1718
    %v1720 = vmul.f32 %v1708, 1.442695
    %v1721 = vpow.pop %v1720
    %v1722 = vmul.f32 %v1709, 1.442695
    %v1723 = vpow.pop %v1722
    %v1724 = vmul.f32 %v1710, 1.442695
    %v1725 = vpow.pop %v1724
    %v1726 = vmul.f32 %v1711, 1.442695
    %v1727 = vpow.pop %v1726
    %v1728 = vsel %vm290, %v1713, 0.0
    %1729 = vadd.xlane.f32.xlu0 %v1728
    %v1730 = vpop.xlane.xlu0 %1729
    %v1731 = vsel %vm290, %v1715, 0.0
    %1732 = vadd.xlane.f32.xlu0 %v1731
    %v1733 = vpop.xlane.xlu0 %1732
    %v1734 = vsel %vm290, %v1717, 0.0
    %1735 = vadd.xlane.f32.xlu0 %v1734
    %v1736 = vpop.xlane.xlu0 %1735
    %v1737 = vsel %vm290, %v1719, 0.0
    %1738 = vadd.xlane.f32.xlu0 %v1737
    %v1739 = vpop.xlane.xlu0 %1738
    %v1740 = vsel %vm290, %v1721, 0.0
    %1741 = vadd.xlane.f32.xlu0 %v1740
    %v1742 = vpop.xlane.xlu0 %1741
    %v1743 = vsel %vm290, %v1723, 0.0
    %1744 = vadd.xlane.f32.xlu0 %v1743
    %v1745 = vpop.xlane.xlu0 %1744
    %v1746 = vsel %vm290, %v1725, 0.0
    %1747 = vadd.xlane.f32.xlu0 %v1746
    %v1748 = vpop.xlane.xlu0 %1747
    %v1749 = vsel %vm290, %v1727, 0.0
    %1750 = vadd.xlane.f32.xlu0 %v1749
    %v1751 = vpop.xlane.xlu0 %1750
    %v1752 = vrcp.pop %v1730
    %v1753 = vmul.f32 %v1713, %v1752
    %v1754 = vrcp.pop %v1733
    %v1755 = vmul.f32 %v1715, %v1754
    %v1756 = vrcp.pop %v1736
    %v1757 = vmul.f32 %v1717, %v1756
    %v1758 = vrcp.pop %v1739
    %v1759 = vmul.f32 %v1719, %v1758
    %v1760 = vrcp.pop %v1742
    %v1761 = vmul.f32 %v1721, %v1760
    %v1762 = vrcp.pop %v1745
    %v1763 = vmul.f32 %v1723, %v1762
    %v1764 = vrcp.pop %v1748
    %v1765 = vmul.f32 %v1725, %v1764
    %v1766 = vrcp.pop %v1751
    %v1767 = vmul.f32 %v1727, %v1766
    %v1768 = vpack.c.bf16 %v1755, %v1753
    %v1769 = vpack.c.bf16 %v1759, %v1757
    %v1770 = vpack.c.bf16 %v1763, %v1761
    %v1771 = vpack.c.bf16 %v1767, %v1765
    %v1772 = vpack.c.bf16 %v1434, %v1434
    %v1773 = vpack.c.bf16 %v1476, %v1476
    %v1774 = vpack.c.bf16 %v1479, %v1479
    %v1775 = vpack.c.bf16 %v1482, %v1482
    %v1777 = vsel %vm290, %v1768, 0
    %vm1779 = vcmask 1043456
    %v1781 = vsel %vm1779, %v1772, 0
    %1783 = vmatprep.subr.bf16.mxu0 0
    %1784 = vmatpush1.bf16.msra.mxu0 %v1781
    %1785 = vmatprep.subr.bf16.mxu0 0
    %1786 = vmatpush1.bf16.msra.mxu0 0
    %1787 = vmatprep.subr.bf16.mxu0 0
    %1788 = vmatpush1.bf16.msra.mxu0 0
    %1789 = vmatprep.subr.bf16.mxu0 0
    %1790 = vmatpush1.bf16.msra.mxu0 0
    %1791 = vmatprep.subr.bf16.mxu0 0
    %1792 = vmatpush1.bf16.msra.mxu0 0
    %1793 = vmatprep.subr.bf16.mxu0 0
    %1794 = vmatpush1.bf16.msra.mxu0 0
    %1795 = vmatprep.subr.bf16.mxu0 0
    %1796 = vmatpush1.bf16.msra.mxu0 0
    %1797 = vmatprep.subr.bf16.mxu0 0
    %1798 = vmatpush1.bf16.msra.mxu0 0
    %1799 = vmatprep.subr.bf16.mxu0 0
    %1800 = vmatpush1.bf16.msra.mxu0 0
    %1801 = vmatprep.subr.bf16.mxu0 0
    %1802 = vmatpush1.bf16.msra.mxu0 0
    %1803 = vmatprep.subr.bf16.mxu0 0
    %1804 = vmatpush1.bf16.msra.mxu0 0
    %1805 = vmatprep.subr.bf16.mxu0 0
    %1806 = vmatpush1.bf16.msra.mxu0 0
    %1807 = vmatprep.subr.bf16.mxu0 0
    %1808 = vmatpush1.bf16.msra.mxu0 0
    %1809 = vmatprep.subr.bf16.mxu0 0
    %1810 = vmatpush1.bf16.msra.mxu0 0
    %1811 = vmatprep.subr.bf16.mxu0 0
    %1812 = vmatpush1.bf16.msra.mxu0 0
    %1813 = vmatprep.subr.bf16.mxu0 0
    %1814 = vmatpush1.bf16.msra.mxu0 0
    %1815 = vmatprep.mubr.bf16.mxu0 0
    %1816 = vmatmul.mubr.bf16.gmra.mrb[0].mxu0 %v1777
    %v1817 = vpop.f32.mrb[0].mxu0
    %v1818 = vadd.f32 0.0, %v1817
    %v1819 = vpop.f32.mrb[0].mxu0
    %v1820 = vpop.f32.mrb[0].mxu0
    %v1821 = vadd.f32 0.0, %v1820
    %v1822 = vpop.f32.mrb[0].mxu0
    %1823 = vdwg.mxu0
    %v1825 = vsel %vm290, %v1769, 0
    %v1828 = vsel %vm1779, %v1773, 0
    %1830 = vmatprep.subr.bf16.mxu0 0
    %1831 = vmatpush1.bf16.msra.mxu0 %v1828
    %1832 = vmatprep.subr.bf16.mxu0 0
    %1833 = vmatpush1.bf16.msra.mxu0 0
    %1834 = vmatprep.subr.bf16.mxu0 0
    %1835 = vmatpush1.bf16.msra.mxu0 0
    %1836 = vmatprep.subr.bf16.mxu0 0
    %1837 = vmatpush1.bf16.msra.mxu0 0
    %1838 = vmatprep.subr.bf16.mxu0 0
    %1839 = vmatpush1.bf16.msra.mxu0 0
    %1840 = vmatprep.subr.bf16.mxu0 0
    %1841 = vmatpush1.bf16.msra.mxu0 0
    %1842 = vmatprep.subr.bf16.mxu0 0
    %1843 = vmatpush1.bf16.msra.mxu0 0
    %1844 = vmatprep.subr.bf16.mxu0 0
    %1845 = vmatpush1.bf16.msra.mxu0 0
    %1846 = vmatprep.subr.bf16.mxu0 0
    %1847 = vmatpush1.bf16.msra.mxu0 0
    %1848 = vmatprep.subr.bf16.mxu0 0
    %1849 = vmatpush1.bf16.msra.mxu0 0
    %1850 = vmatprep.subr.bf16.mxu0 0
    %1851 = vmatpush1.bf16.msra.mxu0 0
    %1852 = vmatprep.subr.bf16.mxu0 0
    %1853 = vmatpush1.bf16.msra.mxu0 0
    %1854 = vmatprep.subr.bf16.mxu0 0
    %1855 = vmatpush1.bf16.msra.mxu0 0
    %1856 = vmatprep.subr.bf16.mxu0 0
    %1857 = vmatpush1.bf16.msra.mxu0 0
    %1858 = vmatprep.subr.bf16.mxu0 0
    %1859 = vmatpush1.bf16.msra.mxu0 0
    %1860 = vmatprep.subr.bf16.mxu0 0
    %1861 = vmatpush1.bf16.msra.mxu0 0
    %1862 = vmatprep.mubr.bf16.mxu0 0
    %1863 = vmatmul.mubr.bf16.gmra.mrb[0].mxu0 %v1825
    %v1864 = vpop.f32.mrb[0].mxu0
    %v1865 = vadd.f32 0.0, %v1864
    %v1866 = vpop.f32.mrb[0].mxu0
    %v1867 = vpop.f32.mrb[0].mxu0
    %v1868 = vadd.f32 0.0, %v1867
    %v1869 = vpop.f32.mrb[0].mxu0
    %1870 = vdwg.mxu0
    %v1872 = vsel %vm290, %v1770, 0
    %v1875 = vsel %vm1779, %v1774, 0
    %1877 = vmatprep.subr.bf16.mxu0 0
    %1878 = vmatpush1.bf16.msra.mxu0 %v1875
    %1879 = vmatprep.subr.bf16.mxu0 0
    %1880 = vmatpush1.bf16.msra.mxu0 0
    %1881 = vmatprep.subr.bf16.mxu0 0
    %1882 = vmatpush1.bf16.msra.mxu0 0
    %1883 = vmatprep.subr.bf16.mxu0 0
    %1884 = vmatpush1.bf16.msra.mxu0 0
    %1885 = vmatprep.subr.bf16.mxu0 0
    %1886 = vmatpush1.bf16.msra.mxu0 0
    %1887 = vmatprep.subr.bf16.mxu0 0
    %1888 = vmatpush1.bf16.msra.mxu0 0
    %1889 = vmatprep.subr.bf16.mxu0 0
    %1890 = vmatpush1.bf16.msra.mxu0 0
    %1891 = vmatprep.subr.bf16.mxu0 0
    %1892 = vmatpush1.bf16.msra.mxu0 0
    %1893 = vmatprep.subr.bf16.mxu0 0
    %1894 = vmatpush1.bf16.msra.mxu0 0
    %1895 = vmatprep.subr.bf16.mxu0 0
    %1896 = vmatpush1.bf16.msra.mxu0 0
    %1897 = vmatprep.subr.bf16.mxu0 0
    %1898 = vmatpush1.bf16.msra.mxu0 0
    %1899 = vmatprep.subr.bf16.mxu0 0
    %1900 = vmatpush1.bf16.msra.mxu0 0
    %1901 = vmatprep.subr.bf16.mxu0 0
    %1902 = vmatpush1.bf16.msra.mxu0 0
    %1903 = vmatprep.subr.bf16.mxu0 0
    %1904 = vmatpush1.bf16.msra.mxu0 0
    %1905 = vmatprep.subr.bf16.mxu0 0
    %1906 = vmatpush1.bf16.msra.mxu0 0
    %1907 = vmatprep.subr.bf16.mxu0 0
    %1908 = vmatpush1.bf16.msra.mxu0 0
    %1909 = vmatprep.mubr.bf16.mxu0 0
    %1910 = vmatmul.mubr.bf16.gmra.mrb[0].mxu0 %v1872
    %v1911 = vpop.f32.mrb[0].mxu0
    %v1912 = vadd.f32 0.0, %v1911
    %v1913 = vpop.f32.mrb[0].mxu0
    %v1914 = vpop.f32.mrb[0].mxu0
    %v1915 = vadd.f32 0.0, %v1914
    %v1916 = vpop.f32.mrb[0].mxu0
    %1917 = vdwg.mxu0
    %v1919 = vsel %vm290, %v1771, 0
    %v1922 = vsel %vm1779, %v1775, 0
    %1924 = vmatprep.subr.bf16.mxu0 0
    %1925 = vmatpush1.bf16.msra.mxu0 %v1922
    %1926 = vmatprep.subr.bf16.mxu0 0
    %1927 = vmatpush1.bf16.msra.mxu0 0
    %1928 = vmatprep.subr.bf16.mxu0 0
    %1929 = vmatpush1.bf16.msra.mxu0 0
    %1930 = vmatprep.subr.bf16.mxu0 0
    %1931 = vmatpush1.bf16.msra.mxu0 0
    %1932 = vmatprep.subr.bf16.mxu0 0
    %1933 = vmatpush1.bf16.msra.mxu0 0
    %1934 = vmatprep.subr.bf16.mxu0 0
    %1935 = vmatpush1.bf16.msra.mxu0 0
    %1936 = vmatprep.subr.bf16.mxu0 0
    %1937 = vmatpush1.bf16.msra.mxu0 0
    %1938 = vmatprep.subr.bf16.mxu0 0
    %1939 = vmatpush1.bf16.msra.mxu0 0
    %1940 = vmatprep.subr.bf16.mxu0 0
    %1941 = vmatpush1.bf16.msra.mxu0 0
    %1942 = vmatprep.subr.bf16.mxu0 0
    %1943 = vmatpush1.bf16.msra.mxu0 0
    %1944 = vmatprep.subr.bf16.mxu0 0
    %1945 = vmatpush1.bf16.msra.mxu0 0
    %1946 = vmatprep.subr.bf16.mxu0 0
    %1947 = vmatpush1.bf16.msra.mxu0 0
    %1948 = vmatprep.subr.bf16.mxu0 0
    %1949 = vmatpush1.bf16.msra.mxu0 0
    %1950 = vmatprep.subr.bf16.mxu0 0
    %1951 = vmatpush1.bf16.msra.mxu0 0
    %1952 = vmatprep.subr.bf16.mxu0 0
    %1953 = vmatpush1.bf16.msra.mxu0 0
    %1954 = vmatprep.subr.bf16.mxu0 0
    %1955 = vmatpush1.bf16.msra.mxu0 0
    %1956 = vmatprep.mubr.bf16.mxu0 0
    %1957 = vmatmul.mubr.bf16.gmra.mrb[0].mxu0 %v1919
    %v1958 = vpop.f32.mrb[0].mxu0
    %v1959 = vadd.f32 0.0, %v1958
    %v1960 = vpop.f32.mrb[0].mxu0
    %v1961 = vpop.f32.mrb[0].mxu0
    %v1962 = vadd.f32 0.0, %v1961
    %v1963 = vpop.f32.mrb[0].mxu0
    %1964 = vdwg.mxu0
    %1967 = vrot.lane.b32.xlu0 %v1865, 8
    %v1968 = vpop.permute.xlu0 %1967
    %1969 = vrot.lane.b32.xlu0 %v1868, 8
    %v1970 = vpop.permute.xlu0 %1969
    %1975 = vrot.lane.b32.xlu0 %v1912, 16
    %v1976 = vpop.permute.xlu0 %1975
    %1977 = vrot.lane.b32.xlu0 %v1915, 16
    %v1978 = vpop.permute.xlu0 %1977
    %1983 = vrot.lane.b32.xlu0 %v1959, 24
    %v1984 = vpop.permute.xlu0 %1983
    %1985 = vrot.lane.b32.xlu0 %v1962, 24
    %v1986 = vpop.permute.xlu0 %1985
    %v1989 = vsel %vm290, %v1818, %v1968
    %v1990 = vsel %vm290, %v1821, %v1970
    %v1991 = vsel %vm475, %v1989, %v1976
    %v1992 = vsel %vm475, %v1990, %v1978
    %v1993 = vsel %vm714, %v1991, %v1984
    %v1994 = vsel %vm714, %v1992, %v1986
    %1997 = vrot.lane.b32.xlu0 %v1442, 120
    %v1998 = vpop.permute.xlu0 %1997
    %1999 = vrot.lane.b32.xlu0 %v1443, 120
    %v2000 = vpop.permute.xlu0 %1999
    %2003 = vrot.lane.b32.xlu0 %v1442, 112
    %v2004 = vpop.permute.xlu0 %2003
    %2005 = vrot.lane.b32.xlu0 %v1443, 112
    %v2006 = vpop.permute.xlu0 %2005
    %2009 = vrot.lane.b32.xlu0 %v1442, 104
    %v2010 = vpop.permute.xlu0 %2009
    %2011 = vrot.lane.b32.xlu0 %v1443, 104
    %v2012 = vpop.permute.xlu0 %2011
    %2016 = vrot.lane.b32.xlu0 %v1384, 120
    %v2017 = vpop.permute.xlu0 %2016
    %2019 = vrot.lane.b32.xlu0 %v1384, 112
    %v2020 = vpop.permute.xlu0 %2019
    %2022 = vrot.lane.b32.xlu0 %v1384, 104
    %v2023 = vpop.permute.xlu0 %2022
    %2026 = vrot.lane.b32.xlu0 %v1437, 120
    %v2027 = vpop.permute.xlu0 %2026
    %2029 = vrot.lane.b32.xlu0 %v1437, 112
    %v2030 = vpop.permute.xlu0 %2029
    %2032 = vrot.lane.b32.xlu0 %v1437, 104
    %v2033 = vpop.permute.xlu0 %2032
    %v2035 = vpack.c.bf16 %v1443, %v1442
    %v2036 = vpack.c.bf16 %v2000, %v1998
    %v2037 = vpack.c.bf16 %v2006, %v2004
    %v2038 = vpack.c.bf16 %v2012, %v2010
    %v2039 = vpack.c.bf16 %v1384, %v1384
    %v2040 = vpack.c.bf16 %v2017, %v2017
    %v2041 = vpack.c.bf16 %v2020, %v2020
    %v2042 = vpack.c.bf16 %v2023, %v2023
    %v2044 = vsel %vm290, %v2035, 0
    %v2047 = vsel %vm290, %v2039, 0
    %2049 = vmatprep.subr.bf16.mxu0 0
    %2050 = vmatpush1.bf16.xpose.msra.mxu0 %v2047
    %2051 = vmatprep.subr.bf16.mxu0 0
    %2052 = vmatpush1.bf16.xpose.msra.mxu0 0
    %2053 = vmatprep.subr.bf16.mxu0 0
    %2054 = vmatpush1.bf16.xpose.msra.mxu0 0
    %2055 = vmatprep.subr.bf16.mxu0 0
    %2056 = vmatpush1.bf16.xpose.msra.mxu0 0
    %2057 = vmatprep.subr.bf16.mxu0 0
    %2058 = vmatpush1.bf16.xpose.msra.mxu0 0
    %2059 = vmatprep.subr.bf16.mxu0 0
    %2060 = vmatpush1.bf16.xpose.msra.mxu0 0
    %2061 = vmatprep.subr.bf16.mxu0 0
    %2062 = vmatpush1.bf16.xpose.msra.mxu0 0
    %2063 = vmatprep.subr.bf16.mxu0 0
    %2064 = vmatpush1.bf16.xpose.msra.mxu0 0
    %2065 = vmatprep.subr.bf16.mxu0 0
    %2066 = vmatpush1.bf16.xpose.msra.mxu0 0
    %2067 = vmatprep.subr.bf16.mxu0 0
    %2068 = vmatpush1.bf16.xpose.msra.mxu0 0
    %2069 = vmatprep.subr.bf16.mxu0 0
    %2070 = vmatpush1.bf16.xpose.msra.mxu0 0
    %2071 = vmatprep.subr.bf16.mxu0 0
    %2072 = vmatpush1.bf16.xpose.msra.mxu0 0
    %2073 = vmatprep.subr.bf16.mxu0 0
    %2074 = vmatpush1.bf16.xpose.msra.mxu0 0
    %2075 = vmatprep.subr.bf16.mxu0 0
    %2076 = vmatpush1.bf16.xpose.msra.mxu0 0
    %2077 = vmatprep.subr.bf16.mxu0 0
    %2078 = vmatpush1.bf16.xpose.msra.mxu0 0
    %2079 = vmatprep.subr.bf16.mxu0 0
    %2080 = vmatpush1.bf16.xpose.msra.mxu0 0
    %2081 = vmatprep.mubr.bf16.mxu0 0
    %2082 = vmatmul.mubr.bf16.gmra.mrb[0].mxu0 %v2044
    %v2083 = vpop.f32.mrb[0].mxu0
    %v2084 = vadd.f32 0.0, %v2083
    %v2085 = vpop.f32.mrb[0].mxu0
    %v2086 = vpop.f32.mrb[0].mxu0
    %v2087 = vadd.f32 0.0, %v2086
    %v2088 = vpop.f32.mrb[0].mxu0
    %2089 = vdwg.mxu0
    %v2091 = vsel %vm290, %v2036, 0
    %v2094 = vsel %vm290, %v2040, 0
    %2096 = vmatprep.subr.bf16.mxu0 0
    %2097 = vmatpush1.bf16.xpose.msra.mxu0 %v2094
    %2098 = vmatprep.subr.bf16.mxu0 0
    %2099 = vmatpush1.bf16.xpose.msra.mxu0 0
    %2100 = vmatprep.subr.bf16.mxu0 0
    %2101 = vmatpush1.bf16.xpose.msra.mxu0 0
    %2102 = vmatprep.subr.bf16.mxu0 0
    %2103 = vmatpush1.bf16.xpose.msra.mxu0 0
    %2104 = vmatprep.subr.bf16.mxu0 0
    %2105 = vmatpush1.bf16.xpose.msra.mxu0 0
    %2106 = vmatprep.subr.bf16.mxu0 0
    %2107 = vmatpush1.bf16.xpose.msra.mxu0 0
    %2108 = vmatprep.subr.bf16.mxu0 0
    %2109 = vmatpush1.bf16.xpose.msra.mxu0 0
    %2110 = vmatprep.subr.bf16.mxu0 0
    %2111 = vmatpush1.bf16.xpose.msra.mxu0 0
    %2112 = vmatprep.subr.bf16.mxu0 0
    %2113 = vmatpush1.bf16.xpose.msra.mxu0 0
    %2114 = vmatprep.subr.bf16.mxu0 0
    %2115 = vmatpush1.bf16.xpose.msra.mxu0 0
    %2116 = vmatprep.subr.bf16.mxu0 0
    %2117 = vmatpush1.bf16.xpose.msra.mxu0 0
    %2118 = vmatprep.subr.bf16.mxu0 0
    %2119 = vmatpush1.bf16.xpose.msra.mxu0 0
    %2120 = vmatprep.subr.bf16.mxu0 0
    %2121 = vmatpush1.bf16.xpose.msra.mxu0 0
    %2122 = vmatprep.subr.bf16.mxu0 0
    %2123 = vmatpush1.bf16.xpose.msra.mxu0 0
    %2124 = vmatprep.subr.bf16.mxu0 0
    %2125 = vmatpush1.bf16.xpose.msra.mxu0 0
    %2126 = vmatprep.subr.bf16.mxu0 0
    %2127 = vmatpush1.bf16.xpose.msra.mxu0 0
    %2128 = vmatprep.mubr.bf16.mxu0 0
    %2129 = vmatmul.mubr.bf16.gmra.mrb[0].mxu0 %v2091
    %v2130 = vpop.f32.mrb[0].mxu0
    %v2131 = vadd.f32 0.0, %v2130
    %v2132 = vpop.f32.mrb[0].mxu0
    %v2133 = vpop.f32.mrb[0].mxu0
    %v2134 = vadd.f32 0.0, %v2133
    %v2135 = vpop.f32.mrb[0].mxu0
    %2136 = vdwg.mxu0
    %v2138 = vsel %vm290, %v2037, 0
    %v2141 = vsel %vm290, %v2041, 0
    %2143 = vmatprep.subr.bf16.mxu0 0
    %2144 = vmatpush1.bf16.xpose.msra.mxu0 %v2141
    %2145 = vmatprep.subr.bf16.mxu0 0
    %2146 = vmatpush1.bf16.xpose.msra.mxu0 0
    %2147 = vmatprep.subr.bf16.mxu0 0
    %2148 = vmatpush1.bf16.xpose.msra.mxu0 0
    %2149 = vmatprep.subr.bf16.mxu0 0
    %2150 = vmatpush1.bf16.xpose.msra.mxu0 0
    %2151 = vmatprep.subr.bf16.mxu0 0
    %2152 = vmatpush1.bf16.xpose.msra.mxu0 0
    %2153 = vmatprep.subr.bf16.mxu0 0
    %2154 = vmatpush1.bf16.xpose.msra.mxu0 0
    %2155 = vmatprep.subr.bf16.mxu0 0
    %2156 = vmatpush1.bf16.xpose.msra.mxu0 0
    %2157 = vmatprep.subr.bf16.mxu0 0
    %2158 = vmatpush1.bf16.xpose.msra.mxu0 0
    %2159 = vmatprep.subr.bf16.mxu0 0
    %2160 = vmatpush1.bf16.xpose.msra.mxu0 0
    %2161 = vmatprep.subr.bf16.mxu0 0
    %2162 = vmatpush1.bf16.xpose.msra.mxu0 0
    %2163 = vmatprep.subr.bf16.mxu0 0
    %2164 = vmatpush1.bf16.xpose.msra.mxu0 0
    %2165 = vmatprep.subr.bf16.mxu0 0
    %2166 = vmatpush1.bf16.xpose.msra.mxu0 0
    %2167 = vmatprep.subr.bf16.mxu0 0
    %2168 = vmatpush1.bf16.xpose.msra.mxu0 0
    %2169 = vmatprep.subr.bf16.mxu0 0
    %2170 = vmatpush1.bf16.xpose.msra.mxu0 0
    %2171 = vmatprep.subr.bf16.mxu0 0
    %2172 = vmatpush1.bf16.xpose.msra.mxu0 0
    %2173 = vmatprep.subr.bf16.mxu0 0
    %2174 = vmatpush1.bf16.xpose.msra.mxu0 0
    %2175 = vmatprep.mubr.bf16.mxu0 0
    %2176 = vmatmul.mubr.bf16.gmra.mrb[0].mxu0 %v2138
    %v2177 = vpop.f32.mrb[0].mxu0
    %v2178 = vadd.f32 0.0, %v2177
    %v2179 = vpop.f32.mrb[0].mxu0
    %v2180 = vpop.f32.mrb[0].mxu0
    %v2181 = vadd.f32 0.0, %v2180
    %v2182 = vpop.f32.mrb[0].mxu0
    %2183 = vdwg.mxu0
    %v2185 = vsel %vm290, %v2038, 0
    %v2188 = vsel %vm290, %v2042, 0
    %2190 = vmatprep.subr.bf16.mxu0 0
    %2191 = vmatpush1.bf16.xpose.msra.mxu0 %v2188
    %2192 = vmatprep.subr.bf16.mxu0 0
    %2193 = vmatpush1.bf16.xpose.msra.mxu0 0
    %2194 = vmatprep.subr.bf16.mxu0 0
    %2195 = vmatpush1.bf16.xpose.msra.mxu0 0
    %2196 = vmatprep.subr.bf16.mxu0 0
    %2197 = vmatpush1.bf16.xpose.msra.mxu0 0
    %2198 = vmatprep.subr.bf16.mxu0 0
    %2199 = vmatpush1.bf16.xpose.msra.mxu0 0
    %2200 = vmatprep.subr.bf16.mxu0 0
    %2201 = vmatpush1.bf16.xpose.msra.mxu0 0
    %2202 = vmatprep.subr.bf16.mxu0 0
    %2203 = vmatpush1.bf16.xpose.msra.mxu0 0
    %2204 = vmatprep.subr.bf16.mxu0 0
    %2205 = vmatpush1.bf16.xpose.msra.mxu0 0
    %2206 = vmatprep.subr.bf16.mxu0 0
    %2207 = vmatpush1.bf16.xpose.msra.mxu0 0
    %2208 = vmatprep.subr.bf16.mxu0 0
    %2209 = vmatpush1.bf16.xpose.msra.mxu0 0
    %2210 = vmatprep.subr.bf16.mxu0 0
    %2211 = vmatpush1.bf16.xpose.msra.mxu0 0
    %2212 = vmatprep.subr.bf16.mxu0 0
    %2213 = vmatpush1.bf16.xpose.msra.mxu0 0
    %2214 = vmatprep.subr.bf16.mxu0 0
    %2215 = vmatpush1.bf16.xpose.msra.mxu0 0
    %2216 = vmatprep.subr.bf16.mxu0 0
    %2217 = vmatpush1.bf16.xpose.msra.mxu0 0
    %2218 = vmatprep.subr.bf16.mxu0 0
    %2219 = vmatpush1.bf16.xpose.msra.mxu0 0
    %2220 = vmatprep.subr.bf16.mxu0 0
    %2221 = vmatpush1.bf16.xpose.msra.mxu0 0
    %2222 = vmatprep.mubr.bf16.mxu0 0
    %2223 = vmatmul.mubr.bf16.gmra.mrb[0].mxu0 %v2185
    %v2224 = vpop.f32.mrb[0].mxu0
    %v2225 = vadd.f32 0.0, %v2224
    %v2226 = vpop.f32.mrb[0].mxu0
    %v2227 = vpop.f32.mrb[0].mxu0
    %v2228 = vadd.f32 0.0, %v2227
    %v2229 = vpop.f32.mrb[0].mxu0
    %2230 = vdwg.mxu0
    %v2231 = vsel %vm290, %v2084, -inf
    %2232 = vmax.xlane.f32.xlu0 %v2231
    %v2233 = vpop.xlane.xlu0 %2232
    %v2234 = vsel %vm290, %v2087, -inf
    %2235 = vmax.xlane.f32.xlu0 %v2234
    %v2236 = vpop.xlane.xlu0 %2235
    %v2237 = vsel %vm290, %v2131, -inf
    %2238 = vmax.xlane.f32.xlu0 %v2237
    %v2239 = vpop.xlane.xlu0 %2238
    %v2240 = vsel %vm290, %v2134, -inf
    %2241 = vmax.xlane.f32.xlu0 %v2240
    %v2242 = vpop.xlane.xlu0 %2241
    %v2243 = vsel %vm290, %v2178, -inf
    %2244 = vmax.xlane.f32.xlu0 %v2243
    %v2245 = vpop.xlane.xlu0 %2244
    %v2246 = vsel %vm290, %v2181, -inf
    %2247 = vmax.xlane.f32.xlu0 %v2246
    %v2248 = vpop.xlane.xlu0 %2247
    %v2249 = vsel %vm290, %v2225, -inf
    %2250 = vmax.xlane.f32.xlu0 %v2249
    %v2251 = vpop.xlane.xlu0 %2250
    %v2252 = vsel %vm290, %v2228, -inf
    %2253 = vmax.xlane.f32.xlu0 %v2252
    %v2254 = vpop.xlane.xlu0 %2253
    %v2255 = vsub.f32 %v2084, %v2233
    %v2256 = vsub.f32 %v2087, %v2236
    %v2257 = vsub.f32 %v2131, %v2239
    %v2258 = vsub.f32 %v2134, %v2242
    %v2259 = vsub.f32 %v2178, %v2245
    %v2260 = vsub.f32 %v2181, %v2248
    %v2261 = vsub.f32 %v2225, %v2251
    %v2262 = vsub.f32 %v2228, %v2254
    %v2263 = vmul.f32 %v2255, 1.442695
    %v2264 = vpow.pop %v2263
    %v2265 = vmul.f32 %v2256, 1.442695
    %v2266 = vpow.pop %v2265
    %v2267 = vmul.f32 %v2257, 1.442695
    %v2268 = vpow.pop %v2267
    %v2269 = vmul.f32 %v2258, 1.442695
    %v2270 = vpow.pop %v2269
    %v2271 = vmul.f32 %v2259, 1.442695
    %v2272 = vpow.pop %v2271
    %v2273 = vmul.f32 %v2260, 1.442695
    %v2274 = vpow.pop %v2273
    %v2275 = vmul.f32 %v2261, 1.442695
    %v2276 = vpow.pop %v2275
    %v2277 = vmul.f32 %v2262, 1.442695
    %v2278 = vpow.pop %v2277
    %v2279 = vsel %vm290, %v2264, 0.0
    %2280 = vadd.xlane.f32.xlu0 %v2279
    %v2281 = vpop.xlane.xlu0 %2280
    %v2282 = vsel %vm290, %v2266, 0.0
    %2283 = vadd.xlane.f32.xlu0 %v2282
    %v2284 = vpop.xlane.xlu0 %2283
    %v2285 = vsel %vm290, %v2268, 0.0
    %2286 = vadd.xlane.f32.xlu0 %v2285
    %v2287 = vpop.xlane.xlu0 %2286
    %v2288 = vsel %vm290, %v2270, 0.0
    %2289 = vadd.xlane.f32.xlu0 %v2288
    %v2290 = vpop.xlane.xlu0 %2289
    %v2291 = vsel %vm290, %v2272, 0.0
    %2292 = vadd.xlane.f32.xlu0 %v2291
    %v2293 = vpop.xlane.xlu0 %2292
    %v2294 = vsel %vm290, %v2274, 0.0
    %2295 = vadd.xlane.f32.xlu0 %v2294
    %v2296 = vpop.xlane.xlu0 %2295
    %v2297 = vsel %vm290, %v2276, 0.0
    %2298 = vadd.xlane.f32.xlu0 %v2297
    %v2299 = vpop.xlane.xlu0 %2298
    %v2300 = vsel %vm290, %v2278, 0.0
    %2301 = vadd.xlane.f32.xlu0 %v2300
    %v2302 = vpop.xlane.xlu0 %2301
    %v2303 = vrcp.pop %v2281
    %v2304 = vmul.f32 %v2264, %v2303
    %v2305 = vrcp.pop %v2284
    %v2306 = vmul.f32 %v2266, %v2305
    %v2307 = vrcp.pop %v2287
    %v2308 = vmul.f32 %v2268, %v2307
    %v2309 = vrcp.pop %v2290
    %v2310 = vmul.f32 %v2270, %v2309
    %v2311 = vrcp.pop %v2293
    %v2312 = vmul.f32 %v2272, %v2311
    %v2313 = vrcp.pop %v2296
    %v2314 = vmul.f32 %v2274, %v2313
    %v2315 = vrcp.pop %v2299
    %v2316 = vmul.f32 %v2276, %v2315
    %v2317 = vrcp.pop %v2302
    %v2318 = vmul.f32 %v2278, %v2317
    %v2319 = vpack.c.bf16 %v2306, %v2304
    %v2320 = vpack.c.bf16 %v2310, %v2308
    %v2321 = vpack.c.bf16 %v2314, %v2312
    %v2322 = vpack.c.bf16 %v2318, %v2316
    %v2323 = vpack.c.bf16 %v1437, %v1437
    %v2324 = vpack.c.bf16 %v2027, %v2027
    %v2325 = vpack.c.bf16 %v2030, %v2030
    %v2326 = vpack.c.bf16 %v2033, %v2033
    %v2328 = vsel %vm290, %v2319, 0
    %v2331 = vsel %vm1779, %v2323, 0
    %2333 = vmatprep.subr.bf16.mxu0 0
    %2334 = vmatpush1.bf16.msra.mxu0 %v2331
    %2335 = vmatprep.subr.bf16.mxu0 0
    %2336 = vmatpush1.bf16.msra.mxu0 0
    %2337 = vmatprep.subr.bf16.mxu0 0
    %2338 = vmatpush1.bf16.msra.mxu0 0
    %2339 = vmatprep.subr.bf16.mxu0 0
    %2340 = vmatpush1.bf16.msra.mxu0 0
    %2341 = vmatprep.subr.bf16.mxu0 0
    %2342 = vmatpush1.bf16.msra.mxu0 0
    %2343 = vmatprep.subr.bf16.mxu0 0
    %2344 = vmatpush1.bf16.msra.mxu0 0
    %2345 = vmatprep.subr.bf16.mxu0 0
    %2346 = vmatpush1.bf16.msra.mxu0 0
    %2347 = vmatprep.subr.bf16.mxu0 0
    %2348 = vmatpush1.bf16.msra.mxu0 0
    %2349 = vmatprep.subr.bf16.mxu0 0
    %2350 = vmatpush1.bf16.msra.mxu0 0
    %2351 = vmatprep.subr.bf16.mxu0 0
    %2352 = vmatpush1.bf16.msra.mxu0 0
    %2353 = vmatprep.subr.bf16.mxu0 0
    %2354 = vmatpush1.bf16.msra.mxu0 0
    %2355 = vmatprep.subr.bf16.mxu0 0
    %2356 = vmatpush1.bf16.msra.mxu0 0
    %2357 = vmatprep.subr.bf16.mxu0 0
    %2358 = vmatpush1.bf16.msra.mxu0 0
    %2359 = vmatprep.subr.bf16.mxu0 0
    %2360 = vmatpush1.bf16.msra.mxu0 0
    %2361 = vmatprep.subr.bf16.mxu0 0
    %2362 = vmatpush1.bf16.msra.mxu0 0
    %2363 = vmatprep.subr.bf16.mxu0 0
    %2364 = vmatpush1.bf16.msra.mxu0 0
    %2365 = vmatprep.mubr.bf16.mxu0 0
    %2366 = vmatmul.mubr.bf16.gmra.mrb[0].mxu0 %v2328
    %v2367 = vpop.f32.mrb[0].mxu0
    %v2368 = vadd.f32 0.0, %v2367
    %v2369 = vpop.f32.mrb[0].mxu0
    %v2370 = vpop.f32.mrb[0].mxu0
    %v2371 = vadd.f32 0.0, %v2370
    %v2372 = vpop.f32.mrb[0].mxu0
    %2373 = vdwg.mxu0
    %v2375 = vsel %vm290, %v2320, 0
    %v2378 = vsel %vm1779, %v2324, 0
    %2380 = vmatprep.subr.bf16.mxu0 0
    %2381 = vmatpush1.bf16.msra.mxu0 %v2378
    %2382 = vmatprep.subr.bf16.mxu0 0
    %2383 = vmatpush1.bf16.msra.mxu0 0
    %2384 = vmatprep.subr.bf16.mxu0 0
    %2385 = vmatpush1.bf16.msra.mxu0 0
    %2386 = vmatprep.subr.bf16.mxu0 0
    %2387 = vmatpush1.bf16.msra.mxu0 0
    %2388 = vmatprep.subr.bf16.mxu0 0
    %2389 = vmatpush1.bf16.msra.mxu0 0
    %2390 = vmatprep.subr.bf16.mxu0 0
    %2391 = vmatpush1.bf16.msra.mxu0 0
    %2392 = vmatprep.subr.bf16.mxu0 0
    %2393 = vmatpush1.bf16.msra.mxu0 0
    %2394 = vmatprep.subr.bf16.mxu0 0
    %2395 = vmatpush1.bf16.msra.mxu0 0
    %2396 = vmatprep.subr.bf16.mxu0 0
    %2397 = vmatpush1.bf16.msra.mxu0 0
    %2398 = vmatprep.subr.bf16.mxu0 0
    %2399 = vmatpush1.bf16.msra.mxu0 0
    %2400 = vmatprep.subr.bf16.mxu0 0
    %2401 = vmatpush1.bf16.msra.mxu0 0
    %2402 = vmatprep.subr.bf16.mxu0 0
    %2403 = vmatpush1.bf16.msra.mxu0 0
    %2404 = vmatprep.subr.bf16.mxu0 0
    %2405 = vmatpush1.bf16.msra.mxu0 0
    %2406 = vmatprep.subr.bf16.mxu0 0
    %2407 = vmatpush1.bf16.msra.mxu0 0
    %2408 = vmatprep.subr.bf16.mxu0 0
    %2409 = vmatpush1.bf16.msra.mxu0 0
    %2410 = vmatprep.subr.bf16.mxu0 0
    %2411 = vmatpush1.bf16.msra.mxu0 0
    %2412 = vmatprep.mubr.bf16.mxu0 0
    %2413 = vmatmul.mubr.bf16.gmra.mrb[0].mxu0 %v2375
    %v2414 = vpop.f32.mrb[0].mxu0
    %v2415 = vadd.f32 0.0, %v2414
    %v2416 = vpop.f32.mrb[0].mxu0
    %v2417 = vpop.f32.mrb[0].mxu0
    %v2418 = vadd.f32 0.0, %v2417
    %v2419 = vpop.f32.mrb[0].mxu0
    %2420 = vdwg.mxu0
    %v2422 = vsel %vm290, %v2321, 0
    %v2425 = vsel %vm1779, %v2325, 0
    %2427 = vmatprep.subr.bf16.mxu0 0
    %2428 = vmatpush1.bf16.msra.mxu0 %v2425
    %2429 = vmatprep.subr.bf16.mxu0 0
    %2430 = vmatpush1.bf16.msra.mxu0 0
    %2431 = vmatprep.subr.bf16.mxu0 0
    %2432 = vmatpush1.bf16.msra.mxu0 0
    %2433 = vmatprep.subr.bf16.mxu0 0
    %2434 = vmatpush1.bf16.msra.mxu0 0
    %2435 = vmatprep.subr.bf16.mxu0 0
    %2436 = vmatpush1.bf16.msra.mxu0 0
    %2437 = vmatprep.subr.bf16.mxu0 0
    %2438 = vmatpush1.bf16.msra.mxu0 0
    %2439 = vmatprep.subr.bf16.mxu0 0
    %2440 = vmatpush1.bf16.msra.mxu0 0
    %2441 = vmatprep.subr.bf16.mxu0 0
    %2442 = vmatpush1.bf16.msra.mxu0 0
    %2443 = vmatprep.subr.bf16.mxu0 0
    %2444 = vmatpush1.bf16.msra.mxu0 0
    %2445 = vmatprep.subr.bf16.mxu0 0
    %2446 = vmatpush1.bf16.msra.mxu0 0
    %2447 = vmatprep.subr.bf16.mxu0 0
    %2448 = vmatpush1.bf16.msra.mxu0 0
    %2449 = vmatprep.subr.bf16.mxu0 0
    %2450 = vmatpush1.bf16.msra.mxu0 0
    %2451 = vmatprep.subr.bf16.mxu0 0
    %2452 = vmatpush1.bf16.msra.mxu0 0
    %2453 = vmatprep.subr.bf16.mxu0 0
    %2454 = vmatpush1.bf16.msra.mxu0 0
    %2455 = vmatprep.subr.bf16.mxu0 0
    %2456 = vmatpush1.bf16.msra.mxu0 0
    %2457 = vmatprep.subr.bf16.mxu0 0
    %2458 = vmatpush1.bf16.msra.mxu0 0
    %2459 = vmatprep.mubr.bf16.mxu0 0
    %2460 = vmatmul.mubr.bf16.gmra.mrb[0].mxu0 %v2422
    %v2461 = vpop.f32.mrb[0].mxu0
    %v2462 = vadd.f32 0.0, %v2461
    %v2463 = vpop.f32.mrb[0].mxu0
    %v2464 = vpop.f32.mrb[0].mxu0
    %v2465 = vadd.f32 0.0, %v2464
    %v2466 = vpop.f32.mrb[0].mxu0
    %2467 = vdwg.mxu0
    %v2469 = vsel %vm290, %v2322, 0
    %v2472 = vsel %vm1779, %v2326, 0
    %2474 = vmatprep.subr.bf16.mxu0 0
    %2475 = vmatpush1.bf16.msra.mxu0 %v2472
    %2476 = vmatprep.subr.bf16.mxu0 0
    %2477 = vmatpush1.bf16.msra.mxu0 0
    %2478 = vmatprep.subr.bf16.mxu0 0
    %2479 = vmatpush1.bf16.msra.mxu0 0
    %2480 = vmatprep.subr.bf16.mxu0 0
    %2481 = vmatpush1.bf16.msra.mxu0 0
    %2482 = vmatprep.subr.bf16.mxu0 0
    %2483 = vmatpush1.bf16.msra.mxu0 0
    %2484 = vmatprep.subr.bf16.mxu0 0
    %2485 = vmatpush1.bf16.msra.mxu0 0
    %2486 = vmatprep.subr.bf16.mxu0 0
    %2487 = vmatpush1.bf16.msra.mxu0 0
    %2488 = vmatprep.subr.bf16.mxu0 0
    %2489 = vmatpush1.bf16.msra.mxu0 0
    %2490 = vmatprep.subr.bf16.mxu0 0
    %2491 = vmatpush1.bf16.msra.mxu0 0
    %2492 = vmatprep.subr.bf16.mxu0 0
    %2493 = vmatpush1.bf16.msra.mxu0 0
    %2494 = vmatprep.subr.bf16.mxu0 0
    %2495 = vmatpush1.bf16.msra.mxu0 0
    %2496 = vmatprep.subr.bf16.mxu0 0
    %2497 = vmatpush1.bf16.msra.mxu0 0
    %2498 = vmatprep.subr.bf16.mxu0 0
    %2499 = vmatpush1.bf16.msra.mxu0 0
    %2500 = vmatprep.subr.bf16.mxu0 0
    %2501 = vmatpush1.bf16.msra.mxu0 0
    %2502 = vmatprep.subr.bf16.mxu0 0
    %2503 = vmatpush1.bf16.msra.mxu0 0
    %2504 = vmatprep.subr.bf16.mxu0 0
    %2505 = vmatpush1.bf16.msra.mxu0 0
    %2506 = vmatprep.mubr.bf16.mxu0 0
    %2507 = vmatmul.mubr.bf16.gmra.mrb[0].mxu0 %v2469
    %v2508 = vpop.f32.mrb[0].mxu0
    %v2509 = vadd.f32 0.0, %v2508
    %v2510 = vpop.f32.mrb[0].mxu0
    %v2511 = vpop.f32.mrb[0].mxu0
    %v2512 = vadd.f32 0.0, %v2511
    %v2513 = vpop.f32.mrb[0].mxu0
    %2514 = vdwg.mxu0
    %2517 = vrot.lane.b32.xlu0 %v2415, 8
    %v2518 = vpop.permute.xlu0 %2517
    %2519 = vrot.lane.b32.xlu0 %v2418, 8
    %v2520 = vpop.permute.xlu0 %2519
    %2525 = vrot.lane.b32.xlu0 %v2462, 16
    %v2526 = vpop.permute.xlu0 %2525
    %2527 = vrot.lane.b32.xlu0 %v2465, 16
    %v2528 = vpop.permute.xlu0 %2527
    %2533 = vrot.lane.b32.xlu0 %v2509, 24
    %v2534 = vpop.permute.xlu0 %2533
    %2535 = vrot.lane.b32.xlu0 %v2512, 24
    %v2536 = vpop.permute.xlu0 %2535
    %v2539 = vsel %vm290, %v2368, %v2518
    %v2540 = vsel %vm290, %v2371, %v2520
    %v2541 = vsel %vm475, %v2539, %v2526
    %v2542 = vsel %vm475, %v2540, %v2528
    %v2543 = vsel %vm714, %v2541, %v2534
    %v2544 = vsel %vm714, %v2542, %v2536
    %v2545 = vpack.c.bf16 %v1994, %v1993
    %v2546 = vpack.c.bf16 %v2544, %v2543
    %v2547 = vpack.c.bf16 %v1268, %v1267
    %v2548 = vpack.c.bf16 %v1270, %v1269
    %v2549 = vlaneseq
    %v2550 = vshrl.u32 %v2549, 7
    %v2551 = vsub.s32 3, %v2550
    %v2552 = vrot.slane %v1272, %v2551
    %v2554 = vsel %vm51, %v2545, 0
    %v2557 = vsel %vm51, %v2546, 0
    %v2560 = vsel %vm51, %v2547, 0
    %v2563 = vsel %vm51, %v2548, 0
    %2565 = vmatprep.subr.bf16.mxu0 0
    %2566 = vmatpush1.bf16.xpose.msra.mxu0 %v2560
    %2567 = vmatprep.subr.bf16.mxu0 0
    %2568 = vmatpush1.bf16.xpose.msra.mxu0 %v2563
    %2569 = vmatprep.subr.bf16.mxu0 0
    %2570 = vmatpush1.bf16.xpose.msra.mxu0 0
    %2571 = vmatprep.subr.bf16.mxu0 0
    %2572 = vmatpush1.bf16.xpose.msra.mxu0 0
    %2573 = vmatprep.subr.bf16.mxu0 0
    %2574 = vmatpush1.bf16.xpose.msra.mxu0 0
    %2575 = vmatprep.subr.bf16.mxu0 0
    %2576 = vmatpush1.bf16.xpose.msra.mxu0 0
    %2577 = vmatprep.subr.bf16.mxu0 0
    %2578 = vmatpush1.bf16.xpose.msra.mxu0 0
    %2579 = vmatprep.subr.bf16.mxu0 0
    %2580 = vmatpush1.bf16.xpose.msra.mxu0 0
    %2581 = vmatprep.subr.bf16.mxu0 0
    %2582 = vmatpush1.bf16.xpose.msra.mxu0 0
    %2583 = vmatprep.subr.bf16.mxu0 0
    %2584 = vmatpush1.bf16.xpose.msra.mxu0 0
    %2585 = vmatprep.subr.bf16.mxu0 0
    %2586 = vmatpush1.bf16.xpose.msra.mxu0 0
    %2587 = vmatprep.subr.bf16.mxu0 0
    %2588 = vmatpush1.bf16.xpose.msra.mxu0 0
    %2589 = vmatprep.subr.bf16.mxu0 0
    %2590 = vmatpush1.bf16.xpose.msra.mxu0 0
    %2591 = vmatprep.subr.bf16.mxu0 0
    %2592 = vmatpush1.bf16.xpose.msra.mxu0 0
    %2593 = vmatprep.subr.bf16.mxu0 0
    %2594 = vmatpush1.bf16.xpose.msra.mxu0 0
    %2595 = vmatprep.subr.bf16.mxu0 0
    %2596 = vmatpush1.bf16.xpose.msra.mxu0 0
    %2597 = vmatprep.mubr.bf16.mxu0 0
    %2598 = vmatmul.mubr.bf16.gmra.mrb[0].mxu0 %v2554
    %v2599 = vpop.f32.mrb[0].mxu0
    %v2600 = vadd.f32 %v2552, %v2599
    %v2601 = vpop.f32.mrb[0].mxu0
    %v2602 = vpop.f32.mrb[0].mxu0
    %v2603 = vadd.f32 %v2552, %v2602
    %v2604 = vpop.f32.mrb[0].mxu0
    %2605 = vmatprep.mubr.bf16.mxu0 0
    %2606 = vmatmul.mubr.bf16.gmra.mrb[0].mxu0 %v2557
    %v2607 = vpop.f32.mrb[0].mxu0
    %v2608 = vadd.f32 %v2552, %v2607
    %v2609 = vpop.f32.mrb[0].mxu0
    %v2610 = vpop.f32.mrb[0].mxu0
    %v2611 = vadd.f32 %v2552, %v2610
    %v2612 = vpop.f32.mrb[0].mxu0
    %2613 = vdwg.mxu0
    %2614 = vst.msk [vmem:[#allocation2] sm:$0xff] %vm51, %v1248
    %2615 = vst.msk [vmem:[#allocation2 + $0x18] sm:$0xff] %vm51, %v1251
    %2616 = vst.msk [vmem:[#allocation2 + $0x8] sm:$0xff] %vm51, %v2600
    %2617 = vst.msk [vmem:[#allocation2 + $0x10] sm:$0xff] %vm51, %v2603
    %2618 = vst.msk [vmem:[#allocation2 + $0x20] sm:$0xff] %vm51, %v2608
    %2619 = vst.msk [vmem:[#allocation2 + $0x28] sm:$0xff] %vm51, %v2611
    // Predicated region
    $region18: #{cross_attention.1} parent=1 // pred_check
      _
    $region19: #{cross_attention.1} parent=1 // pred_check_branch
      %2621 = sbr.rel (0) target = $region21
    $region20: #{cross_attention.1} parent=1 // pred_region
      %s2623 = ssub.s32 768, 768
      %2624 = vsyncadd [#allocation3], %s2623
      %s2625 = sshll.u32 [#allocation2], 4
      %s2626 = int_to_ptr.vmem [resolvable:$true] %s2625
      %2631 = dma.vmem_to_hbm [thread:$0]  %s2626, 768, %s4, [#allocation3], 128, 128, 8
    $region21: #{cross_attention.1} parent=1 // pred_fallthru
      _
    // Predicated region
    $region22: #{cross_attention.1} parent=1 // pred_check
      _
    $region23: #{cross_attention.1} parent=1 // pred_check_branch
      %2633 = sbr.rel (0) target = $region25
    $region24: #{cross_attention.1} parent=1 // pred_region
      %2634 = dma.done [#allocation3], 768
    $region25: #{cross_attention.1} parent=1 // pred_fallthru
      _
    %2635 = vsyncpa [#allocation3], 1

</llo_original>
